<compile_context>
chip_gen: v6e
topology: v6e:2x2x1
jax: 0.10.0
libtpu: 0.0.40
codegen_flags: <defaults>
</compile_context>

<pallas_src>
import jax
import jax.numpy as jnp
from jax.experimental import pallas as pl
from jax.experimental.pallas import tpu as pltpu

# Make the XLA reference and the in-kernel dots use full f32 matmul precision.
jax.config.update("jax_default_matmul_precision", "highest")

GENOME = 64     # genome_dim (module default)
IN_DIM = 16     # target MLP input features
HIDDEN = 32     # target MLP hidden width
OUT_DIM = 8     # target MLP output features

PACK = 128 // IN_DIM            # 8 samples packed per 128-lane row
ROW_TILE_MAX = 4096             # packed rows per grid step (= 32768 samples)


def _round_up(n, m):
    return ((n + m - 1) // m) * m


# ---------------------------------------------------------------------------
# Kernel 1: hypernetwork.  One flat matmul generates every target-MLP weight:
#   flat = z @ Gcat + Bcat, columns = [W1^T flat | b1 | W2^T flat | b2] (808).
# ---------------------------------------------------------------------------
def _hypernet_kernel(z_ref, gen_w_ref, gen_b_ref, out_ref):
    out_ref[...] = (jnp.dot(z_ref[...], gen_w_ref[...],
                            preferred_element_type=jnp.float32)
                    + gen_b_ref[...])


# ---------------------------------------------------------------------------
# Kernel 2: streaming target-MLP apply on lane-packed batch rows.
#   x tile  : (r_tile, 128)  -- 8 samples per row, 16 features each (lane-dense)
#   BD1/BD2 : 8-way block-diagonal copies of W1^T / W2^T  (grid-constant)
#   out tile: (r_tile, 64)   -- 8 samples per row, 8 outputs each
# ---------------------------------------------------------------------------
def _apply_kernel(bd1_ref, b1_ref, bd2_ref, b2_ref, x_ref, o_ref):
    x = x_ref[...]                                                # (rt, 128)
    h = jnp.dot(x, bd1_ref[...], preferred_element_type=jnp.float32) + b1_ref[...]
    h = jnp.maximum(h, 0.0)                                       # ReLU
    o_ref[...] = (jnp.dot(h, bd2_ref[...], preferred_element_type=jnp.float32)
                  + b2_ref[...])                                  # (rt, 64)


# ---------------------------------------------------------------------------
# Wrapper-side packing of the hypernet parameters (tiny, parameter-sized XLA
# layout plumbing): permute generator rows so the flat kernel output reshapes
# row-major (no transpose) straight into W1^T (16,32) and W2^T (32,8).
# Canonical torch-style params: gw1 (H*I, G), gb1 (1, H*I), hw1 (H, G),
# hb1 (1, H), gw2 (O*H, G), gb2 (1, O*H), hw2 (O, G), hb2 (1, O), z (1, G).
# ---------------------------------------------------------------------------
def _pack_generator(p):
    G, H, I, O = GENOME, HIDDEN, IN_DIM, OUT_DIM
    gw1p = p["gw1"].reshape(H, I, G).transpose(1, 0, 2).reshape(I * H, G)
    gw2p = p["gw2"].reshape(O, H, G).transpose(1, 0, 2).reshape(H * O, G)
    gen_w = jnp.concatenate([gw1p, p["hw1"], gw2p, p["hw2"]], axis=0).T   # (G, 808)
    gb1p = p["gb1"].reshape(H, I).T.reshape(1, I * H)
    gb2p = p["gb2"].reshape(O, H).T.reshape(1, H * O)
    gen_b = jnp.concatenate([gb1p, p["hb1"], gb2p, p["hb2"]], axis=1)     # (1, 808)
    return gen_w, gen_b


def _generate_target_weights(p):
    """Run the hypernet Pallas kernel; return W1^T (16,32), b1 (1,32), W2^T (32,8), b2 (1,8)."""
    gen_w, gen_b = _pack_generator(p)
    n = gen_w.shape[1]                                            # 808
    flat = pl.pallas_call(
        _hypernet_kernel,
        out_shape=jax.ShapeDtypeStruct((1, n), jnp.float32),
        grid=(1,),
        in_specs=[pl.BlockSpec((1, GENOME), lambda i: (0, 0)),
                  pl.BlockSpec((GENOME, n), lambda i: (0, 0)),
                  pl.BlockSpec((1, n), lambda i: (0, 0))],
        out_specs=pl.BlockSpec((1, n), lambda i: (0, 0)),
    )(p["z"], gen_w, gen_b)

    I, H, O = IN_DIM, HIDDEN, OUT_DIM
    w1t = flat[0, :I * H].reshape(I, H)                           # == W1.T
    b1 = flat[:, I * H:I * H + H]                                 # (1, H)
    w2t = flat[0, I * H + H:I * H + H + H * O].reshape(H, O)      # == W2.T
    b2 = flat[:, I * H + H + H * O:]                              # (1, O)
    return w1t, b1, w2t, b2


def metalearner_forward(x, p, *, row_tile_max=ROW_TILE_MAX):
    """Forward pass of MetaLearnerPerLayer. x: (B, IN_DIM) float32 -> (B, OUT_DIM)."""
    assert x.ndim == 2 and x.shape[1] == IN_DIM, x.shape
    B = x.shape[0]
    xf = x.astype(jnp.float32)

    # ---- hypernetwork: generate the target MLP weights from z (Pallas) ------
    w1t, b1, w2t, b2 = _generate_target_weights(p)

    # ---- pack into lane-dense block-diagonal operands (tiny XLA work) -------
    eye = jnp.eye(PACK, dtype=jnp.float32)
    bd1 = jnp.kron(eye, w1t)                                      # (128, 256)
    bd2 = jnp.kron(eye, w2t)                                      # (256, 64)
    b1t = jnp.tile(b1, (1, PACK))                                 # (1, 256)
    b2t = jnp.tile(b2, (1, PACK))                                 # (1, 64)

    # ---- lane-pack the batch: 8 samples per 128-lane row (free reshape) -----
    Bp = _round_up(B, PACK)
    if Bp != B:                                                   # only if B % 8 != 0
        xf = jnp.pad(xf, ((0, Bp - B), (0, 0)))
    rows = Bp // PACK
    xr = xf.reshape(rows, PACK * IN_DIM)                          # (rows, 128)

    r_tile = min(rows, row_tile_max)
    grid = (pl.cdiv(rows, r_tile),)                               # last block clipped
    const = lambda i: (0, 0)

    cost = pl.CostEstimate(
        flops=2 * rows * (PACK * IN_DIM * PACK * HIDDEN
                          + PACK * HIDDEN * PACK * OUT_DIM),
        transcendentals=0,
        bytes_accessed=4 * (rows * PACK * (IN_DIM + OUT_DIM)
                            + bd1.size + bd2.size + b1t.size + b2t.size))

    out_r = pl.pallas_call(
        _apply_kernel,
        out_shape=jax.ShapeDtypeStruct((rows, PACK * OUT_DIM), jnp.float32),
        grid=grid,
        in_specs=[
            pl.BlockSpec((PACK * IN_DIM, PACK * HIDDEN), const),     # BD1 (128,256)
            pl.BlockSpec((1, PACK * HIDDEN), const),                 # b1 tiled
            pl.BlockSpec((PACK * HIDDEN, PACK * OUT_DIM), const),    # BD2 (256,64)
            pl.BlockSpec((1, PACK * OUT_DIM), const),                # b2 tiled
            pl.BlockSpec((r_tile, PACK * IN_DIM), lambda i: (i, 0)), # x (packed)
        ],
        out_specs=pl.BlockSpec((r_tile, PACK * OUT_DIM), lambda i: (i, 0)),
        compiler_params=pltpu.CompilerParams(
            dimension_semantics=("parallel",)),   # safe: no cross-step scratch state
        cost_estimate=cost,
    )(bd1, b1t, bd2, b2t, xr)

    out = out_r.reshape(Bp, OUT_DIM)                              # free reshape
    return out[:B] if Bp != B else out


# ---------------------------------------------------------------------------
# Pure-JAX per-sample reference (z_batch = z.expand(B, -1) semantics).
# ---------------------------------------------------------------------------
def reference_forward(x, p):
    B = x.shape[0]
    zb = jnp.broadcast_to(p["z"], (B, GENOME))
    W1 = (zb @ p["gw1"].T + p["gb1"]).reshape(B, HIDDEN, IN_DIM)
    b1 = zb @ p["hw1"].T + p["hb1"]
    h = jax.nn.relu(jnp.einsum("bi,boi->bo", x, W1) + b1)
    W2 = (zb @ p["gw2"].T + p["gb2"]).reshape(B, OUT_DIM, HIDDEN)
    b2 = zb @ p["hw2"].T + p["hb2"]
    return jnp.einsum("bh,boh->bo", h, W2) + b2


def init_params(key):
    ks = jax.random.split(key, 9)

    def linear(kw, kb, out_f, in_f):
        bound = 1.0 / (in_f ** 0.5)
        w = jax.random.uniform(kw, (out_f, in_f), jnp.float32, -bound, bound)
        b = jax.random.uniform(kb, (1, out_f), jnp.float32, -bound, bound)
        return w, b

    params = {"z": jax.random.normal(ks[0], (1, GENOME), jnp.float32)}
    params["gw1"], params["gb1"] = linear(ks[1], ks[2], HIDDEN * IN_DIM, GENOME)
    params["hw1"], params["hb1"] = linear(ks[3], ks[4], HIDDEN, GENOME)
    params["gw2"], params["gb2"] = linear(ks[5], ks[6], OUT_DIM * HIDDEN, GENOME)
    params["hw2"], params["hb2"] = linear(ks[7], ks[8], OUT_DIM, GENOME)
    return params


if __name__ == "__main__":
    key = jax.random.PRNGKey(0)
    pkey, xkey = jax.random.split(key)
    params = init_params(pkey)

    fwd = jax.jit(metalearner_forward, static_argnames=("row_tile_max",))

    # Small shape consistent with the module interface.
    B = 2
    x = jax.random.normal(xkey, (B, IN_DIM), jnp.float32)
    out = jax.block_until_ready(fwd(x, params))
    ref = jax.block_until_ready(reference_forward(x, params))
    assert out.shape == (B, OUT_DIM), out.shape
    assert jnp.allclose(out, ref, atol=2e-3, rtol=2e-3), (
        f"B={B} mismatch: max abs err = {jnp.max(jnp.abs(out - ref))}")

    # Unaligned batch (pad+slice path) and a multi-tile grid whose final block
    # is clipped (row_tile_max forced small so the path is exercised cheaply).
    for B2, rtm in ((203, ROW_TILE_MAX), (2000, 64)):
        x2 = jax.random.normal(jax.random.fold_in(xkey, B2), (B2, IN_DIM),
                               jnp.float32)
        out2 = jax.block_until_ready(fwd(x2, params, row_tile_max=rtm))
        ref2 = reference_forward(x2, params)
        assert out2.shape == (B2, OUT_DIM), out2.shape
        assert jnp.allclose(out2, ref2, atol=2e-3, rtol=2e-3), (
            f"B={B2} mismatch: max abs err = {jnp.max(jnp.abs(out2 - ref2))}")

    print("KERNEL_OK")
</pallas_src>

<mosaic_0001>
module attributes {stable_mosaic.version = 11 : i64} {
  func.func @_hypernet_kernel(%arg0: i32, %arg1: memref<1x64xf32, #tpu.memory_space<vmem>>, %arg2: memref<64x808xf32, #tpu.memory_space<vmem>>, %arg3: memref<1x808xf32, #tpu.memory_space<vmem>>, %arg4: memref<1x808xf32, #tpu.memory_space<vmem>>) attributes {dimension_semantics = [#tpu.dimension_semantics<arbitrary>], iteration_bounds = array<i64: 1>, scalar_prefetch = 0 : i64, scratch_operands = 0 : i64, tpu.core_type = #tpu.core_type<tc>, window_params = [{pipeline_mode = #tpu.pipeline_mode<synchronous>, transform_indices = @transform_0, window_bounds = array<i64: 1, 64>}, {pipeline_mode = #tpu.pipeline_mode<synchronous>, transform_indices = @transform_1, window_bounds = array<i64: 64, 808>}, {pipeline_mode = #tpu.pipeline_mode<synchronous>, transform_indices = @transform_2, window_bounds = array<i64: 1, 808>}, {pipeline_mode = #tpu.pipeline_mode<synchronous>, transform_indices = @transform_3, window_bounds = array<i64: 1, 808>}]} {
    %c0 = arith.constant 0 : index
    %c0_0 = arith.constant 0 : index
    %0 = vector.load %arg1[%c0, %c0_0] : memref<1x64xf32, #tpu.memory_space<vmem>>, vector<1x64xf32>
    %c0_1 = arith.constant 0 : index
    %c0_2 = arith.constant 0 : index
    %1 = vector.load %arg2[%c0_1, %c0_2] : memref<64x808xf32, #tpu.memory_space<vmem>>, vector<64x808xf32>
    %cst = arith.constant dense<0.000000e+00> : vector<1x808xf32>
    %2 = tpu.matmul %0, %1, %cst {dimension_numbers = #tpu.dot_dimension_numbers<[1], [0], [0], [1], [0, 0, 1, 1], [], []>, precision = #tpu.contract_precision<fp32>} : vector<1x64xf32>, vector<64x808xf32>, vector<1x808xf32> -> vector<1x808xf32>
    %c0_3 = arith.constant 0 : index
    %c0_4 = arith.constant 0 : index
    %3 = vector.load %arg3[%c0_3, %c0_4] : memref<1x808xf32, #tpu.memory_space<vmem>>, vector<1x808xf32>
    %4 = arith.addf %2, %3 : vector<1x808xf32>
    %c0_5 = arith.constant 0 : index
    %c0_6 = arith.constant 0 : index
    %5 = vector.load %arg4[%c0_5, %c0_6] : memref<1x808xf32, #tpu.memory_space<vmem>>, vector<1x808xf32>
    tpu.vector_store %arg4[%c0_5, %c0_6], %4 {strides = array<i32>} : memref<1x808xf32, #tpu.memory_space<vmem>>, vector<1x808xf32>,
    return
  }
  func.func @transform_0(%arg0: i32) -> (i32, i32) {
    %c0_i32 = arith.constant 0 : i32
    %c0_i32_0 = arith.constant 0 : i32
    %c0_i32_1 = arith.constant 0 : i32
    return %c0_i32, %c0_i32_0 : i32, i32
  }
  func.func @transform_1(%arg0: i32) -> (i32, i32) {
    %c0_i32 = arith.constant 0 : i32
    %c0_i32_0 = arith.constant 0 : i32
    %c0_i32_1 = arith.constant 0 : i32
    return %c0_i32, %c0_i32_0 : i32, i32
  }
  func.func @transform_2(%arg0: i32) -> (i32, i32) {
    %c0_i32 = arith.constant 0 : i32
    %c0_i32_0 = arith.constant 0 : i32
    %c0_i32_1 = arith.constant 0 : i32
    return %c0_i32, %c0_i32_0 : i32, i32
  }
  func.func @transform_3(%arg0: i32) -> (i32, i32) {
    %c0_i32 = arith.constant 0 : i32
    %c0_i32_0 = arith.constant 0 : i32
    %c0_i32_1 = arith.constant 0 : i32
    return %c0_i32, %c0_i32_0 : i32, i32
  }
}

module attributes {stable_mosaic.version = 11 : i64} {
  func.func @_apply_kernel(%arg0: i32, %arg1: memref<128x256xf32, #tpu.memory_space<vmem>>, %arg2: memref<1x256xf32, #tpu.memory_space<vmem>>, %arg3: memref<256x64xf32, #tpu.memory_space<vmem>>, %arg4: memref<1x64xf32, #tpu.memory_space<vmem>>, %arg5: memref<1x128xf32, #tpu.memory_space<vmem>>, %arg6: memref<1x64xf32, #tpu.memory_space<vmem>>) attributes {dimension_semantics = [#tpu.dimension_semantics<parallel>], iteration_bounds = array<i64: 1>, scalar_prefetch = 0 : i64, scratch_operands = 0 : i64, tpu.core_type = #tpu.core_type<tc>, window_params = [{pipeline_mode = #tpu.pipeline_mode<synchronous>, transform_indices = @transform_0, window_bounds = array<i64: 128, 256>}, {pipeline_mode = #tpu.pipeline_mode<synchronous>, transform_indices = @transform_1, window_bounds = array<i64: 1, 256>}, {pipeline_mode = #tpu.pipeline_mode<synchronous>, transform_indices = @transform_2, window_bounds = array<i64: 256, 64>}, {pipeline_mode = #tpu.pipeline_mode<synchronous>, transform_indices = @transform_3, window_bounds = array<i64: 1, 64>}, {transform_indices = @transform_4, window_bounds = array<i64: 1, 128>}, {transform_indices = @transform_5, window_bounds = array<i64: 1, 64>}]} {
    %c0 = arith.constant 0 : index
    %c0_0 = arith.constant 0 : index
    %0 = vector.load %arg5[%c0, %c0_0] : memref<1x128xf32, #tpu.memory_space<vmem>>, vector<1x128xf32>
    %c0_1 = arith.constant 0 : index
    %c0_2 = arith.constant 0 : index
    %1 = vector.load %arg1[%c0_1, %c0_2] : memref<128x256xf32, #tpu.memory_space<vmem>>, vector<128x256xf32>
    %cst = arith.constant dense<0.000000e+00> : vector<1x256xf32>
    %2 = tpu.matmul %0, %1, %cst {dimension_numbers = #tpu.dot_dimension_numbers<[1], [0], [0], [1], [0, 0, 1, 1], [], []>, precision = #tpu.contract_precision<fp32>} : vector<1x128xf32>, vector<128x256xf32>, vector<1x256xf32> -> vector<1x256xf32>
    %c0_3 = arith.constant 0 : index
    %c0_4 = arith.constant 0 : index
    %3 = vector.load %arg2[%c0_3, %c0_4] : memref<1x256xf32, #tpu.memory_space<vmem>>, vector<1x256xf32>
    %4 = arith.addf %2, %3 : vector<1x256xf32>
    %cst_5 = arith.constant 0.000000e+00 : f32
    %5 = vector.broadcast %cst_5 : f32 to vector<1x256xf32>
    %6 = arith.maximumf %4, %5 : vector<1x256xf32>
    %c0_6 = arith.constant 0 : index
    %c0_7 = arith.constant 0 : index
    %7 = vector.load %arg3[%c0_6, %c0_7] : memref<256x64xf32, #tpu.memory_space<vmem>>, vector<256x64xf32>
    %cst_8 = arith.constant dense<0.000000e+00> : vector<1x64xf32>
    %8 = tpu.matmul %6, %7, %cst_8 {dimension_numbers = #tpu.dot_dimension_numbers<[1], [0], [0], [1], [0, 0, 1, 1], [], []>, precision = #tpu.contract_precision<fp32>} : vector<1x256xf32>, vector<256x64xf32>, vector<1x64xf32> -> vector<1x64xf32>
    %c0_9 = arith.constant 0 : index
    %c0_10 = arith.constant 0 : index
    %9 = vector.load %arg4[%c0_9, %c0_10] : memref<1x64xf32, #tpu.memory_space<vmem>>, vector<1x64xf32>
    %10 = arith.addf %8, %9 : vector<1x64xf32>
    %c0_11 = arith.constant 0 : index
    %c0_12 = arith.constant 0 : index
    %11 = vector.load %arg6[%c0_11, %c0_12] : memref<1x64xf32, #tpu.memory_space<vmem>>, vector<1x64xf32>
    tpu.vector_store %arg6[%c0_11, %c0_12], %10 {strides = array<i32>} : memref<1x64xf32, #tpu.memory_space<vmem>>, vector<1x64xf32>,
    return
  }
  func.func @transform_0(%arg0: i32) -> (i32, i32) {
    %c0_i32 = arith.constant 0 : i32
    %c0_i32_0 = arith.constant 0 : i32
    %c0_i32_1 = arith.constant 0 : i32
    return %c0_i32, %c0_i32_0 : i32, i32
  }
  func.func @transform_1(%arg0: i32) -> (i32, i32) {
    %c0_i32 = arith.constant 0 : i32
    %c0_i32_0 = arith.constant 0 : i32
    %c0_i32_1 = arith.constant 0 : i32
    return %c0_i32, %c0_i32_0 : i32, i32
  }
  func.func @transform_2(%arg0: i32) -> (i32, i32) {
    %c0_i32 = arith.constant 0 : i32
    %c0_i32_0 = arith.constant 0 : i32
    %c0_i32_1 = arith.constant 0 : i32
    return %c0_i32, %c0_i32_0 : i32, i32
  }
  func.func @transform_3(%arg0: i32) -> (i32, i32) {
    %c0_i32 = arith.constant 0 : i32
    %c0_i32_0 = arith.constant 0 : i32
    %c0_i32_1 = arith.constant 0 : i32
    return %c0_i32, %c0_i32_0 : i32, i32
  }
  func.func @transform_4(%arg0: i32) -> (i32, i32) {
    %c0_i32 = arith.constant 0 : i32
    %c0_i32_0 = arith.constant 0 : i32
    return %arg0, %c0_i32 : i32, i32
  }
  func.func @transform_5(%arg0: i32) -> (i32, i32) {
    %c0_i32 = arith.constant 0 : i32
    %c0_i32_0 = arith.constant 0 : i32
    return %arg0, %c0_i32 : i32, i32
  }
}

</mosaic_0001>

<llo_original>
// kernel: mul.4
$region0: #{mul.4}
  %s0 = inlined_call_operand.vmem [shape: f32[512], index: 0, kind: input, shape index: {}]
  %s1 = inlined_call_operand.vmem [shape: f32[16,32], index: 1, kind: output, shape index: {}]
  $region1: #{mul.4} parent=0
    #allocation0 [shape = 'u8[4096]{0}', space=vmem, size = 0x1000, scoped, tag = 'scoped mem for input reshape']
    %s3 = sshll.u32 1, 4
    %s4 = ssub.s32 %s3, 1
    %v5 = vld [vmem:[%s0] sm:%s4]
    %6 = vst [vmem:[#allocation0] sm:%s4] %v5
    %v7 = vld [vmem:[#allocation0] sm:$0xf]
    %vm8 = vcmask 261120
    %9 = vst.msk [vmem:[%s1] ss:$4 sm:$0xf] %vm8, %v7
    %v10 = vld [vmem:[#allocation0] sm:$0xf]
    %11 = vrot.lane.b32.xlu0 %v10, 96
    %v12 = vpop.permute.xlu0 %11
    %vm13 = vcmask 261120
    %s14 = scalar_lea.vmem %s1, 1
    %15 = vst.msk [vmem:[%s14] ss:$4 sm:$0xf] %vm13, %v12
    %v16 = vld [vmem:[#allocation0] sm:$0xf]
    %17 = vrot.lane.b32.xlu0 %v16, 64
    %v18 = vpop.permute.xlu0 %17
    %vm19 = vcmask 261120
    %s20 = scalar_lea.vmem %s1, 2
    %21 = vst.msk [vmem:[%s20] ss:$4 sm:$0xf] %vm19, %v18
    %v22 = vld [vmem:[#allocation0] sm:$0xf]
    %23 = vrot.lane.b32.xlu0 %v22, 32
    %v24 = vpop.permute.xlu0 %23
    %vm25 = vcmask 261120
    %s26 = scalar_lea.vmem %s1, 3
    %27 = vst.msk [vmem:[%s26] ss:$4 sm:$0xf] %vm25, %v24

// kernel: mul.18
$region0: #{mul.18}
  %s0 = inlined_call_operand.vmem [shape: f32[256], index: 0, kind: input, shape index: {}]
  %s1 = inlined_call_operand.vmem [shape: f32[32,8], index: 1, kind: output, shape index: {}]
  $region1: #{mul.18} parent=0
    #allocation0 [shape = 'u8[4096]{0}', space=vmem, size = 0x1000, scoped, tag = 'scoped mem for input reshape']
    %s3 = sshll.u32 1, 2
    %s4 = ssub.s32 %s3, 1
    %v5 = vld [vmem:[%s0] sm:%s4]
    %6 = vst [vmem:[#allocation0] sm:%s4] %v5
    %v7 = vld [vmem:[#allocation0] sm:$0x3]
    %vm8 = vcmask 64512
    %9 = vst.msk [vmem:[%s1] ss:$16 sm:$0x3] %vm8, %v7
    %v10 = vld [vmem:[#allocation0] sm:$0x3]
    %11 = vrot.lane.b32.xlu0 %v10, 120
    %v12 = vpop.permute.xlu0 %11
    %vm13 = vcmask 64512
    %s14 = scalar_lea.vmem %s1, 1
    %15 = vst.msk [vmem:[%s14] ss:$16 sm:$0x3] %vm13, %v12
    %v16 = vld [vmem:[#allocation0] sm:$0x3]
    %17 = vrot.lane.b32.xlu0 %v16, 112
    %v18 = vpop.permute.xlu0 %17
    %vm19 = vcmask 64512
    %s20 = scalar_lea.vmem %s1, 2
    %21 = vst.msk [vmem:[%s20] ss:$16 sm:$0x3] %vm19, %v18
    %v22 = vld [vmem:[#allocation0] sm:$0x3]
    %23 = vrot.lane.b32.xlu0 %v22, 104
    %v24 = vpop.permute.xlu0 %23
    %vm25 = vcmask 64512
    %s26 = scalar_lea.vmem %s1, 3
    %27 = vst.msk [vmem:[%s26] ss:$16 sm:$0x3] %vm25, %v24
    %v28 = vld [vmem:[#allocation0] sm:$0x3]
    %29 = vrot.lane.b32.xlu0 %v28, 96
    %v30 = vpop.permute.xlu0 %29
    %vm31 = vcmask 64512
    %s32 = scalar_lea.vmem %s1, 4
    %33 = vst.msk [vmem:[%s32] ss:$16 sm:$0x3] %vm31, %v30
    %v34 = vld [vmem:[#allocation0] sm:$0x3]
    %35 = vrot.lane.b32.xlu0 %v34, 88
    %v36 = vpop.permute.xlu0 %35
    %vm37 = vcmask 64512
    %s38 = scalar_lea.vmem %s1, 5
    %39 = vst.msk [vmem:[%s38] ss:$16 sm:$0x3] %vm37, %v36
    %v40 = vld [vmem:[#allocation0] sm:$0x3]
    %41 = vrot.lane.b32.xlu0 %v40, 80
    %v42 = vpop.permute.xlu0 %41
    %vm43 = vcmask 64512
    %s44 = scalar_lea.vmem %s1, 6
    %45 = vst.msk [vmem:[%s44] ss:$16 sm:$0x3] %vm43, %v42
    %v46 = vld [vmem:[#allocation0] sm:$0x3]
    %47 = vrot.lane.b32.xlu0 %v46, 72
    %v48 = vpop.permute.xlu0 %47
    %vm49 = vcmask 64512
    %s50 = scalar_lea.vmem %s1, 7
    %51 = vst.msk [vmem:[%s50] ss:$16 sm:$0x3] %vm49, %v48
    %v52 = vld [vmem:[#allocation0] sm:$0x3]
    %53 = vrot.lane.b32.xlu0 %v52, 64
    %v54 = vpop.permute.xlu0 %53
    %vm55 = vcmask 64512
    %s56 = scalar_lea.vmem %s1, 8
    %57 = vst.msk [vmem:[%s56] ss:$16 sm:$0x3] %vm55, %v54
    %v58 = vld [vmem:[#allocation0] sm:$0x3]
    %59 = vrot.lane.b32.xlu0 %v58, 56
    %v60 = vpop.permute.xlu0 %59
    %vm61 = vcmask 64512
    %s62 = scalar_lea.vmem %s1, 9
    %63 = vst.msk [vmem:[%s62] ss:$16 sm:$0x3] %vm61, %v60
    %v64 = vld [vmem:[#allocation0] sm:$0x3]
    %65 = vrot.lane.b32.xlu0 %v64, 48
    %v66 = vpop.permute.xlu0 %65
    %vm67 = vcmask 64512
    %s68 = scalar_lea.vmem %s1, 10
    %69 = vst.msk [vmem:[%s68] ss:$16 sm:$0x3] %vm67, %v66
    %v70 = vld [vmem:[#allocation0] sm:$0x3]
    %71 = vrot.lane.b32.xlu0 %v70, 40
    %v72 = vpop.permute.xlu0 %71
    %vm73 = vcmask 64512
    %s74 = scalar_lea.vmem %s1, 11
    %75 = vst.msk [vmem:[%s74] ss:$16 sm:$0x3] %vm73, %v72
    %v76 = vld [vmem:[#allocation0] sm:$0x3]
    %77 = vrot.lane.b32.xlu0 %v76, 32
    %v78 = vpop.permute.xlu0 %77
    %vm79 = vcmask 64512
    %s80 = scalar_lea.vmem %s1, 12
    %81 = vst.msk [vmem:[%s80] ss:$16 sm:$0x3] %vm79, %v78
    %v82 = vld [vmem:[#allocation0] sm:$0x3]
    %83 = vrot.lane.b32.xlu0 %v82, 24
    %v84 = vpop.permute.xlu0 %83
    %vm85 = vcmask 64512
    %s86 = scalar_lea.vmem %s1, 13
    %87 = vst.msk [vmem:[%s86] ss:$16 sm:$0x3] %vm85, %v84
    %v88 = vld [vmem:[#allocation0] sm:$0x3]
    %89 = vrot.lane.b32.xlu0 %v88, 16
    %v90 = vpop.permute.xlu0 %89
    %vm91 = vcmask 64512
    %s92 = scalar_lea.vmem %s1, 14
    %93 = vst.msk [vmem:[%s92] ss:$16 sm:$0x3] %vm91, %v90
    %v94 = vld [vmem:[#allocation0] sm:$0x3]
    %95 = vrot.lane.b32.xlu0 %v94, 8
    %v96 = vpop.permute.xlu0 %95
    %vm97 = vcmask 64512
    %s98 = scalar_lea.vmem %s1, 15
    %99 = vst.msk [vmem:[%s98] ss:$16 sm:$0x3] %vm97, %v96

// kernel: metalearner_forward.2
$region0: #{metalearner_forward.2}
  #allocation0 [shape = 'u32[]', space=smem, size = 0x4, offset = 0x4, fixed_abs, tag = 'smem constant byte address 0x4 - core index']
  #allocation1 [shape = 'u32[144,128]{1,0:T(1,128)}', space=vmem, size = 0x12000, scoped, tag = 'internal scratch']
  %s0 = inlined_call_operand.vmem [shape: f32[1,64], index: 0, kind: input, shape index: {}]
  %s1 = inlined_call_operand.vmem [shape: f32[64,808], index: 1, kind: input, shape index: {}]
  %s2 = inlined_call_operand.vmem [shape: f32[1,808], index: 2, kind: input, shape index: {}]
  %s3 = inlined_call_operand.vmem [shape: f32[1,808], index: 3, kind: output, shape index: {}]
  %s4 = sld [smem:[#allocation0]]
  $region22: #{metalearner_forward.2} parent=0
    _
  %s6 = ssub.s32 1, %s4
  %s7 = scalar_select 0, %s6, %s4
  // Predicated region
  $region2: #{metalearner_forward.2} parent=0 // pred_check
    _
  $region3: #{metalearner_forward.2} parent=0 // pred_check_branch
    %9 = sbr.rel (0) target = $region5
  $region4: #{metalearner_forward.2} parent=0 // pred_region
    _
  $region5: #{metalearner_forward.2} parent=0 // pred_fallthru
    _
  // Predicated region
  $region6: #{metalearner_forward.2} parent=0 // pred_check
    _
  $region7: #{metalearner_forward.2} parent=0 // pred_check_branch
    %11 = sbr.rel (0) target = $region9
  $region8: #{metalearner_forward.2} parent=0 // pred_region
    _
  $region9: #{metalearner_forward.2} parent=0 // pred_fallthru
    _
  // Predicated region
  $region10: #{metalearner_forward.2} parent=0 // pred_check
    _
  $region11: #{metalearner_forward.2} parent=0 // pred_check_branch
    %13 = sbr.rel (0) target = $region13
  $region12: #{metalearner_forward.2} parent=0 // pred_region
    _
  $region13: #{metalearner_forward.2} parent=0 // pred_fallthru
    _
  %v14 = vld [vmem:[%s0] sm:$0x1]
  %v15 = vld [vmem:[%s1] sm:$0xff]
  %v16 = vld [vmem:[%s1 + $0x8] sm:$0xff]
  %v17 = vld [vmem:[%s1 + $0x10] sm:$0xff]
  %v18 = vld [vmem:[%s1 + $0x18] sm:$0xff]
  %v19 = vld [vmem:[%s1 + $0x20] sm:$0xff]
  %v20 = vld [vmem:[%s1 + $0x28] sm:$0xff]
  %v21 = vld [vmem:[%s1 + $0x30] sm:$0xff]
  %v22 = vld [vmem:[%s1 + $0x38] sm:$0xff]
  %v23 = vld [vmem:[%s1 + $0x40] sm:$0xff]
  %v24 = vld [vmem:[%s1 + $0x48] sm:$0xff]
  %v25 = vld [vmem:[%s1 + $0x50] sm:$0xff]
  %v26 = vld [vmem:[%s1 + $0x58] sm:$0xff]
  %v27 = vld [vmem:[%s1 + $0x60] sm:$0xff]
  %v28 = vld [vmem:[%s1 + $0x68] sm:$0xff]
  %v29 = vld [vmem:[%s1 + $0x70] sm:$0xff]
  %v30 = vld [vmem:[%s1 + $0x78] sm:$0xff]
  %v31 = vld [vmem:[%s1 + $0x80] sm:$0xff]
  %v32 = vld [vmem:[%s1 + $0x88] sm:$0xff]
  %v33 = vld [vmem:[%s1 + $0x90] sm:$0xff]
  %v34 = vld [vmem:[%s1 + $0x98] sm:$0xff]
  %v35 = vld [vmem:[%s1 + $0xa0] sm:$0xff]
  %v36 = vld [vmem:[%s1 + $0xa8] sm:$0xff]
  %v37 = vld [vmem:[%s1 + $0xb0] sm:$0xff]
  %v38 = vld [vmem:[%s1 + $0xb8] sm:$0xff]
  %v39 = vld [vmem:[%s1 + $0xc0] sm:$0xff]
  %v40 = vld [vmem:[%s1 + $0xc8] sm:$0xff]
  %v41 = vld [vmem:[%s1 + $0xd0] sm:$0xff]
  %v42 = vld [vmem:[%s1 + $0xd8] sm:$0xff]
  %v43 = vld [vmem:[%s1 + $0xe0] sm:$0xff]
  %v44 = vld [vmem:[%s1 + $0xe8] sm:$0xff]
  %v45 = vld [vmem:[%s1 + $0xf0] sm:$0xff]
  %v46 = vld [vmem:[%s1 + $0xf8] sm:$0xff]
  %v47 = vld [vmem:[%s1 + $0x100] sm:$0xff]
  %v48 = vld [vmem:[%s1 + $0x108] sm:$0xff]
  %v49 = vld [vmem:[%s1 + $0x110] sm:$0xff]
  %v50 = vld [vmem:[%s1 + $0x118] sm:$0xff]
  %v51 = vld [vmem:[%s1 + $0x120] sm:$0xff]
  %v52 = vld [vmem:[%s1 + $0x128] sm:$0xff]
  %v53 = vld [vmem:[%s1 + $0x130] sm:$0xff]
  %v54 = vld [vmem:[%s1 + $0x138] sm:$0xff]
  %v55 = vld [vmem:[%s1 + $0x140] sm:$0xff]
  %v56 = vld [vmem:[%s1 + $0x148] sm:$0xff]
  %v57 = vld [vmem:[%s1 + $0x150] sm:$0xff]
  %v58 = vld [vmem:[%s1 + $0x158] sm:$0xff]
  %v59 = vld [vmem:[%s1 + $0x160] sm:$0xff]
  %v60 = vld [vmem:[%s1 + $0x168] sm:$0xff]
  %v61 = vld [vmem:[%s1 + $0x170] sm:$0xff]
  %v62 = vld [vmem:[%s1 + $0x178] sm:$0xff]
  %v63 = vld [vmem:[%s1 + $0x180] sm:$0xff]
  %v64 = vld [vmem:[%s1 + $0x188] sm:$0xff]
  %v65 = vld [vmem:[%s1 + $0x190] sm:$0xff]
  %v66 = vld [vmem:[%s1 + $0x198] sm:$0xff]
  %v67 = vld [vmem:[%s1 + $0x1a0] sm:$0xff]
  %v68 = vld [vmem:[%s1 + $0x1a8] sm:$0xff]
  %v69 = vld [vmem:[%s1 + $0x1b0] sm:$0xff]
  %v70 = vld [vmem:[%s1 + $0x1b8] sm:$0xff]
  %v71 = vld [vmem:[%s2] sm:$0x7f]
  %v73 = vlaneseq
  %v74 = vshrl.u32 %v73, 7
  %v75 = vsub.s32 0, %v74
  %v76 = vrot.slane %v71, %v75
  %v77 = vlaneseq
  %v78 = vshrl.u32 %v77, 7
  %v79 = vsub.s32 1, %v78
  %v80 = vrot.slane %v71, %v79
  %v81 = vlaneseq
  %v82 = vshrl.u32 %v81, 7
  %v83 = vsub.s32 2, %v82
  %v84 = vrot.slane %v71, %v83
  %v85 = vlaneseq
  %v86 = vshrl.u32 %v85, 7
  %v87 = vsub.s32 3, %v86
  %v88 = vrot.slane %v71, %v87
  %v89 = vlaneseq
  %v90 = vshrl.u32 %v89, 7
  %v91 = vsub.s32 4, %v90
  %v92 = vrot.slane %v71, %v91
  %v93 = vlaneseq
  %v94 = vshrl.u32 %v93, 7
  %v95 = vsub.s32 5, %v94
  %v96 = vrot.slane %v71, %v95
  %v97 = vlaneseq
  %v98 = vshrl.u32 %v97, 7
  %v99 = vsub.s32 6, %v98
  %v100 = vrot.slane %v71, %v99
  %vm108 = vcmask 523264
  %v110 = vsel %vm108, %v14, 0
  %112 = vmatprep.subr.mxu0 0.0
  %113 = vmatpush1.msra.mxu0 0.0
  %114 = vmatprep.subr.mxu0 0.0
  %115 = vmatpush1.msra.mxu0 0.0
  %116 = vmatprep.subr.mxu0 0.0
  %117 = vmatpush1.msra.mxu0 0.0
  %118 = vmatprep.subr.mxu0 0.0
  %119 = vmatpush1.msra.mxu0 0.0
  %120 = vmatprep.subr.mxu0 0.0
  %121 = vmatpush1.msra.mxu0 0.0
  %122 = vmatprep.subr.mxu0 0.0
  %123 = vmatpush1.msra.mxu0 0.0
  %124 = vmatprep.subr.mxu0 0.0
  %125 = vmatpush1.msra.mxu0 0.0
  %126 = vmatprep.subr.mxu0 0.0
  %127 = vmatpush1.msra.mxu0 0.0
  %v128 = vand.u32 %v65, 4294901760
  %129 = vmatprep.subr.mxu0 %v128
  %v130 = vand.u32 %v64, 4294901760
  %131 = vmatpush1.msra.mxu0 %v130
  %v132 = vand.u32 %v58, 4294901760
  %133 = vmatprep.subr.mxu0 %v132
  %v134 = vand.u32 %v57, 4294901760
  %135 = vmatpush1.msra.mxu0 %v134
  %v136 = vand.u32 %v51, 4294901760
  %137 = vmatprep.subr.mxu0 %v136
  %v138 = vand.u32 %v50, 4294901760
  %139 = vmatpush1.msra.mxu0 %v138
  %v140 = vand.u32 %v44, 4294901760
  %141 = vmatprep.subr.mxu0 %v140
  %v142 = vand.u32 %v43, 4294901760
  %143 = vmatpush1.msra.mxu0 %v142
  %v144 = vand.u32 %v37, 4294901760
  %145 = vmatprep.subr.mxu0 %v144
  %v146 = vand.u32 %v36, 4294901760
  %147 = vmatpush1.msra.mxu0 %v146
  %v148 = vand.u32 %v30, 4294901760
  %149 = vmatprep.subr.mxu0 %v148
  %v150 = vand.u32 %v29, 4294901760
  %151 = vmatpush1.msra.mxu0 %v150
  %v152 = vand.u32 %v23, 4294901760
  %153 = vmatprep.subr.mxu0 %v152
  %v154 = vand.u32 %v22, 4294901760
  %155 = vmatpush1.msra.mxu0 %v154
  %v156 = vand.u32 %v16, 4294901760
  %157 = vmatprep.subr.mxu0 %v156
  %v158 = vand.u32 %v15, 4294901760
  %159 = vmatpush1.msra.mxu0 %v158
  %160 = vmatprep.subr.mxu0 0.0
  %161 = vmatpush2.msra.mxu0 0.0
  %162 = vmatprep.subr.mxu0 0.0
  %163 = vmatpush2.msra.mxu0 0.0
  %164 = vmatprep.subr.mxu0 0.0
  %165 = vmatpush2.msra.mxu0 0.0
  %166 = vmatprep.subr.mxu0 0.0
  %167 = vmatpush2.msra.mxu0 0.0
  %168 = vmatprep.subr.mxu0 0.0
  %169 = vmatpush2.msra.mxu0 0.0
  %170 = vmatprep.subr.mxu0 0.0
  %171 = vmatpush2.msra.mxu0 0.0
  %172 = vmatprep.subr.mxu0 0.0
  %173 = vmatpush2.msra.mxu0 0.0
  %174 = vmatprep.subr.mxu0 0.0
  %175 = vmatpush2.msra.mxu0 0.0
  %176 = vmatprep.subr.mxu0 0.0
  %177 = vmatpush2.msra.mxu0 0.0
  %178 = vmatprep.subr.mxu0 0.0
  %179 = vmatpush2.msra.mxu0 0.0
  %180 = vmatprep.subr.mxu0 0.0
  %181 = vmatpush2.msra.mxu0 0.0
  %182 = vmatprep.subr.mxu0 0.0
  %183 = vmatpush2.msra.mxu0 0.0
  %184 = vmatprep.subr.mxu0 0.0
  %185 = vmatpush2.msra.mxu0 0.0
  %186 = vmatprep.subr.mxu0 0.0
  %187 = vmatpush2.msra.mxu0 0.0
  %188 = vmatprep.subr.mxu0 0.0
  %189 = vmatpush2.msra.mxu0 0.0
  %190 = vmatprep.subr.mxu0 0.0
  %191 = vmatpush2.msra.mxu0 0.0
  %192 = vmatprep.mubr.f32.mxu0 0.0
  %v193 = vand.u32 %v110, 4294901760
  %v194 = vsub.f32 %v110, %v193
  %v195 = vand.u32 %v194, 4294901760
  %v196 = vsub.f32 %v194, %v195
  %v197 = vand.u32 %v196, 4294901760
  %198 = vmatmul.mubr.f32.gmra.mxu0 %v197
  %v199 = vpop.f32.mrf.mxu0
  %v200 = vadd.f32 %v76, %v199
  %v201 = vpop.f32.mrf.mxu0
  %v202 = vadd.f32 %v80, %v201
  %203 = vdwg.mxu0
  %204 = vmatprep.subr.mxu0 0.0
  %205 = vmatpush1.msra.mxu0 0.0
  %206 = vmatprep.subr.mxu0 0.0
  %207 = vmatpush1.msra.mxu0 0.0
  %208 = vmatprep.subr.mxu0 0.0
  %209 = vmatpush1.msra.mxu0 0.0
  %210 = vmatprep.subr.mxu0 0.0
  %211 = vmatpush1.msra.mxu0 0.0
  %212 = vmatprep.subr.mxu0 0.0
  %213 = vmatpush1.msra.mxu0 0.0
  %214 = vmatprep.subr.mxu0 0.0
  %215 = vmatpush1.msra.mxu0 0.0
  %216 = vmatprep.subr.mxu0 0.0
  %217 = vmatpush1.msra.mxu0 0.0
  %218 = vmatprep.subr.mxu0 0.0
  %219 = vmatpush1.msra.mxu0 0.0
  %v220 = vand.u32 %v65, 4294901760
  %v221 = vsub.f32 %v65, %v220
  %v222 = vand.u32 %v221, 4294901760
  %v223 = vsub.f32 %v221, %v222
  %v224 = vand.u32 %v223, 4294901760
  %225 = vmatprep.subr.mxu0 %v224
  %v226 = vand.u32 %v64, 4294901760
  %v227 = vsub.f32 %v64, %v226
  %v228 = vand.u32 %v227, 4294901760
  %v229 = vsub.f32 %v227, %v228
  %v230 = vand.u32 %v229, 4294901760
  %231 = vmatpush1.msra.mxu0 %v230
  %v232 = vand.u32 %v58, 4294901760
  %v233 = vsub.f32 %v58, %v232
  %v234 = vand.u32 %v233, 4294901760
  %v235 = vsub.f32 %v233, %v234
  %v236 = vand.u32 %v235, 4294901760
  %237 = vmatprep.subr.mxu0 %v236
  %v238 = vand.u32 %v57, 4294901760
  %v239 = vsub.f32 %v57, %v238
  %v240 = vand.u32 %v239, 4294901760
  %v241 = vsub.f32 %v239, %v240
  %v242 = vand.u32 %v241, 4294901760
  %243 = vmatpush1.msra.mxu0 %v242
  %v244 = vand.u32 %v51, 4294901760
  %v245 = vsub.f32 %v51, %v244
  %v246 = vand.u32 %v245, 4294901760
  %v247 = vsub.f32 %v245, %v246
  %v248 = vand.u32 %v247, 4294901760
  %249 = vmatprep.subr.mxu0 %v248
  %v250 = vand.u32 %v50, 4294901760
  %v251 = vsub.f32 %v50, %v250
  %v252 = vand.u32 %v251, 4294901760
  %v253 = vsub.f32 %v251, %v252
  %v254 = vand.u32 %v253, 4294901760
  %255 = vmatpush1.msra.mxu0 %v254
  %v256 = vand.u32 %v44, 4294901760
  %v257 = vsub.f32 %v44, %v256
  %v258 = vand.u32 %v257, 4294901760
  %v259 = vsub.f32 %v257, %v258
  %v260 = vand.u32 %v259, 4294901760
  %261 = vmatprep.subr.mxu0 %v260
  %v262 = vand.u32 %v43, 4294901760
  %v263 = vsub.f32 %v43, %v262
  %v264 = vand.u32 %v263, 4294901760
  %v265 = vsub.f32 %v263, %v264
  %v266 = vand.u32 %v265, 4294901760
  %267 = vmatpush1.msra.mxu0 %v266
  %v268 = vand.u32 %v37, 4294901760
  %v269 = vsub.f32 %v37, %v268
  %v270 = vand.u32 %v269, 4294901760
  %v271 = vsub.f32 %v269, %v270
  %v272 = vand.u32 %v271, 4294901760
  %273 = vmatprep.subr.mxu0 %v272
  %v274 = vand.u32 %v36, 4294901760
  %v275 = vsub.f32 %v36, %v274
  %v276 = vand.u32 %v275, 4294901760
  %v277 = vsub.f32 %v275, %v276
  %v278 = vand.u32 %v277, 4294901760
  %279 = vmatpush1.msra.mxu0 %v278
  %v280 = vand.u32 %v30, 4294901760
  %v281 = vsub.f32 %v30, %v280
  %v282 = vand.u32 %v281, 4294901760
  %v283 = vsub.f32 %v281, %v282
  %v284 = vand.u32 %v283, 4294901760
  %285 = vmatprep.subr.mxu0 %v284
  %v286 = vand.u32 %v29, 4294901760
  %v287 = vsub.f32 %v29, %v286
  %v288 = vand.u32 %v287, 4294901760
  %v289 = vsub.f32 %v287, %v288
  %v290 = vand.u32 %v289, 4294901760
  %291 = vmatpush1.msra.mxu0 %v290
  %v292 = vand.u32 %v23, 4294901760
  %v293 = vsub.f32 %v23, %v292
  %v294 = vand.u32 %v293, 4294901760
  %v295 = vsub.f32 %v293, %v294
  %v296 = vand.u32 %v295, 4294901760
  %297 = vmatprep.subr.mxu0 %v296
  %v298 = vand.u32 %v22, 4294901760
  %v299 = vsub.f32 %v22, %v298
  %v300 = vand.u32 %v299, 4294901760
  %v301 = vsub.f32 %v299, %v300
  %v302 = vand.u32 %v301, 4294901760
  %303 = vmatpush1.msra.mxu0 %v302
  %v304 = vand.u32 %v16, 4294901760
  %v305 = vsub.f32 %v16, %v304
  %v306 = vand.u32 %v305, 4294901760
  %v307 = vsub.f32 %v305, %v306
  %v308 = vand.u32 %v307, 4294901760
  %309 = vmatprep.subr.mxu0 %v308
  %v310 = vand.u32 %v15, 4294901760
  %v311 = vsub.f32 %v15, %v310
  %v312 = vand.u32 %v311, 4294901760
  %v313 = vsub.f32 %v311, %v312
  %v314 = vand.u32 %v313, 4294901760
  %315 = vmatpush1.msra.mxu0 %v314
  %316 = vmatprep.subr.mxu0 0.0
  %317 = vmatpush2.msra.mxu0 0.0
  %318 = vmatprep.subr.mxu0 0.0
  %319 = vmatpush2.msra.mxu0 0.0
  %320 = vmatprep.subr.mxu0 0.0
  %321 = vmatpush2.msra.mxu0 0.0
  %322 = vmatprep.subr.mxu0 0.0
  %323 = vmatpush2.msra.mxu0 0.0
  %324 = vmatprep.subr.mxu0 0.0
  %325 = vmatpush2.msra.mxu0 0.0
  %326 = vmatprep.subr.mxu0 0.0
  %327 = vmatpush2.msra.mxu0 0.0
  %328 = vmatprep.subr.mxu0 0.0
  %329 = vmatpush2.msra.mxu0 0.0
  %330 = vmatprep.subr.mxu0 0.0
  %331 = vmatpush2.msra.mxu0 0.0
  %332 = vmatprep.subr.mxu0 0.0
  %333 = vmatpush2.msra.mxu0 0.0
  %334 = vmatprep.subr.mxu0 0.0
  %335 = vmatpush2.msra.mxu0 0.0
  %336 = vmatprep.subr.mxu0 0.0
  %337 = vmatpush2.msra.mxu0 0.0
  %338 = vmatprep.subr.mxu0 0.0
  %339 = vmatpush2.msra.mxu0 0.0
  %340 = vmatprep.subr.mxu0 0.0
  %341 = vmatpush2.msra.mxu0 0.0
  %342 = vmatprep.subr.mxu0 0.0
  %343 = vmatpush2.msra.mxu0 0.0
  %344 = vmatprep.subr.mxu0 0.0
  %345 = vmatpush2.msra.mxu0 0.0
  %346 = vmatprep.subr.mxu0 0.0
  %347 = vmatpush2.msra.mxu0 0.0
  %348 = vmatprep.mubr.f32.mxu0 0.0
  %v349 = vand.u32 %v110, 4294901760
  %350 = vmatmul.mubr.f32.gmra.mxu0 %v349
  %v351 = vpop.f32.mrf.mxu0
  %v352 = vadd.f32 %v200, %v351
  %v353 = vpop.f32.mrf.mxu0
  %v354 = vadd.f32 %v202, %v353
  %355 = vdwg.mxu0
  %356 = vmatprep.subr.mxu0 0.0
  %357 = vmatpush1.msra.mxu0 0.0
  %358 = vmatprep.subr.mxu0 0.0
  %359 = vmatpush1.msra.mxu0 0.0
  %360 = vmatprep.subr.mxu0 0.0
  %361 = vmatpush1.msra.mxu0 0.0
  %362 = vmatprep.subr.mxu0 0.0
  %363 = vmatpush1.msra.mxu0 0.0
  %364 = vmatprep.subr.mxu0 0.0
  %365 = vmatpush1.msra.mxu0 0.0
  %366 = vmatprep.subr.mxu0 0.0
  %367 = vmatpush1.msra.mxu0 0.0
  %368 = vmatprep.subr.mxu0 0.0
  %369 = vmatpush1.msra.mxu0 0.0
  %370 = vmatprep.subr.mxu0 0.0
  %371 = vmatpush1.msra.mxu0 0.0
  %v372 = vand.u32 %v65, 4294901760
  %v373 = vsub.f32 %v65, %v372
  %374 = vmatprep.subr.mxu0 %v373
  %v375 = vand.u32 %v64, 4294901760
  %v376 = vsub.f32 %v64, %v375
  %377 = vmatpush1.msra.mxu0 %v376
  %v378 = vand.u32 %v58, 4294901760
  %v379 = vsub.f32 %v58, %v378
  %380 = vmatprep.subr.mxu0 %v379
  %v381 = vand.u32 %v57, 4294901760
  %v382 = vsub.f32 %v57, %v381
  %383 = vmatpush1.msra.mxu0 %v382
  %v384 = vand.u32 %v51, 4294901760
  %v385 = vsub.f32 %v51, %v384
  %386 = vmatprep.subr.mxu0 %v385
  %v387 = vand.u32 %v50, 4294901760
  %v388 = vsub.f32 %v50, %v387
  %389 = vmatpush1.msra.mxu0 %v388
  %v390 = vand.u32 %v44, 4294901760
  %v391 = vsub.f32 %v44, %v390
  %392 = vmatprep.subr.mxu0 %v391
  %v393 = vand.u32 %v43, 4294901760
  %v394 = vsub.f32 %v43, %v393
  %395 = vmatpush1.msra.mxu0 %v394
  %v396 = vand.u32 %v37, 4294901760
  %v397 = vsub.f32 %v37, %v396
  %398 = vmatprep.subr.mxu0 %v397
  %v399 = vand.u32 %v36, 4294901760
  %v400 = vsub.f32 %v36, %v399
  %401 = vmatpush1.msra.mxu0 %v400
  %v402 = vand.u32 %v30, 4294901760
  %v403 = vsub.f32 %v30, %v402
  %404 = vmatprep.subr.mxu0 %v403
  %v405 = vand.u32 %v29, 4294901760
  %v406 = vsub.f32 %v29, %v405
  %407 = vmatpush1.msra.mxu0 %v406
  %v408 = vand.u32 %v23, 4294901760
  %v409 = vsub.f32 %v23, %v408
  %410 = vmatprep.subr.mxu0 %v409
  %v411 = vand.u32 %v22, 4294901760
  %v412 = vsub.f32 %v22, %v411
  %413 = vmatpush1.msra.mxu0 %v412
  %v414 = vand.u32 %v16, 4294901760
  %v415 = vsub.f32 %v16, %v414
  %416 = vmatprep.subr.mxu0 %v415
  %v417 = vand.u32 %v15, 4294901760
  %v418 = vsub.f32 %v15, %v417
  %419 = vmatpush1.msra.mxu0 %v418
  %420 = vmatprep.subr.mxu0 0.0
  %421 = vmatpush2.msra.mxu0 0.0
  %422 = vmatprep.subr.mxu0 0.0
  %423 = vmatpush2.msra.mxu0 0.0
  %424 = vmatprep.subr.mxu0 0.0
  %425 = vmatpush2.msra.mxu0 0.0
  %426 = vmatprep.subr.mxu0 0.0
  %427 = vmatpush2.msra.mxu0 0.0
  %428 = vmatprep.subr.mxu0 0.0
  %429 = vmatpush2.msra.mxu0 0.0
  %430 = vmatprep.subr.mxu0 0.0
  %431 = vmatpush2.msra.mxu0 0.0
  %432 = vmatprep.subr.mxu0 0.0
  %433 = vmatpush2.msra.mxu0 0.0
  %434 = vmatprep.subr.mxu0 0.0
  %435 = vmatpush2.msra.mxu0 0.0
  %436 = vmatprep.subr.mxu0 0.0
  %437 = vmatpush2.msra.mxu0 0.0
  %438 = vmatprep.subr.mxu0 0.0
  %439 = vmatpush2.msra.mxu0 0.0
  %440 = vmatprep.subr.mxu0 0.0
  %441 = vmatpush2.msra.mxu0 0.0
  %442 = vmatprep.subr.mxu0 0.0
  %443 = vmatpush2.msra.mxu0 0.0
  %444 = vmatprep.subr.mxu0 0.0
  %445 = vmatpush2.msra.mxu0 0.0
  %446 = vmatprep.subr.mxu0 0.0
  %447 = vmatpush2.msra.mxu0 0.0
  %448 = vmatprep.subr.mxu0 0.0
  %449 = vmatpush2.msra.mxu0 0.0
  %450 = vmatprep.subr.mxu0 0.0
  %451 = vmatpush2.msra.mxu0 0.0
  %452 = vmatprep.mubr.f32.mxu0 0.0
  %v453 = vand.u32 %v110, 4294901760
  %v454 = vsub.f32 %v110, %v453
  %455 = vmatmul.mubr.f32.gmra.mxu0 %v454
  %v456 = vpop.f32.mrf.mxu0
  %v457 = vadd.f32 %v352, %v456
  %v458 = vpop.f32.mrf.mxu0
  %v459 = vadd.f32 %v354, %v458
  %460 = vdwg.mxu0
  %461 = vmatprep.subr.mxu0 0.0
  %462 = vmatpush1.msra.mxu0 0.0
  %463 = vmatprep.subr.mxu0 0.0
  %464 = vmatpush1.msra.mxu0 0.0
  %465 = vmatprep.subr.mxu0 0.0
  %466 = vmatpush1.msra.mxu0 0.0
  %467 = vmatprep.subr.mxu0 0.0
  %468 = vmatpush1.msra.mxu0 0.0
  %469 = vmatprep.subr.mxu0 0.0
  %470 = vmatpush1.msra.mxu0 0.0
  %471 = vmatprep.subr.mxu0 0.0
  %472 = vmatpush1.msra.mxu0 0.0
  %473 = vmatprep.subr.mxu0 0.0
  %474 = vmatpush1.msra.mxu0 0.0
  %475 = vmatprep.subr.mxu0 0.0
  %476 = vmatpush1.msra.mxu0 0.0
  %v477 = vand.u32 %v65, 4294901760
  %478 = vmatprep.subr.mxu0 %v477
  %v479 = vand.u32 %v64, 4294901760
  %480 = vmatpush1.msra.mxu0 %v479
  %v481 = vand.u32 %v58, 4294901760
  %482 = vmatprep.subr.mxu0 %v481
  %v483 = vand.u32 %v57, 4294901760
  %484 = vmatpush1.msra.mxu0 %v483
  %v485 = vand.u32 %v51, 4294901760
  %486 = vmatprep.subr.mxu0 %v485
  %v487 = vand.u32 %v50, 4294901760
  %488 = vmatpush1.msra.mxu0 %v487
  %v489 = vand.u32 %v44, 4294901760
  %490 = vmatprep.subr.mxu0 %v489
  %v491 = vand.u32 %v43, 4294901760
  %492 = vmatpush1.msra.mxu0 %v491
  %v493 = vand.u32 %v37, 4294901760
  %494 = vmatprep.subr.mxu0 %v493
  %v495 = vand.u32 %v36, 4294901760
  %496 = vmatpush1.msra.mxu0 %v495
  %v497 = vand.u32 %v30, 4294901760
  %498 = vmatprep.subr.mxu0 %v497
  %v499 = vand.u32 %v29, 4294901760
  %500 = vmatpush1.msra.mxu0 %v499
  %v501 = vand.u32 %v23, 4294901760
  %502 = vmatprep.subr.mxu0 %v501
  %v503 = vand.u32 %v22, 4294901760
  %504 = vmatpush1.msra.mxu0 %v503
  %v505 = vand.u32 %v16, 4294901760
  %506 = vmatprep.subr.mxu0 %v505
  %v507 = vand.u32 %v15, 4294901760
  %508 = vmatpush1.msra.mxu0 %v507
  %509 = vmatprep.subr.mxu0 0.0
  %510 = vmatpush2.msra.mxu0 0.0
  %511 = vmatprep.subr.mxu0 0.0
  %512 = vmatpush2.msra.mxu0 0.0
  %513 = vmatprep.subr.mxu0 0.0
  %514 = vmatpush2.msra.mxu0 0.0
  %515 = vmatprep.subr.mxu0 0.0
  %516 = vmatpush2.msra.mxu0 0.0
  %517 = vmatprep.subr.mxu0 0.0
  %518 = vmatpush2.msra.mxu0 0.0
  %519 = vmatprep.subr.mxu0 0.0
  %520 = vmatpush2.msra.mxu0 0.0
  %521 = vmatprep.subr.mxu0 0.0
  %522 = vmatpush2.msra.mxu0 0.0
  %523 = vmatprep.subr.mxu0 0.0
  %524 = vmatpush2.msra.mxu0 0.0
  %525 = vmatprep.subr.mxu0 0.0
  %526 = vmatpush2.msra.mxu0 0.0
  %527 = vmatprep.subr.mxu0 0.0
  %528 = vmatpush2.msra.mxu0 0.0
  %529 = vmatprep.subr.mxu0 0.0
  %530 = vmatpush2.msra.mxu0 0.0
  %531 = vmatprep.subr.mxu0 0.0
  %532 = vmatpush2.msra.mxu0 0.0
  %533 = vmatprep.subr.mxu0 0.0
  %534 = vmatpush2.msra.mxu0 0.0
  %535 = vmatprep.subr.mxu0 0.0
  %536 = vmatpush2.msra.mxu0 0.0
  %537 = vmatprep.subr.mxu0 0.0
  %538 = vmatpush2.msra.mxu0 0.0
  %539 = vmatprep.subr.mxu0 0.0
  %540 = vmatpush2.msra.mxu0 0.0
  %541 = vmatprep.mubr.f32.mxu0 0.0
  %v542 = vand.u32 %v110, 4294901760
  %v543 = vsub.f32 %v110, %v542
  %v544 = vand.u32 %v543, 4294901760
  %545 = vmatmul.mubr.f32.gmra.mxu0 %v544
  %v546 = vpop.f32.mrf.mxu0
  %v547 = vadd.f32 %v457, %v546
  %v548 = vpop.f32.mrf.mxu0
  %v549 = vadd.f32 %v459, %v548
  %550 = vdwg.mxu0
  %551 = vmatprep.subr.mxu0 0.0
  %552 = vmatpush1.msra.mxu0 0.0
  %553 = vmatprep.subr.mxu0 0.0
  %554 = vmatpush1.msra.mxu0 0.0
  %555 = vmatprep.subr.mxu0 0.0
  %556 = vmatpush1.msra.mxu0 0.0
  %557 = vmatprep.subr.mxu0 0.0
  %558 = vmatpush1.msra.mxu0 0.0
  %559 = vmatprep.subr.mxu0 0.0
  %560 = vmatpush1.msra.mxu0 0.0
  %561 = vmatprep.subr.mxu0 0.0
  %562 = vmatpush1.msra.mxu0 0.0
  %563 = vmatprep.subr.mxu0 0.0
  %564 = vmatpush1.msra.mxu0 0.0
  %565 = vmatprep.subr.mxu0 0.0
  %566 = vmatpush1.msra.mxu0 0.0
  %v567 = vand.u32 %v65, 4294901760
  %v568 = vsub.f32 %v65, %v567
  %v569 = vand.u32 %v568, 4294901760
  %570 = vmatprep.subr.mxu0 %v569
  %v571 = vand.u32 %v64, 4294901760
  %v572 = vsub.f32 %v64, %v571
  %v573 = vand.u32 %v572, 4294901760
  %574 = vmatpush1.msra.mxu0 %v573
  %v575 = vand.u32 %v58, 4294901760
  %v576 = vsub.f32 %v58, %v575
  %v577 = vand.u32 %v576, 4294901760
  %578 = vmatprep.subr.mxu0 %v577
  %v579 = vand.u32 %v57, 4294901760
  %v580 = vsub.f32 %v57, %v579
  %v581 = vand.u32 %v580, 4294901760
  %582 = vmatpush1.msra.mxu0 %v581
  %v583 = vand.u32 %v51, 4294901760
  %v584 = vsub.f32 %v51, %v583
  %v585 = vand.u32 %v584, 4294901760
  %586 = vmatprep.subr.mxu0 %v585
  %v587 = vand.u32 %v50, 4294901760
  %v588 = vsub.f32 %v50, %v587
  %v589 = vand.u32 %v588, 4294901760
  %590 = vmatpush1.msra.mxu0 %v589
  %v591 = vand.u32 %v44, 4294901760
  %v592 = vsub.f32 %v44, %v591
  %v593 = vand.u32 %v592, 4294901760
  %594 = vmatprep.subr.mxu0 %v593
  %v595 = vand.u32 %v43, 4294901760
  %v596 = vsub.f32 %v43, %v595
  %v597 = vand.u32 %v596, 4294901760
  %598 = vmatpush1.msra.mxu0 %v597
  %v599 = vand.u32 %v37, 4294901760
  %v600 = vsub.f32 %v37, %v599
  %v601 = vand.u32 %v600, 4294901760
  %602 = vmatprep.subr.mxu0 %v601
  %v603 = vand.u32 %v36, 4294901760
  %v604 = vsub.f32 %v36, %v603
  %v605 = vand.u32 %v604, 4294901760
  %606 = vmatpush1.msra.mxu0 %v605
  %v607 = vand.u32 %v30, 4294901760
  %v608 = vsub.f32 %v30, %v607
  %v609 = vand.u32 %v608, 4294901760
  %610 = vmatprep.subr.mxu0 %v609
  %v611 = vand.u32 %v29, 4294901760
  %v612 = vsub.f32 %v29, %v611
  %v613 = vand.u32 %v612, 4294901760
  %614 = vmatpush1.msra.mxu0 %v613
  %v615 = vand.u32 %v23, 4294901760
  %v616 = vsub.f32 %v23, %v615
  %v617 = vand.u32 %v616, 4294901760
  %618 = vmatprep.subr.mxu0 %v617
  %v619 = vand.u32 %v22, 4294901760
  %v620 = vsub.f32 %v22, %v619
  %v621 = vand.u32 %v620, 4294901760
  %622 = vmatpush1.msra.mxu0 %v621
  %v623 = vand.u32 %v16, 4294901760
  %v624 = vsub.f32 %v16, %v623
  %v625 = vand.u32 %v624, 4294901760
  %626 = vmatprep.subr.mxu0 %v625
  %v627 = vand.u32 %v15, 4294901760
  %v628 = vsub.f32 %v15, %v627
  %v629 = vand.u32 %v628, 4294901760
  %630 = vmatpush1.msra.mxu0 %v629
  %631 = vmatprep.subr.mxu0 0.0
  %632 = vmatpush2.msra.mxu0 0.0
  %633 = vmatprep.subr.mxu0 0.0
  %634 = vmatpush2.msra.mxu0 0.0
  %635 = vmatprep.subr.mxu0 0.0
  %636 = vmatpush2.msra.mxu0 0.0
  %637 = vmatprep.subr.mxu0 0.0
  %638 = vmatpush2.msra.mxu0 0.0
  %639 = vmatprep.subr.mxu0 0.0
  %640 = vmatpush2.msra.mxu0 0.0
  %641 = vmatprep.subr.mxu0 0.0
  %642 = vmatpush2.msra.mxu0 0.0
  %643 = vmatprep.subr.mxu0 0.0
  %644 = vmatpush2.msra.mxu0 0.0
  %645 = vmatprep.subr.mxu0 0.0
  %646 = vmatpush2.msra.mxu0 0.0
  %647 = vmatprep.subr.mxu0 0.0
  %648 = vmatpush2.msra.mxu0 0.0
  %649 = vmatprep.subr.mxu0 0.0
  %650 = vmatpush2.msra.mxu0 0.0
  %651 = vmatprep.subr.mxu0 0.0
  %652 = vmatpush2.msra.mxu0 0.0
  %653 = vmatprep.subr.mxu0 0.0
  %654 = vmatpush2.msra.mxu0 0.0
  %655 = vmatprep.subr.mxu0 0.0
  %656 = vmatpush2.msra.mxu0 0.0
  %657 = vmatprep.subr.mxu0 0.0
  %658 = vmatpush2.msra.mxu0 0.0
  %659 = vmatprep.subr.mxu0 0.0
  %660 = vmatpush2.msra.mxu0 0.0
  %661 = vmatprep.subr.mxu0 0.0
  %662 = vmatpush2.msra.mxu0 0.0
  %663 = vmatprep.mubr.f32.mxu0 0.0
  %v664 = vand.u32 %v110, 4294901760
  %665 = vmatmul.mubr.f32.gmra.mxu0 %v664
  %v666 = vpop.f32.mrf.mxu0
  %v667 = vadd.f32 %v547, %v666
  %v668 = vpop.f32.mrf.mxu0
  %v669 = vadd.f32 %v549, %v668
  %670 = vdwg.mxu0
  %671 = vmatprep.subr.mxu0 0.0
  %672 = vmatpush1.msra.mxu0 0.0
  %673 = vmatprep.subr.mxu0 0.0
  %674 = vmatpush1.msra.mxu0 0.0
  %675 = vmatprep.subr.mxu0 0.0
  %676 = vmatpush1.msra.mxu0 0.0
  %677 = vmatprep.subr.mxu0 0.0
  %678 = vmatpush1.msra.mxu0 0.0
  %679 = vmatprep.subr.mxu0 0.0
  %680 = vmatpush1.msra.mxu0 0.0
  %681 = vmatprep.subr.mxu0 0.0
  %682 = vmatpush1.msra.mxu0 0.0
  %683 = vmatprep.subr.mxu0 0.0
  %684 = vmatpush1.msra.mxu0 0.0
  %685 = vmatprep.subr.mxu0 0.0
  %686 = vmatpush1.msra.mxu0 0.0
  %v687 = vand.u32 %v65, 4294901760
  %688 = vmatprep.subr.mxu0 %v687
  %v689 = vand.u32 %v64, 4294901760
  %690 = vmatpush1.msra.mxu0 %v689
  %v691 = vand.u32 %v58, 4294901760
  %692 = vmatprep.subr.mxu0 %v691
  %v693 = vand.u32 %v57, 4294901760
  %694 = vmatpush1.msra.mxu0 %v693
  %v695 = vand.u32 %v51, 4294901760
  %696 = vmatprep.subr.mxu0 %v695
  %v697 = vand.u32 %v50, 4294901760
  %698 = vmatpush1.msra.mxu0 %v697
  %v699 = vand.u32 %v44, 4294901760
  %700 = vmatprep.subr.mxu0 %v699
  %v701 = vand.u32 %v43, 4294901760
  %702 = vmatpush1.msra.mxu0 %v701
  %v703 = vand.u32 %v37, 4294901760
  %704 = vmatprep.subr.mxu0 %v703
  %v705 = vand.u32 %v36, 4294901760
  %706 = vmatpush1.msra.mxu0 %v705
  %v707 = vand.u32 %v30, 4294901760
  %708 = vmatprep.subr.mxu0 %v707
  %v709 = vand.u32 %v29, 4294901760
  %710 = vmatpush1.msra.mxu0 %v709
  %v711 = vand.u32 %v23, 4294901760
  %712 = vmatprep.subr.mxu0 %v711
  %v713 = vand.u32 %v22, 4294901760
  %714 = vmatpush1.msra.mxu0 %v713
  %v715 = vand.u32 %v16, 4294901760
  %716 = vmatprep.subr.mxu0 %v715
  %v717 = vand.u32 %v15, 4294901760
  %718 = vmatpush1.msra.mxu0 %v717
  %719 = vmatprep.subr.mxu0 0.0
  %720 = vmatpush2.msra.mxu0 0.0
  %721 = vmatprep.subr.mxu0 0.0
  %722 = vmatpush2.msra.mxu0 0.0
  %723 = vmatprep.subr.mxu0 0.0
  %724 = vmatpush2.msra.mxu0 0.0
  %725 = vmatprep.subr.mxu0 0.0
  %726 = vmatpush2.msra.mxu0 0.0
  %727 = vmatprep.subr.mxu0 0.0
  %728 = vmatpush2.msra.mxu0 0.0
  %729 = vmatprep.subr.mxu0 0.0
  %730 = vmatpush2.msra.mxu0 0.0
  %731 = vmatprep.subr.mxu0 0.0
  %732 = vmatpush2.msra.mxu0 0.0
  %733 = vmatprep.subr.mxu0 0.0
  %734 = vmatpush2.msra.mxu0 0.0
  %735 = vmatprep.subr.mxu0 0.0
  %736 = vmatpush2.msra.mxu0 0.0
  %737 = vmatprep.subr.mxu0 0.0
  %738 = vmatpush2.msra.mxu0 0.0
  %739 = vmatprep.subr.mxu0 0.0
  %740 = vmatpush2.msra.mxu0 0.0
  %741 = vmatprep.subr.mxu0 0.0
  %742 = vmatpush2.msra.mxu0 0.0
  %743 = vmatprep.subr.mxu0 0.0
  %744 = vmatpush2.msra.mxu0 0.0
  %745 = vmatprep.subr.mxu0 0.0
  %746 = vmatpush2.msra.mxu0 0.0
  %747 = vmatprep.subr.mxu0 0.0
  %748 = vmatpush2.msra.mxu0 0.0
  %749 = vmatprep.subr.mxu0 0.0
  %750 = vmatpush2.msra.mxu0 0.0
  %751 = vmatprep.mubr.f32.mxu0 0.0
  %v752 = vand.u32 %v110, 4294901760
  %753 = vmatmul.mubr.f32.gmra.mxu0 %v752
  %v754 = vpop.f32.mrf.mxu0
  %v755 = vadd.f32 %v667, %v754
  %v756 = vpop.f32.mrf.mxu0
  %v757 = vadd.f32 %v669, %v756
  %758 = vdwg.mxu0
  %759 = vmatprep.subr.mxu0 0.0
  %760 = vmatpush1.msra.mxu0 0.0
  %761 = vmatprep.subr.mxu0 0.0
  %762 = vmatpush1.msra.mxu0 0.0
  %763 = vmatprep.subr.mxu0 0.0
  %764 = vmatpush1.msra.mxu0 0.0
  %765 = vmatprep.subr.mxu0 0.0
  %766 = vmatpush1.msra.mxu0 0.0
  %767 = vmatprep.subr.mxu0 0.0
  %768 = vmatpush1.msra.mxu0 0.0
  %769 = vmatprep.subr.mxu0 0.0
  %770 = vmatpush1.msra.mxu0 0.0
  %771 = vmatprep.subr.mxu0 0.0
  %772 = vmatpush1.msra.mxu0 0.0
  %773 = vmatprep.subr.mxu0 0.0
  %774 = vmatpush1.msra.mxu0 0.0
  %v775 = vand.u32 %v67, 4294901760
  %776 = vmatprep.subr.mxu0 %v775
  %v777 = vand.u32 %v66, 4294901760
  %778 = vmatpush1.msra.mxu0 %v777
  %v779 = vand.u32 %v60, 4294901760
  %780 = vmatprep.subr.mxu0 %v779
  %v781 = vand.u32 %v59, 4294901760
  %782 = vmatpush1.msra.mxu0 %v781
  %v783 = vand.u32 %v53, 4294901760
  %784 = vmatprep.subr.mxu0 %v783
  %v785 = vand.u32 %v52, 4294901760
  %786 = vmatpush1.msra.mxu0 %v785
  %v787 = vand.u32 %v46, 4294901760
  %788 = vmatprep.subr.mxu0 %v787
  %v789 = vand.u32 %v45, 4294901760
  %790 = vmatpush1.msra.mxu0 %v789
  %v791 = vand.u32 %v39, 4294901760
  %792 = vmatprep.subr.mxu0 %v791
  %v793 = vand.u32 %v38, 4294901760
  %794 = vmatpush1.msra.mxu0 %v793
  %v795 = vand.u32 %v32, 4294901760
  %796 = vmatprep.subr.mxu0 %v795
  %v797 = vand.u32 %v31, 4294901760
  %798 = vmatpush1.msra.mxu0 %v797
  %v799 = vand.u32 %v25, 4294901760
  %800 = vmatprep.subr.mxu0 %v799
  %v801 = vand.u32 %v24, 4294901760
  %802 = vmatpush1.msra.mxu0 %v801
  %v803 = vand.u32 %v18, 4294901760
  %804 = vmatprep.subr.mxu0 %v803
  %v805 = vand.u32 %v17, 4294901760
  %806 = vmatpush1.msra.mxu0 %v805
  %807 = vmatprep.subr.mxu0 0.0
  %808 = vmatpush2.msra.mxu0 0.0
  %809 = vmatprep.subr.mxu0 0.0
  %810 = vmatpush2.msra.mxu0 0.0
  %811 = vmatprep.subr.mxu0 0.0
  %812 = vmatpush2.msra.mxu0 0.0
  %813 = vmatprep.subr.mxu0 0.0
  %814 = vmatpush2.msra.mxu0 0.0
  %815 = vmatprep.subr.mxu0 0.0
  %816 = vmatpush2.msra.mxu0 0.0
  %817 = vmatprep.subr.mxu0 0.0
  %818 = vmatpush2.msra.mxu0 0.0
  %819 = vmatprep.subr.mxu0 0.0
  %820 = vmatpush2.msra.mxu0 0.0
  %821 = vmatprep.subr.mxu0 0.0
  %822 = vmatpush2.msra.mxu0 0.0
  %823 = vmatprep.subr.mxu0 0.0
  %824 = vmatpush2.msra.mxu0 0.0
  %825 = vmatprep.subr.mxu0 0.0
  %826 = vmatpush2.msra.mxu0 0.0
  %827 = vmatprep.subr.mxu0 0.0
  %828 = vmatpush2.msra.mxu0 0.0
  %829 = vmatprep.subr.mxu0 0.0
  %830 = vmatpush2.msra.mxu0 0.0
  %831 = vmatprep.subr.mxu0 0.0
  %832 = vmatpush2.msra.mxu0 0.0
  %833 = vmatprep.subr.mxu0 0.0
  %834 = vmatpush2.msra.mxu0 0.0
  %835 = vmatprep.subr.mxu0 0.0
  %836 = vmatpush2.msra.mxu0 0.0
  %837 = vmatprep.subr.mxu0 0.0
  %838 = vmatpush2.msra.mxu0 0.0
  %839 = vmatprep.mubr.f32.mxu0 0.0
  %v840 = vand.u32 %v110, 4294901760
  %v841 = vsub.f32 %v110, %v840
  %v842 = vand.u32 %v841, 4294901760
  %v843 = vsub.f32 %v841, %v842
  %v844 = vand.u32 %v843, 4294901760
  %845 = vmatmul.mubr.f32.gmra.mxu0 %v844
  %v846 = vpop.f32.mrf.mxu0
  %v847 = vadd.f32 %v84, %v846
  %v848 = vpop.f32.mrf.mxu0
  %v849 = vadd.f32 %v88, %v848
  %850 = vdwg.mxu0
  %851 = vmatprep.subr.mxu0 0.0
  %852 = vmatpush1.msra.mxu0 0.0
  %853 = vmatprep.subr.mxu0 0.0
  %854 = vmatpush1.msra.mxu0 0.0
  %855 = vmatprep.subr.mxu0 0.0
  %856 = vmatpush1.msra.mxu0 0.0
  %857 = vmatprep.subr.mxu0 0.0
  %858 = vmatpush1.msra.mxu0 0.0
  %859 = vmatprep.subr.mxu0 0.0
  %860 = vmatpush1.msra.mxu0 0.0
  %861 = vmatprep.subr.mxu0 0.0
  %862 = vmatpush1.msra.mxu0 0.0
  %863 = vmatprep.subr.mxu0 0.0
  %864 = vmatpush1.msra.mxu0 0.0
  %865 = vmatprep.subr.mxu0 0.0
  %866 = vmatpush1.msra.mxu0 0.0
  %v867 = vand.u32 %v67, 4294901760
  %v868 = vsub.f32 %v67, %v867
  %v869 = vand.u32 %v868, 4294901760
  %v870 = vsub.f32 %v868, %v869
  %v871 = vand.u32 %v870, 4294901760
  %872 = vmatprep.subr.mxu0 %v871
  %v873 = vand.u32 %v66, 4294901760
  %v874 = vsub.f32 %v66, %v873
  %v875 = vand.u32 %v874, 4294901760
  %v876 = vsub.f32 %v874, %v875
  %v877 = vand.u32 %v876, 4294901760
  %878 = vmatpush1.msra.mxu0 %v877
  %v879 = vand.u32 %v60, 4294901760
  %v880 = vsub.f32 %v60, %v879
  %v881 = vand.u32 %v880, 4294901760
  %v882 = vsub.f32 %v880, %v881
  %v883 = vand.u32 %v882, 4294901760
  %884 = vmatprep.subr.mxu0 %v883
  %v885 = vand.u32 %v59, 4294901760
  %v886 = vsub.f32 %v59, %v885
  %v887 = vand.u32 %v886, 4294901760
  %v888 = vsub.f32 %v886, %v887
  %v889 = vand.u32 %v888, 4294901760
  %890 = vmatpush1.msra.mxu0 %v889
  %v891 = vand.u32 %v53, 4294901760
  %v892 = vsub.f32 %v53, %v891
  %v893 = vand.u32 %v892, 4294901760
  %v894 = vsub.f32 %v892, %v893
  %v895 = vand.u32 %v894, 4294901760
  %896 = vmatprep.subr.mxu0 %v895
  %v897 = vand.u32 %v52, 4294901760
  %v898 = vsub.f32 %v52, %v897
  %v899 = vand.u32 %v898, 4294901760
  %v900 = vsub.f32 %v898, %v899
  %v901 = vand.u32 %v900, 4294901760
  %902 = vmatpush1.msra.mxu0 %v901
  %v903 = vand.u32 %v46, 4294901760
  %v904 = vsub.f32 %v46, %v903
  %v905 = vand.u32 %v904, 4294901760
  %v906 = vsub.f32 %v904, %v905
  %v907 = vand.u32 %v906, 4294901760
  %908 = vmatprep.subr.mxu0 %v907
  %v909 = vand.u32 %v45, 4294901760
  %v910 = vsub.f32 %v45, %v909
  %v911 = vand.u32 %v910, 4294901760
  %v912 = vsub.f32 %v910, %v911
  %v913 = vand.u32 %v912, 4294901760
  %914 = vmatpush1.msra.mxu0 %v913
  %v915 = vand.u32 %v39, 4294901760
  %v916 = vsub.f32 %v39, %v915
  %v917 = vand.u32 %v916, 4294901760
  %v918 = vsub.f32 %v916, %v917
  %v919 = vand.u32 %v918, 4294901760
  %920 = vmatprep.subr.mxu0 %v919
  %v921 = vand.u32 %v38, 4294901760
  %v922 = vsub.f32 %v38, %v921
  %v923 = vand.u32 %v922, 4294901760
  %v924 = vsub.f32 %v922, %v923
  %v925 = vand.u32 %v924, 4294901760
  %926 = vmatpush1.msra.mxu0 %v925
  %v927 = vand.u32 %v32, 4294901760
  %v928 = vsub.f32 %v32, %v927
  %v929 = vand.u32 %v928, 4294901760
  %v930 = vsub.f32 %v928, %v929
  %v931 = vand.u32 %v930, 4294901760
  %932 = vmatprep.subr.mxu0 %v931
  %v933 = vand.u32 %v31, 4294901760
  %v934 = vsub.f32 %v31, %v933
  %v935 = vand.u32 %v934, 4294901760
  %v936 = vsub.f32 %v934, %v935
  %v937 = vand.u32 %v936, 4294901760
  %938 = vmatpush1.msra.mxu0 %v937
  %v939 = vand.u32 %v25, 4294901760
  %v940 = vsub.f32 %v25, %v939
  %v941 = vand.u32 %v940, 4294901760
  %v942 = vsub.f32 %v940, %v941
  %v943 = vand.u32 %v942, 4294901760
  %944 = vmatprep.subr.mxu0 %v943
  %v945 = vand.u32 %v24, 4294901760
  %v946 = vsub.f32 %v24, %v945
  %v947 = vand.u32 %v946, 4294901760
  %v948 = vsub.f32 %v946, %v947
  %v949 = vand.u32 %v948, 4294901760
  %950 = vmatpush1.msra.mxu0 %v949
  %v951 = vand.u32 %v18, 4294901760
  %v952 = vsub.f32 %v18, %v951
  %v953 = vand.u32 %v952, 4294901760
  %v954 = vsub.f32 %v952, %v953
  %v955 = vand.u32 %v954, 4294901760
  %956 = vmatprep.subr.mxu0 %v955
  %v957 = vand.u32 %v17, 4294901760
  %v958 = vsub.f32 %v17, %v957
  %v959 = vand.u32 %v958, 4294901760
  %v960 = vsub.f32 %v958, %v959
  %v961 = vand.u32 %v960, 4294901760
  %962 = vmatpush1.msra.mxu0 %v961
  %963 = vmatprep.subr.mxu0 0.0
  %964 = vmatpush2.msra.mxu0 0.0
  %965 = vmatprep.subr.mxu0 0.0
  %966 = vmatpush2.msra.mxu0 0.0
  %967 = vmatprep.subr.mxu0 0.0
  %968 = vmatpush2.msra.mxu0 0.0
  %969 = vmatprep.subr.mxu0 0.0
  %970 = vmatpush2.msra.mxu0 0.0
  %971 = vmatprep.subr.mxu0 0.0
  %972 = vmatpush2.msra.mxu0 0.0
  %973 = vmatprep.subr.mxu0 0.0
  %974 = vmatpush2.msra.mxu0 0.0
  %975 = vmatprep.subr.mxu0 0.0
  %976 = vmatpush2.msra.mxu0 0.0
  %977 = vmatprep.subr.mxu0 0.0
  %978 = vmatpush2.msra.mxu0 0.0
  %979 = vmatprep.subr.mxu0 0.0
  %980 = vmatpush2.msra.mxu0 0.0
  %981 = vmatprep.subr.mxu0 0.0
  %982 = vmatpush2.msra.mxu0 0.0
  %983 = vmatprep.subr.mxu0 0.0
  %984 = vmatpush2.msra.mxu0 0.0
  %985 = vmatprep.subr.mxu0 0.0
  %986 = vmatpush2.msra.mxu0 0.0
  %987 = vmatprep.subr.mxu0 0.0
  %988 = vmatpush2.msra.mxu0 0.0
  %989 = vmatprep.subr.mxu0 0.0
  %990 = vmatpush2.msra.mxu0 0.0
  %991 = vmatprep.subr.mxu0 0.0
  %992 = vmatpush2.msra.mxu0 0.0
  %993 = vmatprep.subr.mxu0 0.0
  %994 = vmatpush2.msra.mxu0 0.0
  %995 = vmatprep.mubr.f32.mxu0 0.0
  %v996 = vand.u32 %v110, 4294901760
  %997 = vmatmul.mubr.f32.gmra.mxu0 %v996
  %v998 = vpop.f32.mrf.mxu0
  %v999 = vadd.f32 %v847, %v998
  %v1000 = vpop.f32.mrf.mxu0
  %v1001 = vadd.f32 %v849, %v1000
  %1002 = vdwg.mxu0
  %1003 = vmatprep.subr.mxu0 0.0
  %1004 = vmatpush1.msra.mxu0 0.0
  %1005 = vmatprep.subr.mxu0 0.0
  %1006 = vmatpush1.msra.mxu0 0.0
  %1007 = vmatprep.subr.mxu0 0.0
  %1008 = vmatpush1.msra.mxu0 0.0
  %1009 = vmatprep.subr.mxu0 0.0
  %1010 = vmatpush1.msra.mxu0 0.0
  %1011 = vmatprep.subr.mxu0 0.0
  %1012 = vmatpush1.msra.mxu0 0.0
  %1013 = vmatprep.subr.mxu0 0.0
  %1014 = vmatpush1.msra.mxu0 0.0
  %1015 = vmatprep.subr.mxu0 0.0
  %1016 = vmatpush1.msra.mxu0 0.0
  %1017 = vmatprep.subr.mxu0 0.0
  %1018 = vmatpush1.msra.mxu0 0.0
  %v1019 = vand.u32 %v67, 4294901760
  %v1020 = vsub.f32 %v67, %v1019
  %1021 = vmatprep.subr.mxu0 %v1020
  %v1022 = vand.u32 %v66, 4294901760
  %v1023 = vsub.f32 %v66, %v1022
  %1024 = vmatpush1.msra.mxu0 %v1023
  %v1025 = vand.u32 %v60, 4294901760
  %v1026 = vsub.f32 %v60, %v1025
  %1027 = vmatprep.subr.mxu0 %v1026
  %v1028 = vand.u32 %v59, 4294901760
  %v1029 = vsub.f32 %v59, %v1028
  %1030 = vmatpush1.msra.mxu0 %v1029
  %v1031 = vand.u32 %v53, 4294901760
  %v1032 = vsub.f32 %v53, %v1031
  %1033 = vmatprep.subr.mxu0 %v1032
  %v1034 = vand.u32 %v52, 4294901760
  %v1035 = vsub.f32 %v52, %v1034
  %1036 = vmatpush1.msra.mxu0 %v1035
  %v1037 = vand.u32 %v46, 4294901760
  %v1038 = vsub.f32 %v46, %v1037
  %1039 = vmatprep.subr.mxu0 %v1038
  %v1040 = vand.u32 %v45, 4294901760
  %v1041 = vsub.f32 %v45, %v1040
  %1042 = vmatpush1.msra.mxu0 %v1041
  %v1043 = vand.u32 %v39, 4294901760
  %v1044 = vsub.f32 %v39, %v1043
  %1045 = vmatprep.subr.mxu0 %v1044
  %v1046 = vand.u32 %v38, 4294901760
  %v1047 = vsub.f32 %v38, %v1046
  %1048 = vmatpush1.msra.mxu0 %v1047
  %v1049 = vand.u32 %v32, 4294901760
  %v1050 = vsub.f32 %v32, %v1049
  %1051 = vmatprep.subr.mxu0 %v1050
  %v1052 = vand.u32 %v31, 4294901760
  %v1053 = vsub.f32 %v31, %v1052
  %1054 = vmatpush1.msra.mxu0 %v1053
  %v1055 = vand.u32 %v25, 4294901760
  %v1056 = vsub.f32 %v25, %v1055
  %1057 = vmatprep.subr.mxu0 %v1056
  %v1058 = vand.u32 %v24, 4294901760
  %v1059 = vsub.f32 %v24, %v1058
  %1060 = vmatpush1.msra.mxu0 %v1059
  %v1061 = vand.u32 %v18, 4294901760
  %v1062 = vsub.f32 %v18, %v1061
  %1063 = vmatprep.subr.mxu0 %v1062
  %v1064 = vand.u32 %v17, 4294901760
  %v1065 = vsub.f32 %v17, %v1064
  %1066 = vmatpush1.msra.mxu0 %v1065
  %1067 = vmatprep.subr.mxu0 0.0
  %1068 = vmatpush2.msra.mxu0 0.0
  %1069 = vmatprep.subr.mxu0 0.0
  %1070 = vmatpush2.msra.mxu0 0.0
  %1071 = vmatprep.subr.mxu0 0.0
  %1072 = vmatpush2.msra.mxu0 0.0
  %1073 = vmatprep.subr.mxu0 0.0
  %1074 = vmatpush2.msra.mxu0 0.0
  %1075 = vmatprep.subr.mxu0 0.0
  %1076 = vmatpush2.msra.mxu0 0.0
  %1077 = vmatprep.subr.mxu0 0.0
  %1078 = vmatpush2.msra.mxu0 0.0
  %1079 = vmatprep.subr.mxu0 0.0
  %1080 = vmatpush2.msra.mxu0 0.0
  %1081 = vmatprep.subr.mxu0 0.0
  %1082 = vmatpush2.msra.mxu0 0.0
  %1083 = vmatprep.subr.mxu0 0.0
  %1084 = vmatpush2.msra.mxu0 0.0
  %1085 = vmatprep.subr.mxu0 0.0
  %1086 = vmatpush2.msra.mxu0 0.0
  %1087 = vmatprep.subr.mxu0 0.0
  %1088 = vmatpush2.msra.mxu0 0.0
  %1089 = vmatprep.subr.mxu0 0.0
  %1090 = vmatpush2.msra.mxu0 0.0
  %1091 = vmatprep.subr.mxu0 0.0
  %1092 = vmatpush2.msra.mxu0 0.0
  %1093 = vmatprep.subr.mxu0 0.0
  %1094 = vmatpush2.msra.mxu0 0.0
  %1095 = vmatprep.subr.mxu0 0.0
  %1096 = vmatpush2.msra.mxu0 0.0
  %1097 = vmatprep.subr.mxu0 0.0
  %1098 = vmatpush2.msra.mxu0 0.0
  %1099 = vmatprep.mubr.f32.mxu0 0.0
  %v1100 = vand.u32 %v110, 4294901760
  %v1101 = vsub.f32 %v110, %v1100
  %1102 = vmatmul.mubr.f32.gmra.mxu0 %v1101
  %v1103 = vpop.f32.mrf.mxu0
  %v1104 = vadd.f32 %v999, %v1103
  %v1105 = vpop.f32.mrf.mxu0
  %v1106 = vadd.f32 %v1001, %v1105
  %1107 = vdwg.mxu0
  %1108 = vmatprep.subr.mxu0 0.0
  %1109 = vmatpush1.msra.mxu0 0.0
  %1110 = vmatprep.subr.mxu0 0.0
  %1111 = vmatpush1.msra.mxu0 0.0
  %1112 = vmatprep.subr.mxu0 0.0
  %1113 = vmatpush1.msra.mxu0 0.0
  %1114 = vmatprep.subr.mxu0 0.0
  %1115 = vmatpush1.msra.mxu0 0.0
  %1116 = vmatprep.subr.mxu0 0.0
  %1117 = vmatpush1.msra.mxu0 0.0
  %1118 = vmatprep.subr.mxu0 0.0
  %1119 = vmatpush1.msra.mxu0 0.0
  %1120 = vmatprep.subr.mxu0 0.0
  %1121 = vmatpush1.msra.mxu0 0.0
  %1122 = vmatprep.subr.mxu0 0.0
  %1123 = vmatpush1.msra.mxu0 0.0
  %v1124 = vand.u32 %v67, 4294901760
  %1125 = vmatprep.subr.mxu0 %v1124
  %v1126 = vand.u32 %v66, 4294901760
  %1127 = vmatpush1.msra.mxu0 %v1126
  %v1128 = vand.u32 %v60, 4294901760
  %1129 = vmatprep.subr.mxu0 %v1128
  %v1130 = vand.u32 %v59, 4294901760
  %1131 = vmatpush1.msra.mxu0 %v1130
  %v1132 = vand.u32 %v53, 4294901760
  %1133 = vmatprep.subr.mxu0 %v1132
  %v1134 = vand.u32 %v52, 4294901760
  %1135 = vmatpush1.msra.mxu0 %v1134
  %v1136 = vand.u32 %v46, 4294901760
  %1137 = vmatprep.subr.mxu0 %v1136
  %v1138 = vand.u32 %v45, 4294901760
  %1139 = vmatpush1.msra.mxu0 %v1138
  %v1140 = vand.u32 %v39, 4294901760
  %1141 = vmatprep.subr.mxu0 %v1140
  %v1142 = vand.u32 %v38, 4294901760
  %1143 = vmatpush1.msra.mxu0 %v1142
  %v1144 = vand.u32 %v32, 4294901760
  %1145 = vmatprep.subr.mxu0 %v1144
  %v1146 = vand.u32 %v31, 4294901760
  %1147 = vmatpush1.msra.mxu0 %v1146
  %v1148 = vand.u32 %v25, 4294901760
  %1149 = vmatprep.subr.mxu0 %v1148
  %v1150 = vand.u32 %v24, 4294901760
  %1151 = vmatpush1.msra.mxu0 %v1150
  %v1152 = vand.u32 %v18, 4294901760
  %1153 = vmatprep.subr.mxu0 %v1152
  %v1154 = vand.u32 %v17, 4294901760
  %1155 = vmatpush1.msra.mxu0 %v1154
  %1156 = vmatprep.subr.mxu0 0.0
  %1157 = vmatpush2.msra.mxu0 0.0
  %1158 = vmatprep.subr.mxu0 0.0
  %1159 = vmatpush2.msra.mxu0 0.0
  %1160 = vmatprep.subr.mxu0 0.0
  %1161 = vmatpush2.msra.mxu0 0.0
  %1162 = vmatprep.subr.mxu0 0.0
  %1163 = vmatpush2.msra.mxu0 0.0
  %1164 = vmatprep.subr.mxu0 0.0
  %1165 = vmatpush2.msra.mxu0 0.0
  %1166 = vmatprep.subr.mxu0 0.0
  %1167 = vmatpush2.msra.mxu0 0.0
  %1168 = vmatprep.subr.mxu0 0.0
  %1169 = vmatpush2.msra.mxu0 0.0
  %1170 = vmatprep.subr.mxu0 0.0
  %1171 = vmatpush2.msra.mxu0 0.0
  %1172 = vmatprep.subr.mxu0 0.0
  %1173 = vmatpush2.msra.mxu0 0.0
  %1174 = vmatprep.subr.mxu0 0.0
  %1175 = vmatpush2.msra.mxu0 0.0
  %1176 = vmatprep.subr.mxu0 0.0
  %1177 = vmatpush2.msra.mxu0 0.0
  %1178 = vmatprep.subr.mxu0 0.0
  %1179 = vmatpush2.msra.mxu0 0.0
  %1180 = vmatprep.subr.mxu0 0.0
  %1181 = vmatpush2.msra.mxu0 0.0
  %1182 = vmatprep.subr.mxu0 0.0
  %1183 = vmatpush2.msra.mxu0 0.0
  %1184 = vmatprep.subr.mxu0 0.0
  %1185 = vmatpush2.msra.mxu0 0.0
  %1186 = vmatprep.subr.mxu0 0.0
  %1187 = vmatpush2.msra.mxu0 0.0
  %1188 = vmatprep.mubr.f32.mxu0 0.0
  %v1189 = vand.u32 %v110, 4294901760
  %v1190 = vsub.f32 %v110, %v1189
  %v1191 = vand.u32 %v1190, 4294901760
  %1192 = vmatmul.mubr.f32.gmra.mxu0 %v1191
  %v1193 = vpop.f32.mrf.mxu0
  %v1194 = vadd.f32 %v1104, %v1193
  %v1195 = vpop.f32.mrf.mxu0
  %v1196 = vadd.f32 %v1106, %v1195
  %1197 = vdwg.mxu0
  %1198 = vmatprep.subr.mxu0 0.0
  %1199 = vmatpush1.msra.mxu0 0.0
  %1200 = vmatprep.subr.mxu0 0.0
  %1201 = vmatpush1.msra.mxu0 0.0
  %1202 = vmatprep.subr.mxu0 0.0
  %1203 = vmatpush1.msra.mxu0 0.0
  %1204 = vmatprep.subr.mxu0 0.0
  %1205 = vmatpush1.msra.mxu0 0.0
  %1206 = vmatprep.subr.mxu0 0.0
  %1207 = vmatpush1.msra.mxu0 0.0
  %1208 = vmatprep.subr.mxu0 0.0
  %1209 = vmatpush1.msra.mxu0 0.0
  %1210 = vmatprep.subr.mxu0 0.0
  %1211 = vmatpush1.msra.mxu0 0.0
  %1212 = vmatprep.subr.mxu0 0.0
  %1213 = vmatpush1.msra.mxu0 0.0
  %v1214 = vand.u32 %v67, 4294901760
  %v1215 = vsub.f32 %v67, %v1214
  %v1216 = vand.u32 %v1215, 4294901760
  %1217 = vmatprep.subr.mxu0 %v1216
  %v1218 = vand.u32 %v66, 4294901760
  %v1219 = vsub.f32 %v66, %v1218
  %v1220 = vand.u32 %v1219, 4294901760
  %1221 = vmatpush1.msra.mxu0 %v1220
  %v1222 = vand.u32 %v60, 4294901760
  %v1223 = vsub.f32 %v60, %v1222
  %v1224 = vand.u32 %v1223, 4294901760
  %1225 = vmatprep.subr.mxu0 %v1224
  %v1226 = vand.u32 %v59, 4294901760
  %v1227 = vsub.f32 %v59, %v1226
  %v1228 = vand.u32 %v1227, 4294901760
  %1229 = vmatpush1.msra.mxu0 %v1228
  %v1230 = vand.u32 %v53, 4294901760
  %v1231 = vsub.f32 %v53, %v1230
  %v1232 = vand.u32 %v1231, 4294901760
  %1233 = vmatprep.subr.mxu0 %v1232
  %v1234 = vand.u32 %v52, 4294901760
  %v1235 = vsub.f32 %v52, %v1234
  %v1236 = vand.u32 %v1235, 4294901760
  %1237 = vmatpush1.msra.mxu0 %v1236
  %v1238 = vand.u32 %v46, 4294901760
  %v1239 = vsub.f32 %v46, %v1238
  %v1240 = vand.u32 %v1239, 4294901760
  %1241 = vmatprep.subr.mxu0 %v1240
  %v1242 = vand.u32 %v45, 4294901760
  %v1243 = vsub.f32 %v45, %v1242
  %v1244 = vand.u32 %v1243, 4294901760
  %1245 = vmatpush1.msra.mxu0 %v1244
  %v1246 = vand.u32 %v39, 4294901760
  %v1247 = vsub.f32 %v39, %v1246
  %v1248 = vand.u32 %v1247, 4294901760
  %1249 = vmatprep.subr.mxu0 %v1248
  %v1250 = vand.u32 %v38, 4294901760
  %v1251 = vsub.f32 %v38, %v1250
  %v1252 = vand.u32 %v1251, 4294901760
  %1253 = vmatpush1.msra.mxu0 %v1252
  %v1254 = vand.u32 %v32, 4294901760
  %v1255 = vsub.f32 %v32, %v1254
  %v1256 = vand.u32 %v1255, 4294901760
  %1257 = vmatprep.subr.mxu0 %v1256
  %v1258 = vand.u32 %v31, 4294901760
  %v1259 = vsub.f32 %v31, %v1258
  %v1260 = vand.u32 %v1259, 4294901760
  %1261 = vmatpush1.msra.mxu0 %v1260
  %v1262 = vand.u32 %v25, 4294901760
  %v1263 = vsub.f32 %v25, %v1262
  %v1264 = vand.u32 %v1263, 4294901760
  %1265 = vmatprep.subr.mxu0 %v1264
  %v1266 = vand.u32 %v24, 4294901760
  %v1267 = vsub.f32 %v24, %v1266
  %v1268 = vand.u32 %v1267, 4294901760
  %1269 = vmatpush1.msra.mxu0 %v1268
  %v1270 = vand.u32 %v18, 4294901760
  %v1271 = vsub.f32 %v18, %v1270
  %v1272 = vand.u32 %v1271, 4294901760
  %1273 = vmatprep.subr.mxu0 %v1272
  %v1274 = vand.u32 %v17, 4294901760
  %v1275 = vsub.f32 %v17, %v1274
  %v1276 = vand.u32 %v1275, 4294901760
  %1277 = vmatpush1.msra.mxu0 %v1276
  %1278 = vmatprep.subr.mxu0 0.0
  %1279 = vmatpush2.msra.mxu0 0.0
  %1280 = vmatprep.subr.mxu0 0.0
  %1281 = vmatpush2.msra.mxu0 0.0
  %1282 = vmatprep.subr.mxu0 0.0
  %1283 = vmatpush2.msra.mxu0 0.0
  %1284 = vmatprep.subr.mxu0 0.0
  %1285 = vmatpush2.msra.mxu0 0.0
  %1286 = vmatprep.subr.mxu0 0.0
  %1287 = vmatpush2.msra.mxu0 0.0
  %1288 = vmatprep.subr.mxu0 0.0
  %1289 = vmatpush2.msra.mxu0 0.0
  %1290 = vmatprep.subr.mxu0 0.0
  %1291 = vmatpush2.msra.mxu0 0.0
  %1292 = vmatprep.subr.mxu0 0.0
  %1293 = vmatpush2.msra.mxu0 0.0
  %1294 = vmatprep.subr.mxu0 0.0
  %1295 = vmatpush2.msra.mxu0 0.0
  %1296 = vmatprep.subr.mxu0 0.0
  %1297 = vmatpush2.msra.mxu0 0.0
  %1298 = vmatprep.subr.mxu0 0.0
  %1299 = vmatpush2.msra.mxu0 0.0
  %1300 = vmatprep.subr.mxu0 0.0
  %1301 = vmatpush2.msra.mxu0 0.0
  %1302 = vmatprep.subr.mxu0 0.0
  %1303 = vmatpush2.msra.mxu0 0.0
  %1304 = vmatprep.subr.mxu0 0.0
  %1305 = vmatpush2.msra.mxu0 0.0
  %1306 = vmatprep.subr.mxu0 0.0
  %1307 = vmatpush2.msra.mxu0 0.0
  %1308 = vmatprep.subr.mxu0 0.0
  %1309 = vmatpush2.msra.mxu0 0.0
  %1310 = vmatprep.mubr.f32.mxu0 0.0
  %v1311 = vand.u32 %v110, 4294901760
  %1312 = vmatmul.mubr.f32.gmra.mxu0 %v1311
  %v1313 = vpop.f32.mrf.mxu0
  %v1314 = vadd.f32 %v1194, %v1313
  %v1315 = vpop.f32.mrf.mxu0
  %v1316 = vadd.f32 %v1196, %v1315
  %1317 = vdwg.mxu0
  %1318 = vmatprep.subr.mxu0 0.0
  %1319 = vmatpush1.msra.mxu0 0.0
  %1320 = vmatprep.subr.mxu0 0.0
  %1321 = vmatpush1.msra.mxu0 0.0
  %1322 = vmatprep.subr.mxu0 0.0
  %1323 = vmatpush1.msra.mxu0 0.0
  %1324 = vmatprep.subr.mxu0 0.0
  %1325 = vmatpush1.msra.mxu0 0.0
  %1326 = vmatprep.subr.mxu0 0.0
  %1327 = vmatpush1.msra.mxu0 0.0
  %1328 = vmatprep.subr.mxu0 0.0
  %1329 = vmatpush1.msra.mxu0 0.0
  %1330 = vmatprep.subr.mxu0 0.0
  %1331 = vmatpush1.msra.mxu0 0.0
  %1332 = vmatprep.subr.mxu0 0.0
  %1333 = vmatpush1.msra.mxu0 0.0
  %v1334 = vand.u32 %v67, 4294901760
  %1335 = vmatprep.subr.mxu0 %v1334
  %v1336 = vand.u32 %v66, 4294901760
  %1337 = vmatpush1.msra.mxu0 %v1336
  %v1338 = vand.u32 %v60, 4294901760
  %1339 = vmatprep.subr.mxu0 %v1338
  %v1340 = vand.u32 %v59, 4294901760
  %1341 = vmatpush1.msra.mxu0 %v1340
  %v1342 = vand.u32 %v53, 4294901760
  %1343 = vmatprep.subr.mxu0 %v1342
  %v1344 = vand.u32 %v52, 4294901760
  %1345 = vmatpush1.msra.mxu0 %v1344
  %v1346 = vand.u32 %v46, 4294901760
  %1347 = vmatprep.subr.mxu0 %v1346
  %v1348 = vand.u32 %v45, 4294901760
  %1349 = vmatpush1.msra.mxu0 %v1348
  %v1350 = vand.u32 %v39, 4294901760
  %1351 = vmatprep.subr.mxu0 %v1350
  %v1352 = vand.u32 %v38, 4294901760
  %1353 = vmatpush1.msra.mxu0 %v1352
  %v1354 = vand.u32 %v32, 4294901760
  %1355 = vmatprep.subr.mxu0 %v1354
  %v1356 = vand.u32 %v31, 4294901760
  %1357 = vmatpush1.msra.mxu0 %v1356
  %v1358 = vand.u32 %v25, 4294901760
  %1359 = vmatprep.subr.mxu0 %v1358
  %v1360 = vand.u32 %v24, 4294901760
  %1361 = vmatpush1.msra.mxu0 %v1360
  %v1362 = vand.u32 %v18, 4294901760
  %1363 = vmatprep.subr.mxu0 %v1362
  %v1364 = vand.u32 %v17, 4294901760
  %1365 = vmatpush1.msra.mxu0 %v1364
  %1366 = vmatprep.subr.mxu0 0.0
  %1367 = vmatpush2.msra.mxu0 0.0
  %1368 = vmatprep.subr.mxu0 0.0
  %1369 = vmatpush2.msra.mxu0 0.0
  %1370 = vmatprep.subr.mxu0 0.0
  %1371 = vmatpush2.msra.mxu0 0.0
  %1372 = vmatprep.subr.mxu0 0.0
  %1373 = vmatpush2.msra.mxu0 0.0
  %1374 = vmatprep.subr.mxu0 0.0
  %1375 = vmatpush2.msra.mxu0 0.0
  %1376 = vmatprep.subr.mxu0 0.0
  %1377 = vmatpush2.msra.mxu0 0.0
  %1378 = vmatprep.subr.mxu0 0.0
  %1379 = vmatpush2.msra.mxu0 0.0
  %1380 = vmatprep.subr.mxu0 0.0
  %1381 = vmatpush2.msra.mxu0 0.0
  %1382 = vmatprep.subr.mxu0 0.0
  %1383 = vmatpush2.msra.mxu0 0.0
  %1384 = vmatprep.subr.mxu0 0.0
  %1385 = vmatpush2.msra.mxu0 0.0
  %1386 = vmatprep.subr.mxu0 0.0
  %1387 = vmatpush2.msra.mxu0 0.0
  %1388 = vmatprep.subr.mxu0 0.0
  %1389 = vmatpush2.msra.mxu0 0.0
  %1390 = vmatprep.subr.mxu0 0.0
  %1391 = vmatpush2.msra.mxu0 0.0
  %1392 = vmatprep.subr.mxu0 0.0
  %1393 = vmatpush2.msra.mxu0 0.0
  %1394 = vmatprep.subr.mxu0 0.0
  %1395 = vmatpush2.msra.mxu0 0.0
  %1396 = vmatprep.subr.mxu0 0.0
  %1397 = vmatpush2.msra.mxu0 0.0
  %1398 = vmatprep.mubr.f32.mxu0 0.0
  %v1399 = vand.u32 %v110, 4294901760
  %1400 = vmatmul.mubr.f32.gmra.mxu0 %v1399
  %v1401 = vpop.f32.mrf.mxu0
  %v1402 = vadd.f32 %v1314, %v1401
  %v1403 = vpop.f32.mrf.mxu0
  %v1404 = vadd.f32 %v1316, %v1403
  %1405 = vdwg.mxu0
  %1406 = vmatprep.subr.mxu0 0.0
  %1407 = vmatpush1.msra.mxu0 0.0
  %1408 = vmatprep.subr.mxu0 0.0
  %1409 = vmatpush1.msra.mxu0 0.0
  %1410 = vmatprep.subr.mxu0 0.0
  %1411 = vmatpush1.msra.mxu0 0.0
  %1412 = vmatprep.subr.mxu0 0.0
  %1413 = vmatpush1.msra.mxu0 0.0
  %1414 = vmatprep.subr.mxu0 0.0
  %1415 = vmatpush1.msra.mxu0 0.0
  %1416 = vmatprep.subr.mxu0 0.0
  %1417 = vmatpush1.msra.mxu0 0.0
  %1418 = vmatprep.subr.mxu0 0.0
  %1419 = vmatpush1.msra.mxu0 0.0
  %1420 = vmatprep.subr.mxu0 0.0
  %1421 = vmatpush1.msra.mxu0 0.0
  %v1422 = vand.u32 %v69, 4294901760
  %1423 = vmatprep.subr.mxu0 %v1422
  %v1424 = vand.u32 %v68, 4294901760
  %1425 = vmatpush1.msra.mxu0 %v1424
  %v1426 = vand.u32 %v62, 4294901760
  %1427 = vmatprep.subr.mxu0 %v1426
  %v1428 = vand.u32 %v61, 4294901760
  %1429 = vmatpush1.msra.mxu0 %v1428
  %v1430 = vand.u32 %v55, 4294901760
  %1431 = vmatprep.subr.mxu0 %v1430
  %v1432 = vand.u32 %v54, 4294901760
  %1433 = vmatpush1.msra.mxu0 %v1432
  %v1434 = vand.u32 %v48, 4294901760
  %1435 = vmatprep.subr.mxu0 %v1434
  %v1436 = vand.u32 %v47, 4294901760
  %1437 = vmatpush1.msra.mxu0 %v1436
  %v1438 = vand.u32 %v41, 4294901760
  %1439 = vmatprep.subr.mxu0 %v1438
  %v1440 = vand.u32 %v40, 4294901760
  %1441 = vmatpush1.msra.mxu0 %v1440
  %v1442 = vand.u32 %v34, 4294901760
  %1443 = vmatprep.subr.mxu0 %v1442
  %v1444 = vand.u32 %v33, 4294901760
  %1445 = vmatpush1.msra.mxu0 %v1444
  %v1446 = vand.u32 %v27, 4294901760
  %1447 = vmatprep.subr.mxu0 %v1446
  %v1448 = vand.u32 %v26, 4294901760
  %1449 = vmatpush1.msra.mxu0 %v1448
  %v1450 = vand.u32 %v20, 4294901760
  %1451 = vmatprep.subr.mxu0 %v1450
  %v1452 = vand.u32 %v19, 4294901760
  %1453 = vmatpush1.msra.mxu0 %v1452
  %1454 = vmatprep.subr.mxu0 0.0
  %1455 = vmatpush2.msra.mxu0 0.0
  %1456 = vmatprep.subr.mxu0 0.0
  %1457 = vmatpush2.msra.mxu0 0.0
  %1458 = vmatprep.subr.mxu0 0.0
  %1459 = vmatpush2.msra.mxu0 0.0
  %1460 = vmatprep.subr.mxu0 0.0
  %1461 = vmatpush2.msra.mxu0 0.0
  %1462 = vmatprep.subr.mxu0 0.0
  %1463 = vmatpush2.msra.mxu0 0.0
  %1464 = vmatprep.subr.mxu0 0.0
  %1465 = vmatpush2.msra.mxu0 0.0
  %1466 = vmatprep.subr.mxu0 0.0
  %1467 = vmatpush2.msra.mxu0 0.0
  %1468 = vmatprep.subr.mxu0 0.0
  %1469 = vmatpush2.msra.mxu0 0.0
  %1470 = vmatprep.subr.mxu0 0.0
  %1471 = vmatpush2.msra.mxu0 0.0
  %1472 = vmatprep.subr.mxu0 0.0
  %1473 = vmatpush2.msra.mxu0 0.0
  %1474 = vmatprep.subr.mxu0 0.0
  %1475 = vmatpush2.msra.mxu0 0.0
  %1476 = vmatprep.subr.mxu0 0.0
  %1477 = vmatpush2.msra.mxu0 0.0
  %1478 = vmatprep.subr.mxu0 0.0
  %1479 = vmatpush2.msra.mxu0 0.0
  %1480 = vmatprep.subr.mxu0 0.0
  %1481 = vmatpush2.msra.mxu0 0.0
  %1482 = vmatprep.subr.mxu0 0.0
  %1483 = vmatpush2.msra.mxu0 0.0
  %1484 = vmatprep.subr.mxu0 0.0
  %1485 = vmatpush2.msra.mxu0 0.0
  %1486 = vmatprep.mubr.f32.mxu0 0.0
  %v1487 = vand.u32 %v110, 4294901760
  %v1488 = vsub.f32 %v110, %v1487
  %v1489 = vand.u32 %v1488, 4294901760
  %v1490 = vsub.f32 %v1488, %v1489
  %v1491 = vand.u32 %v1490, 4294901760
  %1492 = vmatmul.mubr.f32.gmra.mxu0 %v1491
  %v1493 = vpop.f32.mrf.mxu0
  %v1494 = vadd.f32 %v92, %v1493
  %v1495 = vpop.f32.mrf.mxu0
  %v1496 = vadd.f32 %v96, %v1495
  %1497 = vdwg.mxu0
  %1498 = vmatprep.subr.mxu0 0.0
  %1499 = vmatpush1.msra.mxu0 0.0
  %1500 = vmatprep.subr.mxu0 0.0
  %1501 = vmatpush1.msra.mxu0 0.0
  %1502 = vmatprep.subr.mxu0 0.0
  %1503 = vmatpush1.msra.mxu0 0.0
  %1504 = vmatprep.subr.mxu0 0.0
  %1505 = vmatpush1.msra.mxu0 0.0
  %1506 = vmatprep.subr.mxu0 0.0
  %1507 = vmatpush1.msra.mxu0 0.0
  %1508 = vmatprep.subr.mxu0 0.0
  %1509 = vmatpush1.msra.mxu0 0.0
  %1510 = vmatprep.subr.mxu0 0.0
  %1511 = vmatpush1.msra.mxu0 0.0
  %1512 = vmatprep.subr.mxu0 0.0
  %1513 = vmatpush1.msra.mxu0 0.0
  %v1514 = vand.u32 %v69, 4294901760
  %v1515 = vsub.f32 %v69, %v1514
  %v1516 = vand.u32 %v1515, 4294901760
  %v1517 = vsub.f32 %v1515, %v1516
  %v1518 = vand.u32 %v1517, 4294901760
  %1519 = vmatprep.subr.mxu0 %v1518
  %v1520 = vand.u32 %v68, 4294901760
  %v1521 = vsub.f32 %v68, %v1520
  %v1522 = vand.u32 %v1521, 4294901760
  %v1523 = vsub.f32 %v1521, %v1522
  %v1524 = vand.u32 %v1523, 4294901760
  %1525 = vmatpush1.msra.mxu0 %v1524
  %v1526 = vand.u32 %v62, 4294901760
  %v1527 = vsub.f32 %v62, %v1526
  %v1528 = vand.u32 %v1527, 4294901760
  %v1529 = vsub.f32 %v1527, %v1528
  %v1530 = vand.u32 %v1529, 4294901760
  %1531 = vmatprep.subr.mxu0 %v1530
  %v1532 = vand.u32 %v61, 4294901760
  %v1533 = vsub.f32 %v61, %v1532
  %v1534 = vand.u32 %v1533, 4294901760
  %v1535 = vsub.f32 %v1533, %v1534
  %v1536 = vand.u32 %v1535, 4294901760
  %1537 = vmatpush1.msra.mxu0 %v1536
  %v1538 = vand.u32 %v55, 4294901760
  %v1539 = vsub.f32 %v55, %v1538
  %v1540 = vand.u32 %v1539, 4294901760
  %v1541 = vsub.f32 %v1539, %v1540
  %v1542 = vand.u32 %v1541, 4294901760
  %1543 = vmatprep.subr.mxu0 %v1542
  %v1544 = vand.u32 %v54, 4294901760
  %v1545 = vsub.f32 %v54, %v1544
  %v1546 = vand.u32 %v1545, 4294901760
  %v1547 = vsub.f32 %v1545, %v1546
  %v1548 = vand.u32 %v1547, 4294901760
  %1549 = vmatpush1.msra.mxu0 %v1548
  %v1550 = vand.u32 %v48, 4294901760
  %v1551 = vsub.f32 %v48, %v1550
  %v1552 = vand.u32 %v1551, 4294901760
  %v1553 = vsub.f32 %v1551, %v1552
  %v1554 = vand.u32 %v1553, 4294901760
  %1555 = vmatprep.subr.mxu0 %v1554
  %v1556 = vand.u32 %v47, 4294901760
  %v1557 = vsub.f32 %v47, %v1556
  %v1558 = vand.u32 %v1557, 4294901760
  %v1559 = vsub.f32 %v1557, %v1558
  %v1560 = vand.u32 %v1559, 4294901760
  %1561 = vmatpush1.msra.mxu0 %v1560
  %v1562 = vand.u32 %v41, 4294901760
  %v1563 = vsub.f32 %v41, %v1562
  %v1564 = vand.u32 %v1563, 4294901760
  %v1565 = vsub.f32 %v1563, %v1564
  %v1566 = vand.u32 %v1565, 4294901760
  %1567 = vmatprep.subr.mxu0 %v1566
  %v1568 = vand.u32 %v40, 4294901760
  %v1569 = vsub.f32 %v40, %v1568
  %v1570 = vand.u32 %v1569, 4294901760
  %v1571 = vsub.f32 %v1569, %v1570
  %v1572 = vand.u32 %v1571, 4294901760
  %1573 = vmatpush1.msra.mxu0 %v1572
  %v1574 = vand.u32 %v34, 4294901760
  %v1575 = vsub.f32 %v34, %v1574
  %v1576 = vand.u32 %v1575, 4294901760
  %v1577 = vsub.f32 %v1575, %v1576
  %v1578 = vand.u32 %v1577, 4294901760
  %1579 = vmatprep.subr.mxu0 %v1578
  %v1580 = vand.u32 %v33, 4294901760
  %v1581 = vsub.f32 %v33, %v1580
  %v1582 = vand.u32 %v1581, 4294901760
  %v1583 = vsub.f32 %v1581, %v1582
  %v1584 = vand.u32 %v1583, 4294901760
  %1585 = vmatpush1.msra.mxu0 %v1584
  %v1586 = vand.u32 %v27, 4294901760
  %v1587 = vsub.f32 %v27, %v1586
  %v1588 = vand.u32 %v1587, 4294901760
  %v1589 = vsub.f32 %v1587, %v1588
  %v1590 = vand.u32 %v1589, 4294901760
  %1591 = vmatprep.subr.mxu0 %v1590
  %v1592 = vand.u32 %v26, 4294901760
  %v1593 = vsub.f32 %v26, %v1592
  %v1594 = vand.u32 %v1593, 4294901760
  %v1595 = vsub.f32 %v1593, %v1594
  %v1596 = vand.u32 %v1595, 4294901760
  %1597 = vmatpush1.msra.mxu0 %v1596
  %v1598 = vand.u32 %v20, 4294901760
  %v1599 = vsub.f32 %v20, %v1598
  %v1600 = vand.u32 %v1599, 4294901760
  %v1601 = vsub.f32 %v1599, %v1600
  %v1602 = vand.u32 %v1601, 4294901760
  %1603 = vmatprep.subr.mxu0 %v1602
  %v1604 = vand.u32 %v19, 4294901760
  %v1605 = vsub.f32 %v19, %v1604
  %v1606 = vand.u32 %v1605, 4294901760
  %v1607 = vsub.f32 %v1605, %v1606
  %v1608 = vand.u32 %v1607, 4294901760
  %1609 = vmatpush1.msra.mxu0 %v1608
  %1610 = vmatprep.subr.mxu0 0.0
  %1611 = vmatpush2.msra.mxu0 0.0
  %1612 = vmatprep.subr.mxu0 0.0
  %1613 = vmatpush2.msra.mxu0 0.0
  %1614 = vmatprep.subr.mxu0 0.0
  %1615 = vmatpush2.msra.mxu0 0.0
  %1616 = vmatprep.subr.mxu0 0.0
  %1617 = vmatpush2.msra.mxu0 0.0
  %1618 = vmatprep.subr.mxu0 0.0
  %1619 = vmatpush2.msra.mxu0 0.0
  %1620 = vmatprep.subr.mxu0 0.0
  %1621 = vmatpush2.msra.mxu0 0.0
  %1622 = vmatprep.subr.mxu0 0.0
  %1623 = vmatpush2.msra.mxu0 0.0
  %1624 = vmatprep.subr.mxu0 0.0
  %1625 = vmatpush2.msra.mxu0 0.0
  %1626 = vmatprep.subr.mxu0 0.0
  %1627 = vmatpush2.msra.mxu0 0.0
  %1628 = vmatprep.subr.mxu0 0.0
  %1629 = vmatpush2.msra.mxu0 0.0
  %1630 = vmatprep.subr.mxu0 0.0
  %1631 = vmatpush2.msra.mxu0 0.0
  %1632 = vmatprep.subr.mxu0 0.0
  %1633 = vmatpush2.msra.mxu0 0.0
  %1634 = vmatprep.subr.mxu0 0.0
  %1635 = vmatpush2.msra.mxu0 0.0
  %1636 = vmatprep.subr.mxu0 0.0
  %1637 = vmatpush2.msra.mxu0 0.0
  %1638 = vmatprep.subr.mxu0 0.0
  %1639 = vmatpush2.msra.mxu0 0.0
  %1640 = vmatprep.subr.mxu0 0.0
  %1641 = vmatpush2.msra.mxu0 0.0
  %1642 = vmatprep.mubr.f32.mxu0 0.0
  %v1643 = vand.u32 %v110, 4294901760
  %1644 = vmatmul.mubr.f32.gmra.mxu0 %v1643
  %v1645 = vpop.f32.mrf.mxu0
  %v1646 = vadd.f32 %v1494, %v1645
  %v1647 = vpop.f32.mrf.mxu0
  %v1648 = vadd.f32 %v1496, %v1647
  %1649 = vdwg.mxu0
  %1650 = vmatprep.subr.mxu0 0.0
  %1651 = vmatpush1.msra.mxu0 0.0
  %1652 = vmatprep.subr.mxu0 0.0
  %1653 = vmatpush1.msra.mxu0 0.0
  %1654 = vmatprep.subr.mxu0 0.0
  %1655 = vmatpush1.msra.mxu0 0.0
  %1656 = vmatprep.subr.mxu0 0.0
  %1657 = vmatpush1.msra.mxu0 0.0
  %1658 = vmatprep.subr.mxu0 0.0
  %1659 = vmatpush1.msra.mxu0 0.0
  %1660 = vmatprep.subr.mxu0 0.0
  %1661 = vmatpush1.msra.mxu0 0.0
  %1662 = vmatprep.subr.mxu0 0.0
  %1663 = vmatpush1.msra.mxu0 0.0
  %1664 = vmatprep.subr.mxu0 0.0
  %1665 = vmatpush1.msra.mxu0 0.0
  %v1666 = vand.u32 %v69, 4294901760
  %v1667 = vsub.f32 %v69, %v1666
  %1668 = vmatprep.subr.mxu0 %v1667
  %v1669 = vand.u32 %v68, 4294901760
  %v1670 = vsub.f32 %v68, %v1669
  %1671 = vmatpush1.msra.mxu0 %v1670
  %v1672 = vand.u32 %v62, 4294901760
  %v1673 = vsub.f32 %v62, %v1672
  %1674 = vmatprep.subr.mxu0 %v1673
  %v1675 = vand.u32 %v61, 4294901760
  %v1676 = vsub.f32 %v61, %v1675
  %1677 = vmatpush1.msra.mxu0 %v1676
  %v1678 = vand.u32 %v55, 4294901760
  %v1679 = vsub.f32 %v55, %v1678
  %1680 = vmatprep.subr.mxu0 %v1679
  %v1681 = vand.u32 %v54, 4294901760
  %v1682 = vsub.f32 %v54, %v1681
  %1683 = vmatpush1.msra.mxu0 %v1682
  %v1684 = vand.u32 %v48, 4294901760
  %v1685 = vsub.f32 %v48, %v1684
  %1686 = vmatprep.subr.mxu0 %v1685
  %v1687 = vand.u32 %v47, 4294901760
  %v1688 = vsub.f32 %v47, %v1687
  %1689 = vmatpush1.msra.mxu0 %v1688
  %v1690 = vand.u32 %v41, 4294901760
  %v1691 = vsub.f32 %v41, %v1690
  %1692 = vmatprep.subr.mxu0 %v1691
  %v1693 = vand.u32 %v40, 4294901760
  %v1694 = vsub.f32 %v40, %v1693
  %1695 = vmatpush1.msra.mxu0 %v1694
  %v1696 = vand.u32 %v34, 4294901760
  %v1697 = vsub.f32 %v34, %v1696
  %1698 = vmatprep.subr.mxu0 %v1697
  %v1699 = vand.u32 %v33, 4294901760
  %v1700 = vsub.f32 %v33, %v1699
  %1701 = vmatpush1.msra.mxu0 %v1700
  %v1702 = vand.u32 %v27, 4294901760
  %v1703 = vsub.f32 %v27, %v1702
  %1704 = vmatprep.subr.mxu0 %v1703
  %v1705 = vand.u32 %v26, 4294901760
  %v1706 = vsub.f32 %v26, %v1705
  %1707 = vmatpush1.msra.mxu0 %v1706
  %v1708 = vand.u32 %v20, 4294901760
  %v1709 = vsub.f32 %v20, %v1708
  %1710 = vmatprep.subr.mxu0 %v1709
  %v1711 = vand.u32 %v19, 4294901760
  %v1712 = vsub.f32 %v19, %v1711
  %1713 = vmatpush1.msra.mxu0 %v1712
  %1714 = vmatprep.subr.mxu0 0.0
  %1715 = vmatpush2.msra.mxu0 0.0
  %1716 = vmatprep.subr.mxu0 0.0
  %1717 = vmatpush2.msra.mxu0 0.0
  %1718 = vmatprep.subr.mxu0 0.0
  %1719 = vmatpush2.msra.mxu0 0.0
  %1720 = vmatprep.subr.mxu0 0.0
  %1721 = vmatpush2.msra.mxu0 0.0
  %1722 = vmatprep.subr.mxu0 0.0
  %1723 = vmatpush2.msra.mxu0 0.0
  %1724 = vmatprep.subr.mxu0 0.0
  %1725 = vmatpush2.msra.mxu0 0.0
  %1726 = vmatprep.subr.mxu0 0.0
  %1727 = vmatpush2.msra.mxu0 0.0
  %1728 = vmatprep.subr.mxu0 0.0
  %1729 = vmatpush2.msra.mxu0 0.0
  %1730 = vmatprep.subr.mxu0 0.0
  %1731 = vmatpush2.msra.mxu0 0.0
  %1732 = vmatprep.subr.mxu0 0.0
  %1733 = vmatpush2.msra.mxu0 0.0
  %1734 = vmatprep.subr.mxu0 0.0
  %1735 = vmatpush2.msra.mxu0 0.0
  %1736 = vmatprep.subr.mxu0 0.0
  %1737 = vmatpush2.msra.mxu0 0.0
  %1738 = vmatprep.subr.mxu0 0.0
  %1739 = vmatpush2.msra.mxu0 0.0
  %1740 = vmatprep.subr.mxu0 0.0
  %1741 = vmatpush2.msra.mxu0 0.0
  %1742 = vmatprep.subr.mxu0 0.0
  %1743 = vmatpush2.msra.mxu0 0.0
  %1744 = vmatprep.subr.mxu0 0.0
  %1745 = vmatpush2.msra.mxu0 0.0
  %1746 = vmatprep.mubr.f32.mxu0 0.0
  %v1747 = vand.u32 %v110, 4294901760
  %v1748 = vsub.f32 %v110, %v1747
  %1749 = vmatmul.mubr.f32.gmra.mxu0 %v1748
  %v1750 = vpop.f32.mrf.mxu0
  %v1751 = vadd.f32 %v1646, %v1750
  %v1752 = vpop.f32.mrf.mxu0
  %v1753 = vadd.f32 %v1648, %v1752
  %1754 = vdwg.mxu0
  %1755 = vmatprep.subr.mxu0 0.0
  %1756 = vmatpush1.msra.mxu0 0.0
  %1757 = vmatprep.subr.mxu0 0.0
  %1758 = vmatpush1.msra.mxu0 0.0
  %1759 = vmatprep.subr.mxu0 0.0
  %1760 = vmatpush1.msra.mxu0 0.0
  %1761 = vmatprep.subr.mxu0 0.0
  %1762 = vmatpush1.msra.mxu0 0.0
  %1763 = vmatprep.subr.mxu0 0.0
  %1764 = vmatpush1.msra.mxu0 0.0
  %1765 = vmatprep.subr.mxu0 0.0
  %1766 = vmatpush1.msra.mxu0 0.0
  %1767 = vmatprep.subr.mxu0 0.0
  %1768 = vmatpush1.msra.mxu0 0.0
  %1769 = vmatprep.subr.mxu0 0.0
  %1770 = vmatpush1.msra.mxu0 0.0
  %v1771 = vand.u32 %v69, 4294901760
  %1772 = vmatprep.subr.mxu0 %v1771
  %v1773 = vand.u32 %v68, 4294901760
  %1774 = vmatpush1.msra.mxu0 %v1773
  %v1775 = vand.u32 %v62, 4294901760
  %1776 = vmatprep.subr.mxu0 %v1775
  %v1777 = vand.u32 %v61, 4294901760
  %1778 = vmatpush1.msra.mxu0 %v1777
  %v1779 = vand.u32 %v55, 4294901760
  %1780 = vmatprep.subr.mxu0 %v1779
  %v1781 = vand.u32 %v54, 4294901760
  %1782 = vmatpush1.msra.mxu0 %v1781
  %v1783 = vand.u32 %v48, 4294901760
  %1784 = vmatprep.subr.mxu0 %v1783
  %v1785 = vand.u32 %v47, 4294901760
  %1786 = vmatpush1.msra.mxu0 %v1785
  %v1787 = vand.u32 %v41, 4294901760
  %1788 = vmatprep.subr.mxu0 %v1787
  %v1789 = vand.u32 %v40, 4294901760
  %1790 = vmatpush1.msra.mxu0 %v1789
  %v1791 = vand.u32 %v34, 4294901760
  %1792 = vmatprep.subr.mxu0 %v1791
  %v1793 = vand.u32 %v33, 4294901760
  %1794 = vmatpush1.msra.mxu0 %v1793
  %v1795 = vand.u32 %v27, 4294901760
  %1796 = vmatprep.subr.mxu0 %v1795
  %v1797 = vand.u32 %v26, 4294901760
  %1798 = vmatpush1.msra.mxu0 %v1797
  %v1799 = vand.u32 %v20, 4294901760
  %1800 = vmatprep.subr.mxu0 %v1799
  %v1801 = vand.u32 %v19, 4294901760
  %1802 = vmatpush1.msra.mxu0 %v1801
  %1803 = vmatprep.subr.mxu0 0.0
  %1804 = vmatpush2.msra.mxu0 0.0
  %1805 = vmatprep.subr.mxu0 0.0
  %1806 = vmatpush2.msra.mxu0 0.0
  %1807 = vmatprep.subr.mxu0 0.0
  %1808 = vmatpush2.msra.mxu0 0.0
  %1809 = vmatprep.subr.mxu0 0.0
  %1810 = vmatpush2.msra.mxu0 0.0
  %1811 = vmatprep.subr.mxu0 0.0
  %1812 = vmatpush2.msra.mxu0 0.0
  %1813 = vmatprep.subr.mxu0 0.0
  %1814 = vmatpush2.msra.mxu0 0.0
  %1815 = vmatprep.subr.mxu0 0.0
  %1816 = vmatpush2.msra.mxu0 0.0
  %1817 = vmatprep.subr.mxu0 0.0
  %1818 = vmatpush2.msra.mxu0 0.0
  %1819 = vmatprep.subr.mxu0 0.0
  %1820 = vmatpush2.msra.mxu0 0.0
  %1821 = vmatprep.subr.mxu0 0.0
  %1822 = vmatpush2.msra.mxu0 0.0
  %1823 = vmatprep.subr.mxu0 0.0
  %1824 = vmatpush2.msra.mxu0 0.0
  %1825 = vmatprep.subr.mxu0 0.0
  %1826 = vmatpush2.msra.mxu0 0.0
  %1827 = vmatprep.subr.mxu0 0.0
  %1828 = vmatpush2.msra.mxu0 0.0
  %1829 = vmatprep.subr.mxu0 0.0
  %1830 = vmatpush2.msra.mxu0 0.0
  %1831 = vmatprep.subr.mxu0 0.0
  %1832 = vmatpush2.msra.mxu0 0.0
  %1833 = vmatprep.subr.mxu0 0.0
  %1834 = vmatpush2.msra.mxu0 0.0
  %1835 = vmatprep.mubr.f32.mxu0 0.0
  %v1836 = vand.u32 %v110, 4294901760
  %v1837 = vsub.f32 %v110, %v1836
  %v1838 = vand.u32 %v1837, 4294901760
  %1839 = vmatmul.mubr.f32.gmra.mxu0 %v1838
  %v1840 = vpop.f32.mrf.mxu0
  %v1841 = vadd.f32 %v1751, %v1840
  %v1842 = vpop.f32.mrf.mxu0
  %v1843 = vadd.f32 %v1753, %v1842
  %1844 = vdwg.mxu0
  %1845 = vmatprep.subr.mxu0 0.0
  %1846 = vmatpush1.msra.mxu0 0.0
  %1847 = vmatprep.subr.mxu0 0.0
  %1848 = vmatpush1.msra.mxu0 0.0
  %1849 = vmatprep.subr.mxu0 0.0
  %1850 = vmatpush1.msra.mxu0 0.0
  %1851 = vmatprep.subr.mxu0 0.0
  %1852 = vmatpush1.msra.mxu0 0.0
  %1853 = vmatprep.subr.mxu0 0.0
  %1854 = vmatpush1.msra.mxu0 0.0
  %1855 = vmatprep.subr.mxu0 0.0
  %1856 = vmatpush1.msra.mxu0 0.0
  %1857 = vmatprep.subr.mxu0 0.0
  %1858 = vmatpush1.msra.mxu0 0.0
  %1859 = vmatprep.subr.mxu0 0.0
  %1860 = vmatpush1.msra.mxu0 0.0
  %v1861 = vand.u32 %v69, 4294901760
  %v1862 = vsub.f32 %v69, %v1861
  %v1863 = vand.u32 %v1862, 4294901760
  %1864 = vmatprep.subr.mxu0 %v1863
  %v1865 = vand.u32 %v68, 4294901760
  %v1866 = vsub.f32 %v68, %v1865
  %v1867 = vand.u32 %v1866, 4294901760
  %1868 = vmatpush1.msra.mxu0 %v1867
  %v1869 = vand.u32 %v62, 4294901760
  %v1870 = vsub.f32 %v62, %v1869
  %v1871 = vand.u32 %v1870, 4294901760
  %1872 = vmatprep.subr.mxu0 %v1871
  %v1873 = vand.u32 %v61, 4294901760
  %v1874 = vsub.f32 %v61, %v1873
  %v1875 = vand.u32 %v1874, 4294901760
  %1876 = vmatpush1.msra.mxu0 %v1875
  %v1877 = vand.u32 %v55, 4294901760
  %v1878 = vsub.f32 %v55, %v1877
  %v1879 = vand.u32 %v1878, 4294901760
  %1880 = vmatprep.subr.mxu0 %v1879
  %v1881 = vand.u32 %v54, 4294901760
  %v1882 = vsub.f32 %v54, %v1881
  %v1883 = vand.u32 %v1882, 4294901760
  %1884 = vmatpush1.msra.mxu0 %v1883
  %v1885 = vand.u32 %v48, 4294901760
  %v1886 = vsub.f32 %v48, %v1885
  %v1887 = vand.u32 %v1886, 4294901760
  %1888 = vmatprep.subr.mxu0 %v1887
  %v1889 = vand.u32 %v47, 4294901760
  %v1890 = vsub.f32 %v47, %v1889
  %v1891 = vand.u32 %v1890, 4294901760
  %1892 = vmatpush1.msra.mxu0 %v1891
  %v1893 = vand.u32 %v41, 4294901760
  %v1894 = vsub.f32 %v41, %v1893
  %v1895 = vand.u32 %v1894, 4294901760
  %1896 = vmatprep.subr.mxu0 %v1895
  %v1897 = vand.u32 %v40, 4294901760
  %v1898 = vsub.f32 %v40, %v1897
  %v1899 = vand.u32 %v1898, 4294901760
  %1900 = vmatpush1.msra.mxu0 %v1899
  %v1901 = vand.u32 %v34, 4294901760
  %v1902 = vsub.f32 %v34, %v1901
  %v1903 = vand.u32 %v1902, 4294901760
  %1904 = vmatprep.subr.mxu0 %v1903
  %v1905 = vand.u32 %v33, 4294901760
  %v1906 = vsub.f32 %v33, %v1905
  %v1907 = vand.u32 %v1906, 4294901760
  %1908 = vmatpush1.msra.mxu0 %v1907
  %v1909 = vand.u32 %v27, 4294901760
  %v1910 = vsub.f32 %v27, %v1909
  %v1911 = vand.u32 %v1910, 4294901760
  %1912 = vmatprep.subr.mxu0 %v1911
  %v1913 = vand.u32 %v26, 4294901760
  %v1914 = vsub.f32 %v26, %v1913
  %v1915 = vand.u32 %v1914, 4294901760
  %1916 = vmatpush1.msra.mxu0 %v1915
  %v1917 = vand.u32 %v20, 4294901760
  %v1918 = vsub.f32 %v20, %v1917
  %v1919 = vand.u32 %v1918, 4294901760
  %1920 = vmatprep.subr.mxu0 %v1919
  %v1921 = vand.u32 %v19, 4294901760
  %v1922 = vsub.f32 %v19, %v1921
  %v1923 = vand.u32 %v1922, 4294901760
  %1924 = vmatpush1.msra.mxu0 %v1923
  %1925 = vmatprep.subr.mxu0 0.0
  %1926 = vmatpush2.msra.mxu0 0.0
  %1927 = vmatprep.subr.mxu0 0.0
  %1928 = vmatpush2.msra.mxu0 0.0
  %1929 = vmatprep.subr.mxu0 0.0
  %1930 = vmatpush2.msra.mxu0 0.0
  %1931 = vmatprep.subr.mxu0 0.0
  %1932 = vmatpush2.msra.mxu0 0.0
  %1933 = vmatprep.subr.mxu0 0.0
  %1934 = vmatpush2.msra.mxu0 0.0
  %1935 = vmatprep.subr.mxu0 0.0
  %1936 = vmatpush2.msra.mxu0 0.0
  %1937 = vmatprep.subr.mxu0 0.0
  %1938 = vmatpush2.msra.mxu0 0.0
  %1939 = vmatprep.subr.mxu0 0.0
  %1940 = vmatpush2.msra.mxu0 0.0
  %1941 = vmatprep.subr.mxu0 0.0
  %1942 = vmatpush2.msra.mxu0 0.0
  %1943 = vmatprep.subr.mxu0 0.0
  %1944 = vmatpush2.msra.mxu0 0.0
  %1945 = vmatprep.subr.mxu0 0.0
  %1946 = vmatpush2.msra.mxu0 0.0
  %1947 = vmatprep.subr.mxu0 0.0
  %1948 = vmatpush2.msra.mxu0 0.0
  %1949 = vmatprep.subr.mxu0 0.0
  %1950 = vmatpush2.msra.mxu0 0.0
  %1951 = vmatprep.subr.mxu0 0.0
  %1952 = vmatpush2.msra.mxu0 0.0
  %1953 = vmatprep.subr.mxu0 0.0
  %1954 = vmatpush2.msra.mxu0 0.0
  %1955 = vmatprep.subr.mxu0 0.0
  %1956 = vmatpush2.msra.mxu0 0.0
  %1957 = vmatprep.mubr.f32.mxu0 0.0
  %v1958 = vand.u32 %v110, 4294901760
  %1959 = vmatmul.mubr.f32.gmra.mxu0 %v1958
  %v1960 = vpop.f32.mrf.mxu0
  %v1961 = vadd.f32 %v1841, %v1960
  %v1962 = vpop.f32.mrf.mxu0
  %v1963 = vadd.f32 %v1843, %v1962
  %1964 = vdwg.mxu0
  %1965 = vmatprep.subr.mxu0 0.0
  %1966 = vmatpush1.msra.mxu0 0.0
  %1967 = vmatprep.subr.mxu0 0.0
  %1968 = vmatpush1.msra.mxu0 0.0
  %1969 = vmatprep.subr.mxu0 0.0
  %1970 = vmatpush1.msra.mxu0 0.0
  %1971 = vmatprep.subr.mxu0 0.0
  %1972 = vmatpush1.msra.mxu0 0.0
  %1973 = vmatprep.subr.mxu0 0.0
  %1974 = vmatpush1.msra.mxu0 0.0
  %1975 = vmatprep.subr.mxu0 0.0
  %1976 = vmatpush1.msra.mxu0 0.0
  %1977 = vmatprep.subr.mxu0 0.0
  %1978 = vmatpush1.msra.mxu0 0.0
  %1979 = vmatprep.subr.mxu0 0.0
  %1980 = vmatpush1.msra.mxu0 0.0
  %v1981 = vand.u32 %v69, 4294901760
  %1982 = vmatprep.subr.mxu0 %v1981
  %v1983 = vand.u32 %v68, 4294901760
  %1984 = vmatpush1.msra.mxu0 %v1983
  %v1985 = vand.u32 %v62, 4294901760
  %1986 = vmatprep.subr.mxu0 %v1985
  %v1987 = vand.u32 %v61, 4294901760
  %1988 = vmatpush1.msra.mxu0 %v1987
  %v1989 = vand.u32 %v55, 4294901760
  %1990 = vmatprep.subr.mxu0 %v1989
  %v1991 = vand.u32 %v54, 4294901760
  %1992 = vmatpush1.msra.mxu0 %v1991
  %v1993 = vand.u32 %v48, 4294901760
  %1994 = vmatprep.subr.mxu0 %v1993
  %v1995 = vand.u32 %v47, 4294901760
  %1996 = vmatpush1.msra.mxu0 %v1995
  %v1997 = vand.u32 %v41, 4294901760
  %1998 = vmatprep.subr.mxu0 %v1997
  %v1999 = vand.u32 %v40, 4294901760
  %2000 = vmatpush1.msra.mxu0 %v1999
  %v2001 = vand.u32 %v34, 4294901760
  %2002 = vmatprep.subr.mxu0 %v2001
  %v2003 = vand.u32 %v33, 4294901760
  %2004 = vmatpush1.msra.mxu0 %v2003
  %v2005 = vand.u32 %v27, 4294901760
  %2006 = vmatprep.subr.mxu0 %v2005
  %v2007 = vand.u32 %v26, 4294901760
  %2008 = vmatpush1.msra.mxu0 %v2007
  %v2009 = vand.u32 %v20, 4294901760
  %2010 = vmatprep.subr.mxu0 %v2009
  %v2011 = vand.u32 %v19, 4294901760
  %2012 = vmatpush1.msra.mxu0 %v2011
  %2013 = vmatprep.subr.mxu0 0.0
  %2014 = vmatpush2.msra.mxu0 0.0
  %2015 = vmatprep.subr.mxu0 0.0
  %2016 = vmatpush2.msra.mxu0 0.0
  %2017 = vmatprep.subr.mxu0 0.0
  %2018 = vmatpush2.msra.mxu0 0.0
  %2019 = vmatprep.subr.mxu0 0.0
  %2020 = vmatpush2.msra.mxu0 0.0
  %2021 = vmatprep.subr.mxu0 0.0
  %2022 = vmatpush2.msra.mxu0 0.0
  %2023 = vmatprep.subr.mxu0 0.0
  %2024 = vmatpush2.msra.mxu0 0.0
  %2025 = vmatprep.subr.mxu0 0.0
  %2026 = vmatpush2.msra.mxu0 0.0
  %2027 = vmatprep.subr.mxu0 0.0
  %2028 = vmatpush2.msra.mxu0 0.0
  %2029 = vmatprep.subr.mxu0 0.0
  %2030 = vmatpush2.msra.mxu0 0.0
  %2031 = vmatprep.subr.mxu0 0.0
  %2032 = vmatpush2.msra.mxu0 0.0
  %2033 = vmatprep.subr.mxu0 0.0
  %2034 = vmatpush2.msra.mxu0 0.0
  %2035 = vmatprep.subr.mxu0 0.0
  %2036 = vmatpush2.msra.mxu0 0.0
  %2037 = vmatprep.subr.mxu0 0.0
  %2038 = vmatpush2.msra.mxu0 0.0
  %2039 = vmatprep.subr.mxu0 0.0
  %2040 = vmatpush2.msra.mxu0 0.0
  %2041 = vmatprep.subr.mxu0 0.0
  %2042 = vmatpush2.msra.mxu0 0.0
  %2043 = vmatprep.subr.mxu0 0.0
  %2044 = vmatpush2.msra.mxu0 0.0
  %2045 = vmatprep.mubr.f32.mxu0 0.0
  %v2046 = vand.u32 %v110, 4294901760
  %2047 = vmatmul.mubr.f32.gmra.mxu0 %v2046
  %v2048 = vpop.f32.mrf.mxu0
  %v2049 = vadd.f32 %v1961, %v2048
  %v2050 = vpop.f32.mrf.mxu0
  %v2051 = vadd.f32 %v1963, %v2050
  %2052 = vdwg.mxu0
  %2053 = vmatprep.subr.mxu0 0.0
  %2054 = vmatpush1.msra.mxu0 0.0
  %2055 = vmatprep.subr.mxu0 0.0
  %2056 = vmatpush1.msra.mxu0 0.0
  %2057 = vmatprep.subr.mxu0 0.0
  %2058 = vmatpush1.msra.mxu0 0.0
  %2059 = vmatprep.subr.mxu0 0.0
  %2060 = vmatpush1.msra.mxu0 0.0
  %2061 = vmatprep.subr.mxu0 0.0
  %2062 = vmatpush1.msra.mxu0 0.0
  %2063 = vmatprep.subr.mxu0 0.0
  %2064 = vmatpush1.msra.mxu0 0.0
  %2065 = vmatprep.subr.mxu0 0.0
  %2066 = vmatpush1.msra.mxu0 0.0
  %2067 = vmatprep.subr.mxu0 0.0
  %2068 = vmatpush1.msra.mxu0 0.0
  %2069 = vmatprep.subr.mxu0 0.0
  %v2070 = vand.u32 %v70, 4294901760
  %2071 = vmatpush1.msra.mxu0 %v2070
  %2072 = vmatprep.subr.mxu0 0.0
  %v2073 = vand.u32 %v63, 4294901760
  %2074 = vmatpush1.msra.mxu0 %v2073
  %2075 = vmatprep.subr.mxu0 0.0
  %v2076 = vand.u32 %v56, 4294901760
  %2077 = vmatpush1.msra.mxu0 %v2076
  %2078 = vmatprep.subr.mxu0 0.0
  %v2079 = vand.u32 %v49, 4294901760
  %2080 = vmatpush1.msra.mxu0 %v2079
  %2081 = vmatprep.subr.mxu0 0.0
  %v2082 = vand.u32 %v42, 4294901760
  %2083 = vmatpush1.msra.mxu0 %v2082
  %2084 = vmatprep.subr.mxu0 0.0
  %v2085 = vand.u32 %v35, 4294901760
  %2086 = vmatpush1.msra.mxu0 %v2085
  %2087 = vmatprep.subr.mxu0 0.0
  %v2088 = vand.u32 %v28, 4294901760
  %2089 = vmatpush1.msra.mxu0 %v2088
  %2090 = vmatprep.subr.mxu0 0.0
  %v2091 = vand.u32 %v21, 4294901760
  %2092 = vmatpush1.msra.mxu0 %v2091
  %2093 = vmatprep.subr.mxu0 0.0
  %2094 = vmatpush2.msra.mxu0 0.0
  %2095 = vmatprep.subr.mxu0 0.0
  %2096 = vmatpush2.msra.mxu0 0.0
  %2097 = vmatprep.subr.mxu0 0.0
  %2098 = vmatpush2.msra.mxu0 0.0
  %2099 = vmatprep.subr.mxu0 0.0
  %2100 = vmatpush2.msra.mxu0 0.0
  %2101 = vmatprep.subr.mxu0 0.0
  %2102 = vmatpush2.msra.mxu0 0.0
  %2103 = vmatprep.subr.mxu0 0.0
  %2104 = vmatpush2.msra.mxu0 0.0
  %2105 = vmatprep.subr.mxu0 0.0
  %2106 = vmatpush2.msra.mxu0 0.0
  %2107 = vmatprep.subr.mxu0 0.0
  %2108 = vmatpush2.msra.mxu0 0.0
  %2109 = vmatprep.subr.mxu0 0.0
  %2110 = vmatpush2.msra.mxu0 0.0
  %2111 = vmatprep.subr.mxu0 0.0
  %2112 = vmatpush2.msra.mxu0 0.0
  %2113 = vmatprep.subr.mxu0 0.0
  %2114 = vmatpush2.msra.mxu0 0.0
  %2115 = vmatprep.subr.mxu0 0.0
  %2116 = vmatpush2.msra.mxu0 0.0
  %2117 = vmatprep.subr.mxu0 0.0
  %2118 = vmatpush2.msra.mxu0 0.0
  %2119 = vmatprep.subr.mxu0 0.0
  %2120 = vmatpush2.msra.mxu0 0.0
  %2121 = vmatprep.subr.mxu0 0.0
  %2122 = vmatpush2.msra.mxu0 0.0
  %2123 = vmatprep.subr.mxu0 0.0
  %2124 = vmatpush2.msra.mxu0 0.0
  %2125 = vmatprep.mubr.f32.mxu0 0.0
  %v2126 = vand.u32 %v110, 4294901760
  %v2127 = vsub.f32 %v110, %v2126
  %v2128 = vand.u32 %v2127, 4294901760
  %v2129 = vsub.f32 %v2127, %v2128
  %v2130 = vand.u32 %v2129, 4294901760
  %2131 = vmatmul.mubr.f32.gmra.mxu0 %v2130
  %v2132 = vpop.f32.mrf.mxu0
  %v2133 = vadd.f32 %v100, %v2132
  %v2134 = vpop.f32.mrf.mxu0
  %2135 = vdwg.mxu0
  %2136 = vmatprep.subr.mxu0 0.0
  %2137 = vmatpush1.msra.mxu0 0.0
  %2138 = vmatprep.subr.mxu0 0.0
  %2139 = vmatpush1.msra.mxu0 0.0
  %2140 = vmatprep.subr.mxu0 0.0
  %2141 = vmatpush1.msra.mxu0 0.0
  %2142 = vmatprep.subr.mxu0 0.0
  %2143 = vmatpush1.msra.mxu0 0.0
  %2144 = vmatprep.subr.mxu0 0.0
  %2145 = vmatpush1.msra.mxu0 0.0
  %2146 = vmatprep.subr.mxu0 0.0
  %2147 = vmatpush1.msra.mxu0 0.0
  %2148 = vmatprep.subr.mxu0 0.0
  %2149 = vmatpush1.msra.mxu0 0.0
  %2150 = vmatprep.subr.mxu0 0.0
  %2151 = vmatpush1.msra.mxu0 0.0
  %2152 = vmatprep.subr.mxu0 0.0
  %v2153 = vand.u32 %v70, 4294901760
  %v2154 = vsub.f32 %v70, %v2153
  %v2155 = vand.u32 %v2154, 4294901760
  %v2156 = vsub.f32 %v2154, %v2155
  %v2157 = vand.u32 %v2156, 4294901760
  %2158 = vmatpush1.msra.mxu0 %v2157
  %2159 = vmatprep.subr.mxu0 0.0
  %v2160 = vand.u32 %v63, 4294901760
  %v2161 = vsub.f32 %v63, %v2160
  %v2162 = vand.u32 %v2161, 4294901760
  %v2163 = vsub.f32 %v2161, %v2162
  %v2164 = vand.u32 %v2163, 4294901760
  %2165 = vmatpush1.msra.mxu0 %v2164
  %2166 = vmatprep.subr.mxu0 0.0
  %v2167 = vand.u32 %v56, 4294901760
  %v2168 = vsub.f32 %v56, %v2167
  %v2169 = vand.u32 %v2168, 4294901760
  %v2170 = vsub.f32 %v2168, %v2169
  %v2171 = vand.u32 %v2170, 4294901760
  %2172 = vmatpush1.msra.mxu0 %v2171
  %2173 = vmatprep.subr.mxu0 0.0
  %v2174 = vand.u32 %v49, 4294901760
  %v2175 = vsub.f32 %v49, %v2174
  %v2176 = vand.u32 %v2175, 4294901760
  %v2177 = vsub.f32 %v2175, %v2176
  %v2178 = vand.u32 %v2177, 4294901760
  %2179 = vmatpush1.msra.mxu0 %v2178
  %2180 = vmatprep.subr.mxu0 0.0
  %v2181 = vand.u32 %v42, 4294901760
  %v2182 = vsub.f32 %v42, %v2181
  %v2183 = vand.u32 %v2182, 4294901760
  %v2184 = vsub.f32 %v2182, %v2183
  %v2185 = vand.u32 %v2184, 4294901760
  %2186 = vmatpush1.msra.mxu0 %v2185
  %2187 = vmatprep.subr.mxu0 0.0
  %v2188 = vand.u32 %v35, 4294901760
  %v2189 = vsub.f32 %v35, %v2188
  %v2190 = vand.u32 %v2189, 4294901760
  %v2191 = vsub.f32 %v2189, %v2190
  %v2192 = vand.u32 %v2191, 4294901760
  %2193 = vmatpush1.msra.mxu0 %v2192
  %2194 = vmatprep.subr.mxu0 0.0
  %v2195 = vand.u32 %v28, 4294901760
  %v2196 = vsub.f32 %v28, %v2195
  %v2197 = vand.u32 %v2196, 4294901760
  %v2198 = vsub.f32 %v2196, %v2197
  %v2199 = vand.u32 %v2198, 4294901760
  %2200 = vmatpush1.msra.mxu0 %v2199
  %2201 = vmatprep.subr.mxu0 0.0
  %v2202 = vand.u32 %v21, 4294901760
  %v2203 = vsub.f32 %v21, %v2202
  %v2204 = vand.u32 %v2203, 4294901760
  %v2205 = vsub.f32 %v2203, %v2204
  %v2206 = vand.u32 %v2205, 4294901760
  %2207 = vmatpush1.msra.mxu0 %v2206
  %2208 = vmatprep.subr.mxu0 0.0
  %2209 = vmatpush2.msra.mxu0 0.0
  %2210 = vmatprep.subr.mxu0 0.0
  %2211 = vmatpush2.msra.mxu0 0.0
  %2212 = vmatprep.subr.mxu0 0.0
  %2213 = vmatpush2.msra.mxu0 0.0
  %2214 = vmatprep.subr.mxu0 0.0
  %2215 = vmatpush2.msra.mxu0 0.0
  %2216 = vmatprep.subr.mxu0 0.0
  %2217 = vmatpush2.msra.mxu0 0.0
  %2218 = vmatprep.subr.mxu0 0.0
  %2219 = vmatpush2.msra.mxu0 0.0
  %2220 = vmatprep.subr.mxu0 0.0
  %2221 = vmatpush2.msra.mxu0 0.0
  %2222 = vmatprep.subr.mxu0 0.0
  %2223 = vmatpush2.msra.mxu0 0.0
  %2224 = vmatprep.subr.mxu0 0.0
  %2225 = vmatpush2.msra.mxu0 0.0
  %2226 = vmatprep.subr.mxu0 0.0
  %2227 = vmatpush2.msra.mxu0 0.0
  %2228 = vmatprep.subr.mxu0 0.0
  %2229 = vmatpush2.msra.mxu0 0.0
  %2230 = vmatprep.subr.mxu0 0.0
  %2231 = vmatpush2.msra.mxu0 0.0
  %2232 = vmatprep.subr.mxu0 0.0
  %2233 = vmatpush2.msra.mxu0 0.0
  %2234 = vmatprep.subr.mxu0 0.0
  %2235 = vmatpush2.msra.mxu0 0.0
  %2236 = vmatprep.subr.mxu0 0.0
  %2237 = vmatpush2.msra.mxu0 0.0
  %2238 = vmatprep.subr.mxu0 0.0
  %2239 = vmatpush2.msra.mxu0 0.0
  %2240 = vmatprep.mubr.f32.mxu0 0.0
  %v2241 = vand.u32 %v110, 4294901760
  %2242 = vmatmul.mubr.f32.gmra.mxu0 %v2241
  %v2243 = vpop.f32.mrf.mxu0
  %v2244 = vadd.f32 %v2133, %v2243
  %v2245 = vpop.f32.mrf.mxu0
  %2246 = vdwg.mxu0
  %2247 = vmatprep.subr.mxu0 0.0
  %2248 = vmatpush1.msra.mxu0 0.0
  %2249 = vmatprep.subr.mxu0 0.0
  %2250 = vmatpush1.msra.mxu0 0.0
  %2251 = vmatprep.subr.mxu0 0.0
  %2252 = vmatpush1.msra.mxu0 0.0
  %2253 = vmatprep.subr.mxu0 0.0
  %2254 = vmatpush1.msra.mxu0 0.0
  %2255 = vmatprep.subr.mxu0 0.0
  %2256 = vmatpush1.msra.mxu0 0.0
  %2257 = vmatprep.subr.mxu0 0.0
  %2258 = vmatpush1.msra.mxu0 0.0
  %2259 = vmatprep.subr.mxu0 0.0
  %2260 = vmatpush1.msra.mxu0 0.0
  %2261 = vmatprep.subr.mxu0 0.0
  %2262 = vmatpush1.msra.mxu0 0.0
  %2263 = vmatprep.subr.mxu0 0.0
  %v2264 = vand.u32 %v70, 4294901760
  %v2265 = vsub.f32 %v70, %v2264
  %2266 = vmatpush1.msra.mxu0 %v2265
  %2267 = vmatprep.subr.mxu0 0.0
  %v2268 = vand.u32 %v63, 4294901760
  %v2269 = vsub.f32 %v63, %v2268
  %2270 = vmatpush1.msra.mxu0 %v2269
  %2271 = vmatprep.subr.mxu0 0.0
  %v2272 = vand.u32 %v56, 4294901760
  %v2273 = vsub.f32 %v56, %v2272
  %2274 = vmatpush1.msra.mxu0 %v2273
  %2275 = vmatprep.subr.mxu0 0.0
  %v2276 = vand.u32 %v49, 4294901760
  %v2277 = vsub.f32 %v49, %v2276
  %2278 = vmatpush1.msra.mxu0 %v2277
  %2279 = vmatprep.subr.mxu0 0.0
  %v2280 = vand.u32 %v42, 4294901760
  %v2281 = vsub.f32 %v42, %v2280
  %2282 = vmatpush1.msra.mxu0 %v2281
  %2283 = vmatprep.subr.mxu0 0.0
  %v2284 = vand.u32 %v35, 4294901760
  %v2285 = vsub.f32 %v35, %v2284
  %2286 = vmatpush1.msra.mxu0 %v2285
  %2287 = vmatprep.subr.mxu0 0.0
  %v2288 = vand.u32 %v28, 4294901760
  %v2289 = vsub.f32 %v28, %v2288
  %2290 = vmatpush1.msra.mxu0 %v2289
  %2291 = vmatprep.subr.mxu0 0.0
  %v2292 = vand.u32 %v21, 4294901760
  %v2293 = vsub.f32 %v21, %v2292
  %2294 = vmatpush1.msra.mxu0 %v2293
  %2295 = vmatprep.subr.mxu0 0.0
  %2296 = vmatpush2.msra.mxu0 0.0
  %2297 = vmatprep.subr.mxu0 0.0
  %2298 = vmatpush2.msra.mxu0 0.0
  %2299 = vmatprep.subr.mxu0 0.0
  %2300 = vmatpush2.msra.mxu0 0.0
  %2301 = vmatprep.subr.mxu0 0.0
  %2302 = vmatpush2.msra.mxu0 0.0
  %2303 = vmatprep.subr.mxu0 0.0
  %2304 = vmatpush2.msra.mxu0 0.0
  %2305 = vmatprep.subr.mxu0 0.0
  %2306 = vmatpush2.msra.mxu0 0.0
  %2307 = vmatprep.subr.mxu0 0.0
  %2308 = vmatpush2.msra.mxu0 0.0
  %2309 = vmatprep.subr.mxu0 0.0
  %2310 = vmatpush2.msra.mxu0 0.0
  %2311 = vmatprep.subr.mxu0 0.0
  %2312 = vmatpush2.msra.mxu0 0.0
  %2313 = vmatprep.subr.mxu0 0.0
  %2314 = vmatpush2.msra.mxu0 0.0
  %2315 = vmatprep.subr.mxu0 0.0
  %2316 = vmatpush2.msra.mxu0 0.0
  %2317 = vmatprep.subr.mxu0 0.0
  %2318 = vmatpush2.msra.mxu0 0.0
  %2319 = vmatprep.subr.mxu0 0.0
  %2320 = vmatpush2.msra.mxu0 0.0
  %2321 = vmatprep.subr.mxu0 0.0
  %2322 = vmatpush2.msra.mxu0 0.0
  %2323 = vmatprep.subr.mxu0 0.0
  %2324 = vmatpush2.msra.mxu0 0.0
  %2325 = vmatprep.subr.mxu0 0.0
  %2326 = vmatpush2.msra.mxu0 0.0
  %2327 = vmatprep.mubr.f32.mxu0 0.0
  %v2328 = vand.u32 %v110, 4294901760
  %v2329 = vsub.f32 %v110, %v2328
  %2330 = vmatmul.mubr.f32.gmra.mxu0 %v2329
  %v2331 = vpop.f32.mrf.mxu0
  %v2332 = vadd.f32 %v2244, %v2331
  %v2333 = vpop.f32.mrf.mxu0
  %2334 = vdwg.mxu0
  %2335 = vmatprep.subr.mxu0 0.0
  %2336 = vmatpush1.msra.mxu0 0.0
  %2337 = vmatprep.subr.mxu0 0.0
  %2338 = vmatpush1.msra.mxu0 0.0
  %2339 = vmatprep.subr.mxu0 0.0
  %2340 = vmatpush1.msra.mxu0 0.0
  %2341 = vmatprep.subr.mxu0 0.0
  %2342 = vmatpush1.msra.mxu0 0.0
  %2343 = vmatprep.subr.mxu0 0.0
  %2344 = vmatpush1.msra.mxu0 0.0
  %2345 = vmatprep.subr.mxu0 0.0
  %2346 = vmatpush1.msra.mxu0 0.0
  %2347 = vmatprep.subr.mxu0 0.0
  %2348 = vmatpush1.msra.mxu0 0.0
  %2349 = vmatprep.subr.mxu0 0.0
  %2350 = vmatpush1.msra.mxu0 0.0
  %2351 = vmatprep.subr.mxu0 0.0
  %v2352 = vand.u32 %v70, 4294901760
  %2353 = vmatpush1.msra.mxu0 %v2352
  %2354 = vmatprep.subr.mxu0 0.0
  %v2355 = vand.u32 %v63, 4294901760
  %2356 = vmatpush1.msra.mxu0 %v2355
  %2357 = vmatprep.subr.mxu0 0.0
  %v2358 = vand.u32 %v56, 4294901760
  %2359 = vmatpush1.msra.mxu0 %v2358
  %2360 = vmatprep.subr.mxu0 0.0
  %v2361 = vand.u32 %v49, 4294901760
  %2362 = vmatpush1.msra.mxu0 %v2361
  %2363 = vmatprep.subr.mxu0 0.0
  %v2364 = vand.u32 %v42, 4294901760
  %2365 = vmatpush1.msra.mxu0 %v2364
  %2366 = vmatprep.subr.mxu0 0.0
  %v2367 = vand.u32 %v35, 4294901760
  %2368 = vmatpush1.msra.mxu0 %v2367
  %2369 = vmatprep.subr.mxu0 0.0
  %v2370 = vand.u32 %v28, 4294901760
  %2371 = vmatpush1.msra.mxu0 %v2370
  %2372 = vmatprep.subr.mxu0 0.0
  %v2373 = vand.u32 %v21, 4294901760
  %2374 = vmatpush1.msra.mxu0 %v2373
  %2375 = vmatprep.subr.mxu0 0.0
  %2376 = vmatpush2.msra.mxu0 0.0
  %2377 = vmatprep.subr.mxu0 0.0
  %2378 = vmatpush2.msra.mxu0 0.0
  %2379 = vmatprep.subr.mxu0 0.0
  %2380 = vmatpush2.msra.mxu0 0.0
  %2381 = vmatprep.subr.mxu0 0.0
  %2382 = vmatpush2.msra.mxu0 0.0
  %2383 = vmatprep.subr.mxu0 0.0
  %2384 = vmatpush2.msra.mxu0 0.0
  %2385 = vmatprep.subr.mxu0 0.0
  %2386 = vmatpush2.msra.mxu0 0.0
  %2387 = vmatprep.subr.mxu0 0.0
  %2388 = vmatpush2.msra.mxu0 0.0
  %2389 = vmatprep.subr.mxu0 0.0
  %2390 = vmatpush2.msra.mxu0 0.0
  %2391 = vmatprep.subr.mxu0 0.0
  %2392 = vmatpush2.msra.mxu0 0.0
  %2393 = vmatprep.subr.mxu0 0.0
  %2394 = vmatpush2.msra.mxu0 0.0
  %2395 = vmatprep.subr.mxu0 0.0
  %2396 = vmatpush2.msra.mxu0 0.0
  %2397 = vmatprep.subr.mxu0 0.0
  %2398 = vmatpush2.msra.mxu0 0.0
  %2399 = vmatprep.subr.mxu0 0.0
  %2400 = vmatpush2.msra.mxu0 0.0
  %2401 = vmatprep.subr.mxu0 0.0
  %2402 = vmatpush2.msra.mxu0 0.0
  %2403 = vmatprep.subr.mxu0 0.0
  %2404 = vmatpush2.msra.mxu0 0.0
  %2405 = vmatprep.subr.mxu0 0.0
  %2406 = vmatpush2.msra.mxu0 0.0
  %2407 = vmatprep.mubr.f32.mxu0 0.0
  %v2408 = vand.u32 %v110, 4294901760
  %v2409 = vsub.f32 %v110, %v2408
  %v2410 = vand.u32 %v2409, 4294901760
  %2411 = vmatmul.mubr.f32.gmra.mxu0 %v2410
  %v2412 = vpop.f32.mrf.mxu0
  %v2413 = vadd.f32 %v2332, %v2412
  %v2414 = vpop.f32.mrf.mxu0
  %2415 = vdwg.mxu0
  %2416 = vmatprep.subr.mxu0 0.0
  %2417 = vmatpush1.msra.mxu0 0.0
  %2418 = vmatprep.subr.mxu0 0.0
  %2419 = vmatpush1.msra.mxu0 0.0
  %2420 = vmatprep.subr.mxu0 0.0
  %2421 = vmatpush1.msra.mxu0 0.0
  %2422 = vmatprep.subr.mxu0 0.0
  %2423 = vmatpush1.msra.mxu0 0.0
  %2424 = vmatprep.subr.mxu0 0.0
  %2425 = vmatpush1.msra.mxu0 0.0
  %2426 = vmatprep.subr.mxu0 0.0
  %2427 = vmatpush1.msra.mxu0 0.0
  %2428 = vmatprep.subr.mxu0 0.0
  %2429 = vmatpush1.msra.mxu0 0.0
  %2430 = vmatprep.subr.mxu0 0.0
  %2431 = vmatpush1.msra.mxu0 0.0
  %2432 = vmatprep.subr.mxu0 0.0
  %v2433 = vand.u32 %v70, 4294901760
  %v2434 = vsub.f32 %v70, %v2433
  %v2435 = vand.u32 %v2434, 4294901760
  %2436 = vmatpush1.msra.mxu0 %v2435
  %2437 = vmatprep.subr.mxu0 0.0
  %v2438 = vand.u32 %v63, 4294901760
  %v2439 = vsub.f32 %v63, %v2438
  %v2440 = vand.u32 %v2439, 4294901760
  %2441 = vmatpush1.msra.mxu0 %v2440
  %2442 = vmatprep.subr.mxu0 0.0
  %v2443 = vand.u32 %v56, 4294901760
  %v2444 = vsub.f32 %v56, %v2443
  %v2445 = vand.u32 %v2444, 4294901760
  %2446 = vmatpush1.msra.mxu0 %v2445
  %2447 = vmatprep.subr.mxu0 0.0
  %v2448 = vand.u32 %v49, 4294901760
  %v2449 = vsub.f32 %v49, %v2448
  %v2450 = vand.u32 %v2449, 4294901760
  %2451 = vmatpush1.msra.mxu0 %v2450
  %2452 = vmatprep.subr.mxu0 0.0
  %v2453 = vand.u32 %v42, 4294901760
  %v2454 = vsub.f32 %v42, %v2453
  %v2455 = vand.u32 %v2454, 4294901760
  %2456 = vmatpush1.msra.mxu0 %v2455
  %2457 = vmatprep.subr.mxu0 0.0
  %v2458 = vand.u32 %v35, 4294901760
  %v2459 = vsub.f32 %v35, %v2458
  %v2460 = vand.u32 %v2459, 4294901760
  %2461 = vmatpush1.msra.mxu0 %v2460
  %2462 = vmatprep.subr.mxu0 0.0
  %v2463 = vand.u32 %v28, 4294901760
  %v2464 = vsub.f32 %v28, %v2463
  %v2465 = vand.u32 %v2464, 4294901760
  %2466 = vmatpush1.msra.mxu0 %v2465
  %2467 = vmatprep.subr.mxu0 0.0
  %v2468 = vand.u32 %v21, 4294901760
  %v2469 = vsub.f32 %v21, %v2468
  %v2470 = vand.u32 %v2469, 4294901760
  %2471 = vmatpush1.msra.mxu0 %v2470
  %2472 = vmatprep.subr.mxu0 0.0
  %2473 = vmatpush2.msra.mxu0 0.0
  %2474 = vmatprep.subr.mxu0 0.0
  %2475 = vmatpush2.msra.mxu0 0.0
  %2476 = vmatprep.subr.mxu0 0.0
  %2477 = vmatpush2.msra.mxu0 0.0
  %2478 = vmatprep.subr.mxu0 0.0
  %2479 = vmatpush2.msra.mxu0 0.0
  %2480 = vmatprep.subr.mxu0 0.0
  %2481 = vmatpush2.msra.mxu0 0.0
  %2482 = vmatprep.subr.mxu0 0.0
  %2483 = vmatpush2.msra.mxu0 0.0
  %2484 = vmatprep.subr.mxu0 0.0
  %2485 = vmatpush2.msra.mxu0 0.0
  %2486 = vmatprep.subr.mxu0 0.0
  %2487 = vmatpush2.msra.mxu0 0.0
  %2488 = vmatprep.subr.mxu0 0.0
  %2489 = vmatpush2.msra.mxu0 0.0
  %2490 = vmatprep.subr.mxu0 0.0
  %2491 = vmatpush2.msra.mxu0 0.0
  %2492 = vmatprep.subr.mxu0 0.0
  %2493 = vmatpush2.msra.mxu0 0.0
  %2494 = vmatprep.subr.mxu0 0.0
  %2495 = vmatpush2.msra.mxu0 0.0
  %2496 = vmatprep.subr.mxu0 0.0
  %2497 = vmatpush2.msra.mxu0 0.0
  %2498 = vmatprep.subr.mxu0 0.0
  %2499 = vmatpush2.msra.mxu0 0.0
  %2500 = vmatprep.subr.mxu0 0.0
  %2501 = vmatpush2.msra.mxu0 0.0
  %2502 = vmatprep.subr.mxu0 0.0
  %2503 = vmatpush2.msra.mxu0 0.0
  %2504 = vmatprep.mubr.f32.mxu0 0.0
  %v2505 = vand.u32 %v110, 4294901760
  %2506 = vmatmul.mubr.f32.gmra.mxu0 %v2505
  %v2507 = vpop.f32.mrf.mxu0
  %v2508 = vadd.f32 %v2413, %v2507
  %v2509 = vpop.f32.mrf.mxu0
  %2510 = vdwg.mxu0
  %2511 = vmatprep.subr.mxu0 0.0
  %2512 = vmatpush1.msra.mxu0 0.0
  %2513 = vmatprep.subr.mxu0 0.0
  %2514 = vmatpush1.msra.mxu0 0.0
  %2515 = vmatprep.subr.mxu0 0.0
  %2516 = vmatpush1.msra.mxu0 0.0
  %2517 = vmatprep.subr.mxu0 0.0
  %2518 = vmatpush1.msra.mxu0 0.0
  %2519 = vmatprep.subr.mxu0 0.0
  %2520 = vmatpush1.msra.mxu0 0.0
  %2521 = vmatprep.subr.mxu0 0.0
  %2522 = vmatpush1.msra.mxu0 0.0
  %2523 = vmatprep.subr.mxu0 0.0
  %2524 = vmatpush1.msra.mxu0 0.0
  %2525 = vmatprep.subr.mxu0 0.0
  %2526 = vmatpush1.msra.mxu0 0.0
  %2527 = vmatprep.subr.mxu0 0.0
  %v2528 = vand.u32 %v70, 4294901760
  %2529 = vmatpush1.msra.mxu0 %v2528
  %2530 = vmatprep.subr.mxu0 0.0
  %v2531 = vand.u32 %v63, 4294901760
  %2532 = vmatpush1.msra.mxu0 %v2531
  %2533 = vmatprep.subr.mxu0 0.0
  %v2534 = vand.u32 %v56, 4294901760
  %2535 = vmatpush1.msra.mxu0 %v2534
  %2536 = vmatprep.subr.mxu0 0.0
  %v2537 = vand.u32 %v49, 4294901760
  %2538 = vmatpush1.msra.mxu0 %v2537
  %2539 = vmatprep.subr.mxu0 0.0
  %v2540 = vand.u32 %v42, 4294901760
  %2541 = vmatpush1.msra.mxu0 %v2540
  %2542 = vmatprep.subr.mxu0 0.0
  %v2543 = vand.u32 %v35, 4294901760
  %2544 = vmatpush1.msra.mxu0 %v2543
  %2545 = vmatprep.subr.mxu0 0.0
  %v2546 = vand.u32 %v28, 4294901760
  %2547 = vmatpush1.msra.mxu0 %v2546
  %2548 = vmatprep.subr.mxu0 0.0
  %v2549 = vand.u32 %v21, 4294901760
  %2550 = vmatpush1.msra.mxu0 %v2549
  %2551 = vmatprep.subr.mxu0 0.0
  %2552 = vmatpush2.msra.mxu0 0.0
  %2553 = vmatprep.subr.mxu0 0.0
  %2554 = vmatpush2.msra.mxu0 0.0
  %2555 = vmatprep.subr.mxu0 0.0
  %2556 = vmatpush2.msra.mxu0 0.0
  %2557 = vmatprep.subr.mxu0 0.0
  %2558 = vmatpush2.msra.mxu0 0.0
  %2559 = vmatprep.subr.mxu0 0.0
  %2560 = vmatpush2.msra.mxu0 0.0
  %2561 = vmatprep.subr.mxu0 0.0
  %2562 = vmatpush2.msra.mxu0 0.0
  %2563 = vmatprep.subr.mxu0 0.0
  %2564 = vmatpush2.msra.mxu0 0.0
  %2565 = vmatprep.subr.mxu0 0.0
  %2566 = vmatpush2.msra.mxu0 0.0
  %2567 = vmatprep.subr.mxu0 0.0
  %2568 = vmatpush2.msra.mxu0 0.0
  %2569 = vmatprep.subr.mxu0 0.0
  %2570 = vmatpush2.msra.mxu0 0.0
  %2571 = vmatprep.subr.mxu0 0.0
  %2572 = vmatpush2.msra.mxu0 0.0
  %2573 = vmatprep.subr.mxu0 0.0
  %2574 = vmatpush2.msra.mxu0 0.0
  %2575 = vmatprep.subr.mxu0 0.0
  %2576 = vmatpush2.msra.mxu0 0.0
  %2577 = vmatprep.subr.mxu0 0.0
  %2578 = vmatpush2.msra.mxu0 0.0
  %2579 = vmatprep.subr.mxu0 0.0
  %2580 = vmatpush2.msra.mxu0 0.0
  %2581 = vmatprep.subr.mxu0 0.0
  %2582 = vmatpush2.msra.mxu0 0.0
  %2583 = vmatprep.mubr.f32.mxu0 0.0
  %v2584 = vand.u32 %v110, 4294901760
  %2585 = vmatmul.mubr.f32.gmra.mxu0 %v2584
  %v2586 = vpop.f32.mrf.mxu0
  %v2587 = vadd.f32 %v2508, %v2586
  %v2588 = vpop.f32.mrf.mxu0
  %2589 = vdwg.mxu0
  %v2597 = vcombine.low %v755, %v757
  %v2598 = vcombine.low %v1402, %v1404
  %v2599 = vcombine.low %v2049, %v2051
  %v2601 = vunpack.c.l.s4 1966171168
  %v2602 = vunpack.c.0.s8 %v2601
  %v2603 = vlaneseq
  %v2604 = vshrl.u32 %v2603, 7
  %v2605 = vsub.s32 %v2602, %v2604
  %v2606 = vrot.slane %v2597, %v2605
  %v2608 = vunpack.c.l.s4 1966171168
  %v2609 = vunpack.c.0.s8 %v2608
  %v2610 = vlaneseq
  %v2611 = vshrl.u32 %v2610, 7
  %v2612 = vsub.s32 %v2609, %v2611
  %v2613 = vrot.slane %v2598, %v2612
  %v2615 = vunpack.c.l.s4 1966171168
  %v2616 = vunpack.c.0.s8 %v2615
  %v2617 = vlaneseq
  %v2618 = vshrl.u32 %v2617, 7
  %v2619 = vsub.s32 %v2616, %v2618
  %v2620 = vrot.slane %v2599, %v2619
  %v2622 = vunpack.c.l.s4 1966171168
  %v2623 = vunpack.c.0.s8 %v2622
  %v2624 = vlaneseq
  %v2625 = vshrl.u32 %v2624, 7
  %v2626 = vsub.s32 %v2623, %v2625
  %v2627 = vrot.slane %v2587, %v2626
  %v2628 = vcombine.low %v2606, %v2613
  %v2629 = vcombine.low %v2620, %v2627
  %v2631 = vunpack.c.l.s4 1966171168
  %v2632 = vunpack.c.0.s8 %v2631
  %v2633 = vlaneseq
  %v2634 = vshrl.u32 %v2633, 7
  %v2635 = vsub.s32 %v2632, %v2634
  %v2636 = vrot.slane %v2628, %v2635
  %v2638 = vunpack.c.l.s4 1966171168
  %v2639 = vunpack.c.0.s8 %v2638
  %v2640 = vlaneseq
  %v2641 = vshrl.u32 %v2640, 7
  %v2642 = vsub.s32 %v2639, %v2641
  %v2643 = vrot.slane %v2629, %v2642
  %v2644 = vcombine.low %v2636, %v2643
  %v2646 = vlaneseq
  %vm2647 = vcmp.ge.s32.totalorder %v2646, 0
  %vm2648 = vcmp.lt.s32.totalorder %v2646, 808
  %vm2649 = vmand %vm2647, %vm2648
  %2650 = vst.msk [vmem:[%s3] sm:$0x7f] %vm2649, %v2644
  // Predicated region
  $region14: #{metalearner_forward.2} parent=0 // pred_check
    _
  $region15: #{metalearner_forward.2} parent=0 // pred_check_branch
    %2652 = sbr.rel (0) target = $region17
  $region16: #{metalearner_forward.2} parent=0 // pred_region
    _
  $region17: #{metalearner_forward.2} parent=0 // pred_fallthru
    _
  // Predicated region
  $region18: #{metalearner_forward.2} parent=0 // pred_check
    _
  $region19: #{metalearner_forward.2} parent=0 // pred_check_branch
    %2654 = sbr.rel (0) target = $region21
  $region20: #{metalearner_forward.2} parent=0 // pred_region
    _
  $region21: #{metalearner_forward.2} parent=0 // pred_fallthru
    _

// kernel: metalearner_forward.3
$region0: #{metalearner_forward.3}
  #allocation0 [shape = 'u32[]', space=smem, size = 0x4, offset = 0x4, fixed_abs, tag = 'smem constant byte address 0x4 - core index']
  #allocation1 [shape = 'u32[144,128]{1,0:T(1,128)}', space=vmem, size = 0x12000, scoped, tag = 'internal scratch']
  %s0 = inlined_call_operand.vmem [shape: f32[128,256], index: 0, kind: input, shape index: {}]
  %s1 = inlined_call_operand.vmem [shape: f32[1,256], index: 1, kind: input, shape index: {}]
  %s2 = inlined_call_operand.vmem [shape: f32[256,64], index: 2, kind: input, shape index: {}]
  %s3 = inlined_call_operand.vmem [shape: f32[1,64], index: 3, kind: input, shape index: {}]
  %s4 = inlined_call_operand.vmem [shape: f32[1,128], index: 4, kind: input, shape index: {}]
  %s5 = inlined_call_operand.vmem [shape: f32[1,64], index: 5, kind: output, shape index: {}]
  %s6 = sld [smem:[#allocation0]]
  $region30: #{metalearner_forward.3} parent=0
    _
  %s8 = ssub.s32 1, %s6
  %s9 = scalar_select 0, %s8, %s6
  // Predicated region
  $region2: #{metalearner_forward.3} parent=0 // pred_check
    _
  $region3: #{metalearner_forward.3} parent=0 // pred_check_branch
    %11 = sbr.rel (0) target = $region5
  $region4: #{metalearner_forward.3} parent=0 // pred_region
    _
  $region5: #{metalearner_forward.3} parent=0 // pred_fallthru
    _
  // Predicated region
  $region6: #{metalearner_forward.3} parent=0 // pred_check
    _
  $region7: #{metalearner_forward.3} parent=0 // pred_check_branch
    %13 = sbr.rel (0) target = $region9
  $region8: #{metalearner_forward.3} parent=0 // pred_region
    _
  $region9: #{metalearner_forward.3} parent=0 // pred_fallthru
    _
  // Predicated region
  $region10: #{metalearner_forward.3} parent=0 // pred_check
    _
  $region11: #{metalearner_forward.3} parent=0 // pred_check_branch
    %15 = sbr.rel (0) target = $region13
  $region12: #{metalearner_forward.3} parent=0 // pred_region
    _
  $region13: #{metalearner_forward.3} parent=0 // pred_fallthru
    _
  // Predicated region
  $region14: #{metalearner_forward.3} parent=0 // pred_check
    _
  $region15: #{metalearner_forward.3} parent=0 // pred_check_branch
    %17 = sbr.rel (0) target = $region17
  $region16: #{metalearner_forward.3} parent=0 // pred_region
    _
  $region17: #{metalearner_forward.3} parent=0 // pred_fallthru
    _
  // Predicated region
  $region18: #{metalearner_forward.3} parent=0 // pred_check
    _
  $region19: #{metalearner_forward.3} parent=0 // pred_check_branch
    %19 = sbr.rel (0) target = $region21
  $region20: #{metalearner_forward.3} parent=0 // pred_region
    _
  $region21: #{metalearner_forward.3} parent=0 // pred_fallthru
    _
  %v20 = vld [vmem:[%s4] sm:$0x1]
  %v21 = vld [vmem:[%s0] sm:$0xff]
  %v22 = vld [vmem:[%s0 + $0x8] sm:$0xff]
  %v23 = vld [vmem:[%s0 + $0x10] sm:$0xff]
  %v24 = vld [vmem:[%s0 + $0x18] sm:$0xff]
  %v25 = vld [vmem:[%s0 + $0x20] sm:$0xff]
  %v26 = vld [vmem:[%s0 + $0x28] sm:$0xff]
  %v27 = vld [vmem:[%s0 + $0x30] sm:$0xff]
  %v28 = vld [vmem:[%s0 + $0x38] sm:$0xff]
  %v29 = vld [vmem:[%s0 + $0x40] sm:$0xff]
  %v30 = vld [vmem:[%s0 + $0x48] sm:$0xff]
  %v31 = vld [vmem:[%s0 + $0x50] sm:$0xff]
  %v32 = vld [vmem:[%s0 + $0x58] sm:$0xff]
  %v33 = vld [vmem:[%s0 + $0x60] sm:$0xff]
  %v34 = vld [vmem:[%s0 + $0x68] sm:$0xff]
  %v35 = vld [vmem:[%s0 + $0x70] sm:$0xff]
  %v36 = vld [vmem:[%s0 + $0x78] sm:$0xff]
  %v37 = vld [vmem:[%s0 + $0x80] sm:$0xff]
  %v38 = vld [vmem:[%s0 + $0x88] sm:$0xff]
  %v39 = vld [vmem:[%s0 + $0x90] sm:$0xff]
  %v40 = vld [vmem:[%s0 + $0x98] sm:$0xff]
  %v41 = vld [vmem:[%s0 + $0xa0] sm:$0xff]
  %v42 = vld [vmem:[%s0 + $0xa8] sm:$0xff]
  %v43 = vld [vmem:[%s0 + $0xb0] sm:$0xff]
  %v44 = vld [vmem:[%s0 + $0xb8] sm:$0xff]
  %v45 = vld [vmem:[%s0 + $0xc0] sm:$0xff]
  %v46 = vld [vmem:[%s0 + $0xc8] sm:$0xff]
  %v47 = vld [vmem:[%s0 + $0xd0] sm:$0xff]
  %v48 = vld [vmem:[%s0 + $0xd8] sm:$0xff]
  %v49 = vld [vmem:[%s0 + $0xe0] sm:$0xff]
  %v50 = vld [vmem:[%s0 + $0xe8] sm:$0xff]
  %v51 = vld [vmem:[%s0 + $0xf0] sm:$0xff]
  %v52 = vld [vmem:[%s0 + $0xf8] sm:$0xff]
  %v53 = vld [vmem:[%s1] sm:$0x3]
  %v55 = vlaneseq
  %v56 = vshrl.u32 %v55, 7
  %v57 = vsub.s32 0, %v56
  %v58 = vrot.slane %v53, %v57
  %v59 = vlaneseq
  %v60 = vshrl.u32 %v59, 7
  %v61 = vsub.s32 1, %v60
  %v62 = vrot.slane %v53, %v61
  %v65 = vand.u32 %v52, 4294901760
  %66 = vmatprep.subr.mxu0 %v65
  %v67 = vand.u32 %v51, 4294901760
  %68 = vmatpush1.msra.mxu0 %v67
  %v69 = vand.u32 %v50, 4294901760
  %70 = vmatprep.subr.mxu0 %v69
  %v71 = vand.u32 %v49, 4294901760
  %72 = vmatpush1.msra.mxu0 %v71
  %v73 = vand.u32 %v48, 4294901760
  %74 = vmatprep.subr.mxu0 %v73
  %v75 = vand.u32 %v47, 4294901760
  %76 = vmatpush1.msra.mxu0 %v75
  %v77 = vand.u32 %v46, 4294901760
  %78 = vmatprep.subr.mxu0 %v77
  %v79 = vand.u32 %v45, 4294901760
  %80 = vmatpush1.msra.mxu0 %v79
  %v81 = vand.u32 %v44, 4294901760
  %82 = vmatprep.subr.mxu0 %v81
  %v83 = vand.u32 %v43, 4294901760
  %84 = vmatpush1.msra.mxu0 %v83
  %v85 = vand.u32 %v42, 4294901760
  %86 = vmatprep.subr.mxu0 %v85
  %v87 = vand.u32 %v41, 4294901760
  %88 = vmatpush1.msra.mxu0 %v87
  %v89 = vand.u32 %v40, 4294901760
  %90 = vmatprep.subr.mxu0 %v89
  %v91 = vand.u32 %v39, 4294901760
  %92 = vmatpush1.msra.mxu0 %v91
  %v93 = vand.u32 %v38, 4294901760
  %94 = vmatprep.subr.mxu0 %v93
  %v95 = vand.u32 %v37, 4294901760
  %96 = vmatpush1.msra.mxu0 %v95
  %v97 = vand.u32 %v36, 4294901760
  %98 = vmatprep.subr.mxu0 %v97
  %v99 = vand.u32 %v35, 4294901760
  %100 = vmatpush1.msra.mxu0 %v99
  %v101 = vand.u32 %v34, 4294901760
  %102 = vmatprep.subr.mxu0 %v101
  %v103 = vand.u32 %v33, 4294901760
  %104 = vmatpush1.msra.mxu0 %v103
  %v105 = vand.u32 %v32, 4294901760
  %106 = vmatprep.subr.mxu0 %v105
  %v107 = vand.u32 %v31, 4294901760
  %108 = vmatpush1.msra.mxu0 %v107
  %v109 = vand.u32 %v30, 4294901760
  %110 = vmatprep.subr.mxu0 %v109
  %v111 = vand.u32 %v29, 4294901760
  %112 = vmatpush1.msra.mxu0 %v111
  %v113 = vand.u32 %v28, 4294901760
  %114 = vmatprep.subr.mxu0 %v113
  %v115 = vand.u32 %v27, 4294901760
  %116 = vmatpush1.msra.mxu0 %v115
  %v117 = vand.u32 %v26, 4294901760
  %118 = vmatprep.subr.mxu0 %v117
  %v119 = vand.u32 %v25, 4294901760
  %120 = vmatpush1.msra.mxu0 %v119
  %v121 = vand.u32 %v24, 4294901760
  %122 = vmatprep.subr.mxu0 %v121
  %v123 = vand.u32 %v23, 4294901760
  %124 = vmatpush1.msra.mxu0 %v123
  %v125 = vand.u32 %v22, 4294901760
  %126 = vmatprep.subr.mxu0 %v125
  %v127 = vand.u32 %v21, 4294901760
  %128 = vmatpush1.msra.mxu0 %v127
  %129 = vmatprep.subr.mxu0 0.0
  %130 = vmatpush2.msra.mxu0 0.0
  %131 = vmatprep.subr.mxu0 0.0
  %132 = vmatpush2.msra.mxu0 0.0
  %133 = vmatprep.subr.mxu0 0.0
  %134 = vmatpush2.msra.mxu0 0.0
  %135 = vmatprep.subr.mxu0 0.0
  %136 = vmatpush2.msra.mxu0 0.0
  %137 = vmatprep.subr.mxu0 0.0
  %138 = vmatpush2.msra.mxu0 0.0
  %139 = vmatprep.subr.mxu0 0.0
  %140 = vmatpush2.msra.mxu0 0.0
  %141 = vmatprep.subr.mxu0 0.0
  %142 = vmatpush2.msra.mxu0 0.0
  %143 = vmatprep.subr.mxu0 0.0
  %144 = vmatpush2.msra.mxu0 0.0
  %145 = vmatprep.subr.mxu0 0.0
  %146 = vmatpush2.msra.mxu0 0.0
  %147 = vmatprep.subr.mxu0 0.0
  %148 = vmatpush2.msra.mxu0 0.0
  %149 = vmatprep.subr.mxu0 0.0
  %150 = vmatpush2.msra.mxu0 0.0
  %151 = vmatprep.subr.mxu0 0.0
  %152 = vmatpush2.msra.mxu0 0.0
  %153 = vmatprep.subr.mxu0 0.0
  %154 = vmatpush2.msra.mxu0 0.0
  %155 = vmatprep.subr.mxu0 0.0
  %156 = vmatpush2.msra.mxu0 0.0
  %157 = vmatprep.subr.mxu0 0.0
  %158 = vmatpush2.msra.mxu0 0.0
  %159 = vmatprep.subr.mxu0 0.0
  %160 = vmatpush2.msra.mxu0 0.0
  %161 = vmatprep.mubr.f32.mxu0 0.0
  %v162 = vand.u32 %v20, 4294901760
  %v163 = vsub.f32 %v20, %v162
  %v164 = vand.u32 %v163, 4294901760
  %v165 = vsub.f32 %v163, %v164
  %v166 = vand.u32 %v165, 4294901760
  %167 = vmatmul.mubr.f32.gmra.mxu0 %v166
  %v168 = vpop.f32.mrf.mxu0
  %v169 = vadd.f32 %v58, %v168
  %v170 = vpop.f32.mrf.mxu0
  %v171 = vadd.f32 %v62, %v170
  %172 = vdwg.mxu0
  %v173 = vand.u32 %v52, 4294901760
  %v174 = vsub.f32 %v52, %v173
  %v175 = vand.u32 %v174, 4294901760
  %v176 = vsub.f32 %v174, %v175
  %v177 = vand.u32 %v176, 4294901760
  %178 = vmatprep.subr.mxu0 %v177
  %v179 = vand.u32 %v51, 4294901760
  %v180 = vsub.f32 %v51, %v179
  %v181 = vand.u32 %v180, 4294901760
  %v182 = vsub.f32 %v180, %v181
  %v183 = vand.u32 %v182, 4294901760
  %184 = vmatpush1.msra.mxu0 %v183
  %v185 = vand.u32 %v50, 4294901760
  %v186 = vsub.f32 %v50, %v185
  %v187 = vand.u32 %v186, 4294901760
  %v188 = vsub.f32 %v186, %v187
  %v189 = vand.u32 %v188, 4294901760
  %190 = vmatprep.subr.mxu0 %v189
  %v191 = vand.u32 %v49, 4294901760
  %v192 = vsub.f32 %v49, %v191
  %v193 = vand.u32 %v192, 4294901760
  %v194 = vsub.f32 %v192, %v193
  %v195 = vand.u32 %v194, 4294901760
  %196 = vmatpush1.msra.mxu0 %v195
  %v197 = vand.u32 %v48, 4294901760
  %v198 = vsub.f32 %v48, %v197
  %v199 = vand.u32 %v198, 4294901760
  %v200 = vsub.f32 %v198, %v199
  %v201 = vand.u32 %v200, 4294901760
  %202 = vmatprep.subr.mxu0 %v201
  %v203 = vand.u32 %v47, 4294901760
  %v204 = vsub.f32 %v47, %v203
  %v205 = vand.u32 %v204, 4294901760
  %v206 = vsub.f32 %v204, %v205
  %v207 = vand.u32 %v206, 4294901760
  %208 = vmatpush1.msra.mxu0 %v207
  %v209 = vand.u32 %v46, 4294901760
  %v210 = vsub.f32 %v46, %v209
  %v211 = vand.u32 %v210, 4294901760
  %v212 = vsub.f32 %v210, %v211
  %v213 = vand.u32 %v212, 4294901760
  %214 = vmatprep.subr.mxu0 %v213
  %v215 = vand.u32 %v45, 4294901760
  %v216 = vsub.f32 %v45, %v215
  %v217 = vand.u32 %v216, 4294901760
  %v218 = vsub.f32 %v216, %v217
  %v219 = vand.u32 %v218, 4294901760
  %220 = vmatpush1.msra.mxu0 %v219
  %v221 = vand.u32 %v44, 4294901760
  %v222 = vsub.f32 %v44, %v221
  %v223 = vand.u32 %v222, 4294901760
  %v224 = vsub.f32 %v222, %v223
  %v225 = vand.u32 %v224, 4294901760
  %226 = vmatprep.subr.mxu0 %v225
  %v227 = vand.u32 %v43, 4294901760
  %v228 = vsub.f32 %v43, %v227
  %v229 = vand.u32 %v228, 4294901760
  %v230 = vsub.f32 %v228, %v229
  %v231 = vand.u32 %v230, 4294901760
  %232 = vmatpush1.msra.mxu0 %v231
  %v233 = vand.u32 %v42, 4294901760
  %v234 = vsub.f32 %v42, %v233
  %v235 = vand.u32 %v234, 4294901760
  %v236 = vsub.f32 %v234, %v235
  %v237 = vand.u32 %v236, 4294901760
  %238 = vmatprep.subr.mxu0 %v237
  %v239 = vand.u32 %v41, 4294901760
  %v240 = vsub.f32 %v41, %v239
  %v241 = vand.u32 %v240, 4294901760
  %v242 = vsub.f32 %v240, %v241
  %v243 = vand.u32 %v242, 4294901760
  %244 = vmatpush1.msra.mxu0 %v243
  %v245 = vand.u32 %v40, 4294901760
  %v246 = vsub.f32 %v40, %v245
  %v247 = vand.u32 %v246, 4294901760
  %v248 = vsub.f32 %v246, %v247
  %v249 = vand.u32 %v248, 4294901760
  %250 = vmatprep.subr.mxu0 %v249
  %v251 = vand.u32 %v39, 4294901760
  %v252 = vsub.f32 %v39, %v251
  %v253 = vand.u32 %v252, 4294901760
  %v254 = vsub.f32 %v252, %v253
  %v255 = vand.u32 %v254, 4294901760
  %256 = vmatpush1.msra.mxu0 %v255
  %v257 = vand.u32 %v38, 4294901760
  %v258 = vsub.f32 %v38, %v257
  %v259 = vand.u32 %v258, 4294901760
  %v260 = vsub.f32 %v258, %v259
  %v261 = vand.u32 %v260, 4294901760
  %262 = vmatprep.subr.mxu0 %v261
  %v263 = vand.u32 %v37, 4294901760
  %v264 = vsub.f32 %v37, %v263
  %v265 = vand.u32 %v264, 4294901760
  %v266 = vsub.f32 %v264, %v265
  %v267 = vand.u32 %v266, 4294901760
  %268 = vmatpush1.msra.mxu0 %v267
  %v269 = vand.u32 %v36, 4294901760
  %v270 = vsub.f32 %v36, %v269
  %v271 = vand.u32 %v270, 4294901760
  %v272 = vsub.f32 %v270, %v271
  %v273 = vand.u32 %v272, 4294901760
  %274 = vmatprep.subr.mxu0 %v273
  %v275 = vand.u32 %v35, 4294901760
  %v276 = vsub.f32 %v35, %v275
  %v277 = vand.u32 %v276, 4294901760
  %v278 = vsub.f32 %v276, %v277
  %v279 = vand.u32 %v278, 4294901760
  %280 = vmatpush1.msra.mxu0 %v279
  %v281 = vand.u32 %v34, 4294901760
  %v282 = vsub.f32 %v34, %v281
  %v283 = vand.u32 %v282, 4294901760
  %v284 = vsub.f32 %v282, %v283
  %v285 = vand.u32 %v284, 4294901760
  %286 = vmatprep.subr.mxu0 %v285
  %v287 = vand.u32 %v33, 4294901760
  %v288 = vsub.f32 %v33, %v287
  %v289 = vand.u32 %v288, 4294901760
  %v290 = vsub.f32 %v288, %v289
  %v291 = vand.u32 %v290, 4294901760
  %292 = vmatpush1.msra.mxu0 %v291
  %v293 = vand.u32 %v32, 4294901760
  %v294 = vsub.f32 %v32, %v293
  %v295 = vand.u32 %v294, 4294901760
  %v296 = vsub.f32 %v294, %v295
  %v297 = vand.u32 %v296, 4294901760
  %298 = vmatprep.subr.mxu0 %v297
  %v299 = vand.u32 %v31, 4294901760
  %v300 = vsub.f32 %v31, %v299
  %v301 = vand.u32 %v300, 4294901760
  %v302 = vsub.f32 %v300, %v301
  %v303 = vand.u32 %v302, 4294901760
  %304 = vmatpush1.msra.mxu0 %v303
  %v305 = vand.u32 %v30, 4294901760
  %v306 = vsub.f32 %v30, %v305
  %v307 = vand.u32 %v306, 4294901760
  %v308 = vsub.f32 %v306, %v307
  %v309 = vand.u32 %v308, 4294901760
  %310 = vmatprep.subr.mxu0 %v309
  %v311 = vand.u32 %v29, 4294901760
  %v312 = vsub.f32 %v29, %v311
  %v313 = vand.u32 %v312, 4294901760
  %v314 = vsub.f32 %v312, %v313
  %v315 = vand.u32 %v314, 4294901760
  %316 = vmatpush1.msra.mxu0 %v315
  %v317 = vand.u32 %v28, 4294901760
  %v318 = vsub.f32 %v28, %v317
  %v319 = vand.u32 %v318, 4294901760
  %v320 = vsub.f32 %v318, %v319
  %v321 = vand.u32 %v320, 4294901760
  %322 = vmatprep.subr.mxu0 %v321
  %v323 = vand.u32 %v27, 4294901760
  %v324 = vsub.f32 %v27, %v323
  %v325 = vand.u32 %v324, 4294901760
  %v326 = vsub.f32 %v324, %v325
  %v327 = vand.u32 %v326, 4294901760
  %328 = vmatpush1.msra.mxu0 %v327
  %v329 = vand.u32 %v26, 4294901760
  %v330 = vsub.f32 %v26, %v329
  %v331 = vand.u32 %v330, 4294901760
  %v332 = vsub.f32 %v330, %v331
  %v333 = vand.u32 %v332, 4294901760
  %334 = vmatprep.subr.mxu0 %v333
  %v335 = vand.u32 %v25, 4294901760
  %v336 = vsub.f32 %v25, %v335
  %v337 = vand.u32 %v336, 4294901760
  %v338 = vsub.f32 %v336, %v337
  %v339 = vand.u32 %v338, 4294901760
  %340 = vmatpush1.msra.mxu0 %v339
  %v341 = vand.u32 %v24, 4294901760
  %v342 = vsub.f32 %v24, %v341
  %v343 = vand.u32 %v342, 4294901760
  %v344 = vsub.f32 %v342, %v343
  %v345 = vand.u32 %v344, 4294901760
  %346 = vmatprep.subr.mxu0 %v345
  %v347 = vand.u32 %v23, 4294901760
  %v348 = vsub.f32 %v23, %v347
  %v349 = vand.u32 %v348, 4294901760
  %v350 = vsub.f32 %v348, %v349
  %v351 = vand.u32 %v350, 4294901760
  %352 = vmatpush1.msra.mxu0 %v351
  %v353 = vand.u32 %v22, 4294901760
  %v354 = vsub.f32 %v22, %v353
  %v355 = vand.u32 %v354, 4294901760
  %v356 = vsub.f32 %v354, %v355
  %v357 = vand.u32 %v356, 4294901760
  %358 = vmatprep.subr.mxu0 %v357
  %v359 = vand.u32 %v21, 4294901760
  %v360 = vsub.f32 %v21, %v359
  %v361 = vand.u32 %v360, 4294901760
  %v362 = vsub.f32 %v360, %v361
  %v363 = vand.u32 %v362, 4294901760
  %364 = vmatpush1.msra.mxu0 %v363
  %365 = vmatprep.subr.mxu0 0.0
  %366 = vmatpush2.msra.mxu0 0.0
  %367 = vmatprep.subr.mxu0 0.0
  %368 = vmatpush2.msra.mxu0 0.0
  %369 = vmatprep.subr.mxu0 0.0
  %370 = vmatpush2.msra.mxu0 0.0
  %371 = vmatprep.subr.mxu0 0.0
  %372 = vmatpush2.msra.mxu0 0.0
  %373 = vmatprep.subr.mxu0 0.0
  %374 = vmatpush2.msra.mxu0 0.0
  %375 = vmatprep.subr.mxu0 0.0
  %376 = vmatpush2.msra.mxu0 0.0
  %377 = vmatprep.subr.mxu0 0.0
  %378 = vmatpush2.msra.mxu0 0.0
  %379 = vmatprep.subr.mxu0 0.0
  %380 = vmatpush2.msra.mxu0 0.0
  %381 = vmatprep.subr.mxu0 0.0
  %382 = vmatpush2.msra.mxu0 0.0
  %383 = vmatprep.subr.mxu0 0.0
  %384 = vmatpush2.msra.mxu0 0.0
  %385 = vmatprep.subr.mxu0 0.0
  %386 = vmatpush2.msra.mxu0 0.0
  %387 = vmatprep.subr.mxu0 0.0
  %388 = vmatpush2.msra.mxu0 0.0
  %389 = vmatprep.subr.mxu0 0.0
  %390 = vmatpush2.msra.mxu0 0.0
  %391 = vmatprep.subr.mxu0 0.0
  %392 = vmatpush2.msra.mxu0 0.0
  %393 = vmatprep.subr.mxu0 0.0
  %394 = vmatpush2.msra.mxu0 0.0
  %395 = vmatprep.subr.mxu0 0.0
  %396 = vmatpush2.msra.mxu0 0.0
  %397 = vmatprep.mubr.f32.mxu0 0.0
  %v398 = vand.u32 %v20, 4294901760
  %399 = vmatmul.mubr.f32.gmra.mxu0 %v398
  %v400 = vpop.f32.mrf.mxu0
  %v401 = vadd.f32 %v169, %v400
  %v402 = vpop.f32.mrf.mxu0
  %v403 = vadd.f32 %v171, %v402
  %404 = vdwg.mxu0
  %v405 = vand.u32 %v52, 4294901760
  %v406 = vsub.f32 %v52, %v405
  %407 = vmatprep.subr.mxu0 %v406
  %v408 = vand.u32 %v51, 4294901760
  %v409 = vsub.f32 %v51, %v408
  %410 = vmatpush1.msra.mxu0 %v409
  %v411 = vand.u32 %v50, 4294901760
  %v412 = vsub.f32 %v50, %v411
  %413 = vmatprep.subr.mxu0 %v412
  %v414 = vand.u32 %v49, 4294901760
  %v415 = vsub.f32 %v49, %v414
  %416 = vmatpush1.msra.mxu0 %v415
  %v417 = vand.u32 %v48, 4294901760
  %v418 = vsub.f32 %v48, %v417
  %419 = vmatprep.subr.mxu0 %v418
  %v420 = vand.u32 %v47, 4294901760
  %v421 = vsub.f32 %v47, %v420
  %422 = vmatpush1.msra.mxu0 %v421
  %v423 = vand.u32 %v46, 4294901760
  %v424 = vsub.f32 %v46, %v423
  %425 = vmatprep.subr.mxu0 %v424
  %v426 = vand.u32 %v45, 4294901760
  %v427 = vsub.f32 %v45, %v426
  %428 = vmatpush1.msra.mxu0 %v427
  %v429 = vand.u32 %v44, 4294901760
  %v430 = vsub.f32 %v44, %v429
  %431 = vmatprep.subr.mxu0 %v430
  %v432 = vand.u32 %v43, 4294901760
  %v433 = vsub.f32 %v43, %v432
  %434 = vmatpush1.msra.mxu0 %v433
  %v435 = vand.u32 %v42, 4294901760
  %v436 = vsub.f32 %v42, %v435
  %437 = vmatprep.subr.mxu0 %v436
  %v438 = vand.u32 %v41, 4294901760
  %v439 = vsub.f32 %v41, %v438
  %440 = vmatpush1.msra.mxu0 %v439
  %v441 = vand.u32 %v40, 4294901760
  %v442 = vsub.f32 %v40, %v441
  %443 = vmatprep.subr.mxu0 %v442
  %v444 = vand.u32 %v39, 4294901760
  %v445 = vsub.f32 %v39, %v444
  %446 = vmatpush1.msra.mxu0 %v445
  %v447 = vand.u32 %v38, 4294901760
  %v448 = vsub.f32 %v38, %v447
  %449 = vmatprep.subr.mxu0 %v448
  %v450 = vand.u32 %v37, 4294901760
  %v451 = vsub.f32 %v37, %v450
  %452 = vmatpush1.msra.mxu0 %v451
  %v453 = vand.u32 %v36, 4294901760
  %v454 = vsub.f32 %v36, %v453
  %455 = vmatprep.subr.mxu0 %v454
  %v456 = vand.u32 %v35, 4294901760
  %v457 = vsub.f32 %v35, %v456
  %458 = vmatpush1.msra.mxu0 %v457
  %v459 = vand.u32 %v34, 4294901760
  %v460 = vsub.f32 %v34, %v459
  %461 = vmatprep.subr.mxu0 %v460
  %v462 = vand.u32 %v33, 4294901760
  %v463 = vsub.f32 %v33, %v462
  %464 = vmatpush1.msra.mxu0 %v463
  %v465 = vand.u32 %v32, 4294901760
  %v466 = vsub.f32 %v32, %v465
  %467 = vmatprep.subr.mxu0 %v466
  %v468 = vand.u32 %v31, 4294901760
  %v469 = vsub.f32 %v31, %v468
  %470 = vmatpush1.msra.mxu0 %v469
  %v471 = vand.u32 %v30, 4294901760
  %v472 = vsub.f32 %v30, %v471
  %473 = vmatprep.subr.mxu0 %v472
  %v474 = vand.u32 %v29, 4294901760
  %v475 = vsub.f32 %v29, %v474
  %476 = vmatpush1.msra.mxu0 %v475
  %v477 = vand.u32 %v28, 4294901760
  %v478 = vsub.f32 %v28, %v477
  %479 = vmatprep.subr.mxu0 %v478
  %v480 = vand.u32 %v27, 4294901760
  %v481 = vsub.f32 %v27, %v480
  %482 = vmatpush1.msra.mxu0 %v481
  %v483 = vand.u32 %v26, 4294901760
  %v484 = vsub.f32 %v26, %v483
  %485 = vmatprep.subr.mxu0 %v484
  %v486 = vand.u32 %v25, 4294901760
  %v487 = vsub.f32 %v25, %v486
  %488 = vmatpush1.msra.mxu0 %v487
  %v489 = vand.u32 %v24, 4294901760
  %v490 = vsub.f32 %v24, %v489
  %491 = vmatprep.subr.mxu0 %v490
  %v492 = vand.u32 %v23, 4294901760
  %v493 = vsub.f32 %v23, %v492
  %494 = vmatpush1.msra.mxu0 %v493
  %v495 = vand.u32 %v22, 4294901760
  %v496 = vsub.f32 %v22, %v495
  %497 = vmatprep.subr.mxu0 %v496
  %v498 = vand.u32 %v21, 4294901760
  %v499 = vsub.f32 %v21, %v498
  %500 = vmatpush1.msra.mxu0 %v499
  %501 = vmatprep.subr.mxu0 0.0
  %502 = vmatpush2.msra.mxu0 0.0
  %503 = vmatprep.subr.mxu0 0.0
  %504 = vmatpush2.msra.mxu0 0.0
  %505 = vmatprep.subr.mxu0 0.0
  %506 = vmatpush2.msra.mxu0 0.0
  %507 = vmatprep.subr.mxu0 0.0
  %508 = vmatpush2.msra.mxu0 0.0
  %509 = vmatprep.subr.mxu0 0.0
  %510 = vmatpush2.msra.mxu0 0.0
  %511 = vmatprep.subr.mxu0 0.0
  %512 = vmatpush2.msra.mxu0 0.0
  %513 = vmatprep.subr.mxu0 0.0
  %514 = vmatpush2.msra.mxu0 0.0
  %515 = vmatprep.subr.mxu0 0.0
  %516 = vmatpush2.msra.mxu0 0.0
  %517 = vmatprep.subr.mxu0 0.0
  %518 = vmatpush2.msra.mxu0 0.0
  %519 = vmatprep.subr.mxu0 0.0
  %520 = vmatpush2.msra.mxu0 0.0
  %521 = vmatprep.subr.mxu0 0.0
  %522 = vmatpush2.msra.mxu0 0.0
  %523 = vmatprep.subr.mxu0 0.0
  %524 = vmatpush2.msra.mxu0 0.0
  %525 = vmatprep.subr.mxu0 0.0
  %526 = vmatpush2.msra.mxu0 0.0
  %527 = vmatprep.subr.mxu0 0.0
  %528 = vmatpush2.msra.mxu0 0.0
  %529 = vmatprep.subr.mxu0 0.0
  %530 = vmatpush2.msra.mxu0 0.0
  %531 = vmatprep.subr.mxu0 0.0
  %532 = vmatpush2.msra.mxu0 0.0
  %533 = vmatprep.mubr.f32.mxu0 0.0
  %v534 = vand.u32 %v20, 4294901760
  %v535 = vsub.f32 %v20, %v534
  %536 = vmatmul.mubr.f32.gmra.mxu0 %v535
  %v537 = vpop.f32.mrf.mxu0
  %v538 = vadd.f32 %v401, %v537
  %v539 = vpop.f32.mrf.mxu0
  %v540 = vadd.f32 %v403, %v539
  %541 = vdwg.mxu0
  %v542 = vand.u32 %v52, 4294901760
  %543 = vmatprep.subr.mxu0 %v542
  %v544 = vand.u32 %v51, 4294901760
  %545 = vmatpush1.msra.mxu0 %v544
  %v546 = vand.u32 %v50, 4294901760
  %547 = vmatprep.subr.mxu0 %v546
  %v548 = vand.u32 %v49, 4294901760
  %549 = vmatpush1.msra.mxu0 %v548
  %v550 = vand.u32 %v48, 4294901760
  %551 = vmatprep.subr.mxu0 %v550
  %v552 = vand.u32 %v47, 4294901760
  %553 = vmatpush1.msra.mxu0 %v552
  %v554 = vand.u32 %v46, 4294901760
  %555 = vmatprep.subr.mxu0 %v554
  %v556 = vand.u32 %v45, 4294901760
  %557 = vmatpush1.msra.mxu0 %v556
  %v558 = vand.u32 %v44, 4294901760
  %559 = vmatprep.subr.mxu0 %v558
  %v560 = vand.u32 %v43, 4294901760
  %561 = vmatpush1.msra.mxu0 %v560
  %v562 = vand.u32 %v42, 4294901760
  %563 = vmatprep.subr.mxu0 %v562
  %v564 = vand.u32 %v41, 4294901760
  %565 = vmatpush1.msra.mxu0 %v564
  %v566 = vand.u32 %v40, 4294901760
  %567 = vmatprep.subr.mxu0 %v566
  %v568 = vand.u32 %v39, 4294901760
  %569 = vmatpush1.msra.mxu0 %v568
  %v570 = vand.u32 %v38, 4294901760
  %571 = vmatprep.subr.mxu0 %v570
  %v572 = vand.u32 %v37, 4294901760
  %573 = vmatpush1.msra.mxu0 %v572
  %v574 = vand.u32 %v36, 4294901760
  %575 = vmatprep.subr.mxu0 %v574
  %v576 = vand.u32 %v35, 4294901760
  %577 = vmatpush1.msra.mxu0 %v576
  %v578 = vand.u32 %v34, 4294901760
  %579 = vmatprep.subr.mxu0 %v578
  %v580 = vand.u32 %v33, 4294901760
  %581 = vmatpush1.msra.mxu0 %v580
  %v582 = vand.u32 %v32, 4294901760
  %583 = vmatprep.subr.mxu0 %v582
  %v584 = vand.u32 %v31, 4294901760
  %585 = vmatpush1.msra.mxu0 %v584
  %v586 = vand.u32 %v30, 4294901760
  %587 = vmatprep.subr.mxu0 %v586
  %v588 = vand.u32 %v29, 4294901760
  %589 = vmatpush1.msra.mxu0 %v588
  %v590 = vand.u32 %v28, 4294901760
  %591 = vmatprep.subr.mxu0 %v590
  %v592 = vand.u32 %v27, 4294901760
  %593 = vmatpush1.msra.mxu0 %v592
  %v594 = vand.u32 %v26, 4294901760
  %595 = vmatprep.subr.mxu0 %v594
  %v596 = vand.u32 %v25, 4294901760
  %597 = vmatpush1.msra.mxu0 %v596
  %v598 = vand.u32 %v24, 4294901760
  %599 = vmatprep.subr.mxu0 %v598
  %v600 = vand.u32 %v23, 4294901760
  %601 = vmatpush1.msra.mxu0 %v600
  %v602 = vand.u32 %v22, 4294901760
  %603 = vmatprep.subr.mxu0 %v602
  %v604 = vand.u32 %v21, 4294901760
  %605 = vmatpush1.msra.mxu0 %v604
  %606 = vmatprep.subr.mxu0 0.0
  %607 = vmatpush2.msra.mxu0 0.0
  %608 = vmatprep.subr.mxu0 0.0
  %609 = vmatpush2.msra.mxu0 0.0
  %610 = vmatprep.subr.mxu0 0.0
  %611 = vmatpush2.msra.mxu0 0.0
  %612 = vmatprep.subr.mxu0 0.0
  %613 = vmatpush2.msra.mxu0 0.0
  %614 = vmatprep.subr.mxu0 0.0
  %615 = vmatpush2.msra.mxu0 0.0
  %616 = vmatprep.subr.mxu0 0.0
  %617 = vmatpush2.msra.mxu0 0.0
  %618 = vmatprep.subr.mxu0 0.0
  %619 = vmatpush2.msra.mxu0 0.0
  %620 = vmatprep.subr.mxu0 0.0
  %621 = vmatpush2.msra.mxu0 0.0
  %622 = vmatprep.subr.mxu0 0.0
  %623 = vmatpush2.msra.mxu0 0.0
  %624 = vmatprep.subr.mxu0 0.0
  %625 = vmatpush2.msra.mxu0 0.0
  %626 = vmatprep.subr.mxu0 0.0
  %627 = vmatpush2.msra.mxu0 0.0
  %628 = vmatprep.subr.mxu0 0.0
  %629 = vmatpush2.msra.mxu0 0.0
  %630 = vmatprep.subr.mxu0 0.0
  %631 = vmatpush2.msra.mxu0 0.0
  %632 = vmatprep.subr.mxu0 0.0
  %633 = vmatpush2.msra.mxu0 0.0
  %634 = vmatprep.subr.mxu0 0.0
  %635 = vmatpush2.msra.mxu0 0.0
  %636 = vmatprep.subr.mxu0 0.0
  %637 = vmatpush2.msra.mxu0 0.0
  %638 = vmatprep.mubr.f32.mxu0 0.0
  %v639 = vand.u32 %v20, 4294901760
  %v640 = vsub.f32 %v20, %v639
  %v641 = vand.u32 %v640, 4294901760
  %642 = vmatmul.mubr.f32.gmra.mxu0 %v641
  %v643 = vpop.f32.mrf.mxu0
  %v644 = vadd.f32 %v538, %v643
  %v645 = vpop.f32.mrf.mxu0
  %v646 = vadd.f32 %v540, %v645
  %647 = vdwg.mxu0
  %v648 = vand.u32 %v52, 4294901760
  %v649 = vsub.f32 %v52, %v648
  %v650 = vand.u32 %v649, 4294901760
  %651 = vmatprep.subr.mxu0 %v650
  %v652 = vand.u32 %v51, 4294901760
  %v653 = vsub.f32 %v51, %v652
  %v654 = vand.u32 %v653, 4294901760
  %655 = vmatpush1.msra.mxu0 %v654
  %v656 = vand.u32 %v50, 4294901760
  %v657 = vsub.f32 %v50, %v656
  %v658 = vand.u32 %v657, 4294901760
  %659 = vmatprep.subr.mxu0 %v658
  %v660 = vand.u32 %v49, 4294901760
  %v661 = vsub.f32 %v49, %v660
  %v662 = vand.u32 %v661, 4294901760
  %663 = vmatpush1.msra.mxu0 %v662
  %v664 = vand.u32 %v48, 4294901760
  %v665 = vsub.f32 %v48, %v664
  %v666 = vand.u32 %v665, 4294901760
  %667 = vmatprep.subr.mxu0 %v666
  %v668 = vand.u32 %v47, 4294901760
  %v669 = vsub.f32 %v47, %v668
  %v670 = vand.u32 %v669, 4294901760
  %671 = vmatpush1.msra.mxu0 %v670
  %v672 = vand.u32 %v46, 4294901760
  %v673 = vsub.f32 %v46, %v672
  %v674 = vand.u32 %v673, 4294901760
  %675 = vmatprep.subr.mxu0 %v674
  %v676 = vand.u32 %v45, 4294901760
  %v677 = vsub.f32 %v45, %v676
  %v678 = vand.u32 %v677, 4294901760
  %679 = vmatpush1.msra.mxu0 %v678
  %v680 = vand.u32 %v44, 4294901760
  %v681 = vsub.f32 %v44, %v680
  %v682 = vand.u32 %v681, 4294901760
  %683 = vmatprep.subr.mxu0 %v682
  %v684 = vand.u32 %v43, 4294901760
  %v685 = vsub.f32 %v43, %v684
  %v686 = vand.u32 %v685, 4294901760
  %687 = vmatpush1.msra.mxu0 %v686
  %v688 = vand.u32 %v42, 4294901760
  %v689 = vsub.f32 %v42, %v688
  %v690 = vand.u32 %v689, 4294901760
  %691 = vmatprep.subr.mxu0 %v690
  %v692 = vand.u32 %v41, 4294901760
  %v693 = vsub.f32 %v41, %v692
  %v694 = vand.u32 %v693, 4294901760
  %695 = vmatpush1.msra.mxu0 %v694
  %v696 = vand.u32 %v40, 4294901760
  %v697 = vsub.f32 %v40, %v696
  %v698 = vand.u32 %v697, 4294901760
  %699 = vmatprep.subr.mxu0 %v698
  %v700 = vand.u32 %v39, 4294901760
  %v701 = vsub.f32 %v39, %v700
  %v702 = vand.u32 %v701, 4294901760
  %703 = vmatpush1.msra.mxu0 %v702
  %v704 = vand.u32 %v38, 4294901760
  %v705 = vsub.f32 %v38, %v704
  %v706 = vand.u32 %v705, 4294901760
  %707 = vmatprep.subr.mxu0 %v706
  %v708 = vand.u32 %v37, 4294901760
  %v709 = vsub.f32 %v37, %v708
  %v710 = vand.u32 %v709, 4294901760
  %711 = vmatpush1.msra.mxu0 %v710
  %v712 = vand.u32 %v36, 4294901760
  %v713 = vsub.f32 %v36, %v712
  %v714 = vand.u32 %v713, 4294901760
  %715 = vmatprep.subr.mxu0 %v714
  %v716 = vand.u32 %v35, 4294901760
  %v717 = vsub.f32 %v35, %v716
  %v718 = vand.u32 %v717, 4294901760
  %719 = vmatpush1.msra.mxu0 %v718
  %v720 = vand.u32 %v34, 4294901760
  %v721 = vsub.f32 %v34, %v720
  %v722 = vand.u32 %v721, 4294901760
  %723 = vmatprep.subr.mxu0 %v722
  %v724 = vand.u32 %v33, 4294901760
  %v725 = vsub.f32 %v33, %v724
  %v726 = vand.u32 %v725, 4294901760
  %727 = vmatpush1.msra.mxu0 %v726
  %v728 = vand.u32 %v32, 4294901760
  %v729 = vsub.f32 %v32, %v728
  %v730 = vand.u32 %v729, 4294901760
  %731 = vmatprep.subr.mxu0 %v730
  %v732 = vand.u32 %v31, 4294901760
  %v733 = vsub.f32 %v31, %v732
  %v734 = vand.u32 %v733, 4294901760
  %735 = vmatpush1.msra.mxu0 %v734
  %v736 = vand.u32 %v30, 4294901760
  %v737 = vsub.f32 %v30, %v736
  %v738 = vand.u32 %v737, 4294901760
  %739 = vmatprep.subr.mxu0 %v738
  %v740 = vand.u32 %v29, 4294901760
  %v741 = vsub.f32 %v29, %v740
  %v742 = vand.u32 %v741, 4294901760
  %743 = vmatpush1.msra.mxu0 %v742
  %v744 = vand.u32 %v28, 4294901760
  %v745 = vsub.f32 %v28, %v744
  %v746 = vand.u32 %v745, 4294901760
  %747 = vmatprep.subr.mxu0 %v746
  %v748 = vand.u32 %v27, 4294901760
  %v749 = vsub.f32 %v27, %v748
  %v750 = vand.u32 %v749, 4294901760
  %751 = vmatpush1.msra.mxu0 %v750
  %v752 = vand.u32 %v26, 4294901760
  %v753 = vsub.f32 %v26, %v752
  %v754 = vand.u32 %v753, 4294901760
  %755 = vmatprep.subr.mxu0 %v754
  %v756 = vand.u32 %v25, 4294901760
  %v757 = vsub.f32 %v25, %v756
  %v758 = vand.u32 %v757, 4294901760
  %759 = vmatpush1.msra.mxu0 %v758
  %v760 = vand.u32 %v24, 4294901760
  %v761 = vsub.f32 %v24, %v760
  %v762 = vand.u32 %v761, 4294901760
  %763 = vmatprep.subr.mxu0 %v762
  %v764 = vand.u32 %v23, 4294901760
  %v765 = vsub.f32 %v23, %v764
  %v766 = vand.u32 %v765, 4294901760
  %767 = vmatpush1.msra.mxu0 %v766
  %v768 = vand.u32 %v22, 4294901760
  %v769 = vsub.f32 %v22, %v768
  %v770 = vand.u32 %v769, 4294901760
  %771 = vmatprep.subr.mxu0 %v770
  %v772 = vand.u32 %v21, 4294901760
  %v773 = vsub.f32 %v21, %v772
  %v774 = vand.u32 %v773, 4294901760
  %775 = vmatpush1.msra.mxu0 %v774
  %776 = vmatprep.subr.mxu0 0.0
  %777 = vmatpush2.msra.mxu0 0.0
  %778 = vmatprep.subr.mxu0 0.0
  %779 = vmatpush2.msra.mxu0 0.0
  %780 = vmatprep.subr.mxu0 0.0
  %781 = vmatpush2.msra.mxu0 0.0
  %782 = vmatprep.subr.mxu0 0.0
  %783 = vmatpush2.msra.mxu0 0.0
  %784 = vmatprep.subr.mxu0 0.0
  %785 = vmatpush2.msra.mxu0 0.0
  %786 = vmatprep.subr.mxu0 0.0
  %787 = vmatpush2.msra.mxu0 0.0
  %788 = vmatprep.subr.mxu0 0.0
  %789 = vmatpush2.msra.mxu0 0.0
  %790 = vmatprep.subr.mxu0 0.0
  %791 = vmatpush2.msra.mxu0 0.0
  %792 = vmatprep.subr.mxu0 0.0
  %793 = vmatpush2.msra.mxu0 0.0
  %794 = vmatprep.subr.mxu0 0.0
  %795 = vmatpush2.msra.mxu0 0.0
  %796 = vmatprep.subr.mxu0 0.0
  %797 = vmatpush2.msra.mxu0 0.0
  %798 = vmatprep.subr.mxu0 0.0
  %799 = vmatpush2.msra.mxu0 0.0
  %800 = vmatprep.subr.mxu0 0.0
  %801 = vmatpush2.msra.mxu0 0.0
  %802 = vmatprep.subr.mxu0 0.0
  %803 = vmatpush2.msra.mxu0 0.0
  %804 = vmatprep.subr.mxu0 0.0
  %805 = vmatpush2.msra.mxu0 0.0
  %806 = vmatprep.subr.mxu0 0.0
  %807 = vmatpush2.msra.mxu0 0.0
  %808 = vmatprep.mubr.f32.mxu0 0.0
  %v809 = vand.u32 %v20, 4294901760
  %810 = vmatmul.mubr.f32.gmra.mxu0 %v809
  %v811 = vpop.f32.mrf.mxu0
  %v812 = vadd.f32 %v644, %v811
  %v813 = vpop.f32.mrf.mxu0
  %v814 = vadd.f32 %v646, %v813
  %815 = vdwg.mxu0
  %v816 = vand.u32 %v52, 4294901760
  %817 = vmatprep.subr.mxu0 %v816
  %v818 = vand.u32 %v51, 4294901760
  %819 = vmatpush1.msra.mxu0 %v818
  %v820 = vand.u32 %v50, 4294901760
  %821 = vmatprep.subr.mxu0 %v820
  %v822 = vand.u32 %v49, 4294901760
  %823 = vmatpush1.msra.mxu0 %v822
  %v824 = vand.u32 %v48, 4294901760
  %825 = vmatprep.subr.mxu0 %v824
  %v826 = vand.u32 %v47, 4294901760
  %827 = vmatpush1.msra.mxu0 %v826
  %v828 = vand.u32 %v46, 4294901760
  %829 = vmatprep.subr.mxu0 %v828
  %v830 = vand.u32 %v45, 4294901760
  %831 = vmatpush1.msra.mxu0 %v830
  %v832 = vand.u32 %v44, 4294901760
  %833 = vmatprep.subr.mxu0 %v832
  %v834 = vand.u32 %v43, 4294901760
  %835 = vmatpush1.msra.mxu0 %v834
  %v836 = vand.u32 %v42, 4294901760
  %837 = vmatprep.subr.mxu0 %v836
  %v838 = vand.u32 %v41, 4294901760
  %839 = vmatpush1.msra.mxu0 %v838
  %v840 = vand.u32 %v40, 4294901760
  %841 = vmatprep.subr.mxu0 %v840
  %v842 = vand.u32 %v39, 4294901760
  %843 = vmatpush1.msra.mxu0 %v842
  %v844 = vand.u32 %v38, 4294901760
  %845 = vmatprep.subr.mxu0 %v844
  %v846 = vand.u32 %v37, 4294901760
  %847 = vmatpush1.msra.mxu0 %v846
  %v848 = vand.u32 %v36, 4294901760
  %849 = vmatprep.subr.mxu0 %v848
  %v850 = vand.u32 %v35, 4294901760
  %851 = vmatpush1.msra.mxu0 %v850
  %v852 = vand.u32 %v34, 4294901760
  %853 = vmatprep.subr.mxu0 %v852
  %v854 = vand.u32 %v33, 4294901760
  %855 = vmatpush1.msra.mxu0 %v854
  %v856 = vand.u32 %v32, 4294901760
  %857 = vmatprep.subr.mxu0 %v856
  %v858 = vand.u32 %v31, 4294901760
  %859 = vmatpush1.msra.mxu0 %v858
  %v860 = vand.u32 %v30, 4294901760
  %861 = vmatprep.subr.mxu0 %v860
  %v862 = vand.u32 %v29, 4294901760
  %863 = vmatpush1.msra.mxu0 %v862
  %v864 = vand.u32 %v28, 4294901760
  %865 = vmatprep.subr.mxu0 %v864
  %v866 = vand.u32 %v27, 4294901760
  %867 = vmatpush1.msra.mxu0 %v866
  %v868 = vand.u32 %v26, 4294901760
  %869 = vmatprep.subr.mxu0 %v868
  %v870 = vand.u32 %v25, 4294901760
  %871 = vmatpush1.msra.mxu0 %v870
  %v872 = vand.u32 %v24, 4294901760
  %873 = vmatprep.subr.mxu0 %v872
  %v874 = vand.u32 %v23, 4294901760
  %875 = vmatpush1.msra.mxu0 %v874
  %v876 = vand.u32 %v22, 4294901760
  %877 = vmatprep.subr.mxu0 %v876
  %v878 = vand.u32 %v21, 4294901760
  %879 = vmatpush1.msra.mxu0 %v878
  %880 = vmatprep.subr.mxu0 0.0
  %881 = vmatpush2.msra.mxu0 0.0
  %882 = vmatprep.subr.mxu0 0.0
  %883 = vmatpush2.msra.mxu0 0.0
  %884 = vmatprep.subr.mxu0 0.0
  %885 = vmatpush2.msra.mxu0 0.0
  %886 = vmatprep.subr.mxu0 0.0
  %887 = vmatpush2.msra.mxu0 0.0
  %888 = vmatprep.subr.mxu0 0.0
  %889 = vmatpush2.msra.mxu0 0.0
  %890 = vmatprep.subr.mxu0 0.0
  %891 = vmatpush2.msra.mxu0 0.0
  %892 = vmatprep.subr.mxu0 0.0
  %893 = vmatpush2.msra.mxu0 0.0
  %894 = vmatprep.subr.mxu0 0.0
  %895 = vmatpush2.msra.mxu0 0.0
  %896 = vmatprep.subr.mxu0 0.0
  %897 = vmatpush2.msra.mxu0 0.0
  %898 = vmatprep.subr.mxu0 0.0
  %899 = vmatpush2.msra.mxu0 0.0
  %900 = vmatprep.subr.mxu0 0.0
  %901 = vmatpush2.msra.mxu0 0.0
  %902 = vmatprep.subr.mxu0 0.0
  %903 = vmatpush2.msra.mxu0 0.0
  %904 = vmatprep.subr.mxu0 0.0
  %905 = vmatpush2.msra.mxu0 0.0
  %906 = vmatprep.subr.mxu0 0.0
  %907 = vmatpush2.msra.mxu0 0.0
  %908 = vmatprep.subr.mxu0 0.0
  %909 = vmatpush2.msra.mxu0 0.0
  %910 = vmatprep.subr.mxu0 0.0
  %911 = vmatpush2.msra.mxu0 0.0
  %912 = vmatprep.mubr.f32.mxu0 0.0
  %v913 = vand.u32 %v20, 4294901760
  %914 = vmatmul.mubr.f32.gmra.mxu0 %v913
  %v915 = vpop.f32.mrf.mxu0
  %v916 = vadd.f32 %v812, %v915
  %v917 = vpop.f32.mrf.mxu0
  %v918 = vadd.f32 %v814, %v917
  %919 = vdwg.mxu0
  %v920 = vmax.f32 %v916, 0.0
  %v921 = vmax.f32 %v918, 0.0
  %v922 = vld [vmem:[%s2] sm:$0xff]
  %v923 = vld [vmem:[%s2 + $0x8] sm:$0xff]
  %v924 = vld [vmem:[%s2 + $0x10] sm:$0xff]
  %v925 = vld [vmem:[%s2 + $0x18] sm:$0xff]
  %v926 = vld [vmem:[%s2 + $0x20] sm:$0xff]
  %v927 = vld [vmem:[%s2 + $0x28] sm:$0xff]
  %v928 = vld [vmem:[%s2 + $0x30] sm:$0xff]
  %v929 = vld [vmem:[%s2 + $0x38] sm:$0xff]
  %v930 = vld [vmem:[%s2 + $0x40] sm:$0xff]
  %v931 = vld [vmem:[%s2 + $0x48] sm:$0xff]
  %v932 = vld [vmem:[%s2 + $0x50] sm:$0xff]
  %v933 = vld [vmem:[%s2 + $0x58] sm:$0xff]
  %v934 = vld [vmem:[%s2 + $0x60] sm:$0xff]
  %v935 = vld [vmem:[%s2 + $0x68] sm:$0xff]
  %v936 = vld [vmem:[%s2 + $0x70] sm:$0xff]
  %v937 = vld [vmem:[%s2 + $0x78] sm:$0xff]
  %v938 = vld [vmem:[%s2 + $0x80] sm:$0xff]
  %v939 = vld [vmem:[%s2 + $0x88] sm:$0xff]
  %v940 = vld [vmem:[%s2 + $0x90] sm:$0xff]
  %v941 = vld [vmem:[%s2 + $0x98] sm:$0xff]
  %v942 = vld [vmem:[%s2 + $0xa0] sm:$0xff]
  %v943 = vld [vmem:[%s2 + $0xa8] sm:$0xff]
  %v944 = vld [vmem:[%s2 + $0xb0] sm:$0xff]
  %v945 = vld [vmem:[%s2 + $0xb8] sm:$0xff]
  %v946 = vld [vmem:[%s2 + $0xc0] sm:$0xff]
  %v947 = vld [vmem:[%s2 + $0xc8] sm:$0xff]
  %v948 = vld [vmem:[%s2 + $0xd0] sm:$0xff]
  %v949 = vld [vmem:[%s2 + $0xd8] sm:$0xff]
  %v950 = vld [vmem:[%s2 + $0xe0] sm:$0xff]
  %v951 = vld [vmem:[%s2 + $0xe8] sm:$0xff]
  %v952 = vld [vmem:[%s2 + $0xf0] sm:$0xff]
  %v953 = vld [vmem:[%s2 + $0xf8] sm:$0xff]
  %v954 = vld [vmem:[%s3] sm:$0x1]
  %955 = vmatprep.subr.mxu0 0.0
  %v956 = vand.u32 %v937, 4294901760
  %957 = vmatpush1.msra.mxu0 %v956
  %958 = vmatprep.subr.mxu0 0.0
  %v959 = vand.u32 %v936, 4294901760
  %960 = vmatpush1.msra.mxu0 %v959
  %961 = vmatprep.subr.mxu0 0.0
  %v962 = vand.u32 %v935, 4294901760
  %963 = vmatpush1.msra.mxu0 %v962
  %964 = vmatprep.subr.mxu0 0.0
  %v965 = vand.u32 %v934, 4294901760
  %966 = vmatpush1.msra.mxu0 %v965
  %967 = vmatprep.subr.mxu0 0.0
  %v968 = vand.u32 %v933, 4294901760
  %969 = vmatpush1.msra.mxu0 %v968
  %970 = vmatprep.subr.mxu0 0.0
  %v971 = vand.u32 %v932, 4294901760
  %972 = vmatpush1.msra.mxu0 %v971
  %973 = vmatprep.subr.mxu0 0.0
  %v974 = vand.u32 %v931, 4294901760
  %975 = vmatpush1.msra.mxu0 %v974
  %976 = vmatprep.subr.mxu0 0.0
  %v977 = vand.u32 %v930, 4294901760
  %978 = vmatpush1.msra.mxu0 %v977
  %979 = vmatprep.subr.mxu0 0.0
  %v980 = vand.u32 %v929, 4294901760
  %981 = vmatpush1.msra.mxu0 %v980
  %982 = vmatprep.subr.mxu0 0.0
  %v983 = vand.u32 %v928, 4294901760
  %984 = vmatpush1.msra.mxu0 %v983
  %985 = vmatprep.subr.mxu0 0.0
  %v986 = vand.u32 %v927, 4294901760
  %987 = vmatpush1.msra.mxu0 %v986
  %988 = vmatprep.subr.mxu0 0.0
  %v989 = vand.u32 %v926, 4294901760
  %990 = vmatpush1.msra.mxu0 %v989
  %991 = vmatprep.subr.mxu0 0.0
  %v992 = vand.u32 %v925, 4294901760
  %993 = vmatpush1.msra.mxu0 %v992
  %994 = vmatprep.subr.mxu0 0.0
  %v995 = vand.u32 %v924, 4294901760
  %996 = vmatpush1.msra.mxu0 %v995
  %997 = vmatprep.subr.mxu0 0.0
  %v998 = vand.u32 %v923, 4294901760
  %999 = vmatpush1.msra.mxu0 %v998
  %1000 = vmatprep.subr.mxu0 0.0
  %v1001 = vand.u32 %v922, 4294901760
  %1002 = vmatpush1.msra.mxu0 %v1001
  %1003 = vmatprep.subr.mxu0 0.0
  %v1004 = vand.u32 %v953, 4294901760
  %1005 = vmatpush2.msra.mxu0 %v1004
  %1006 = vmatprep.subr.mxu0 0.0
  %v1007 = vand.u32 %v952, 4294901760
  %1008 = vmatpush2.msra.mxu0 %v1007
  %1009 = vmatprep.subr.mxu0 0.0
  %v1010 = vand.u32 %v951, 4294901760
  %1011 = vmatpush2.msra.mxu0 %v1010
  %1012 = vmatprep.subr.mxu0 0.0
  %v1013 = vand.u32 %v950, 4294901760
  %1014 = vmatpush2.msra.mxu0 %v1013
  %1015 = vmatprep.subr.mxu0 0.0
  %v1016 = vand.u32 %v949, 4294901760
  %1017 = vmatpush2.msra.mxu0 %v1016
  %1018 = vmatprep.subr.mxu0 0.0
  %v1019 = vand.u32 %v948, 4294901760
  %1020 = vmatpush2.msra.mxu0 %v1019
  %1021 = vmatprep.subr.mxu0 0.0
  %v1022 = vand.u32 %v947, 4294901760
  %1023 = vmatpush2.msra.mxu0 %v1022
  %1024 = vmatprep.subr.mxu0 0.0
  %v1025 = vand.u32 %v946, 4294901760
  %1026 = vmatpush2.msra.mxu0 %v1025
  %1027 = vmatprep.subr.mxu0 0.0
  %v1028 = vand.u32 %v945, 4294901760
  %1029 = vmatpush2.msra.mxu0 %v1028
  %1030 = vmatprep.subr.mxu0 0.0
  %v1031 = vand.u32 %v944, 4294901760
  %1032 = vmatpush2.msra.mxu0 %v1031
  %1033 = vmatprep.subr.mxu0 0.0
  %v1034 = vand.u32 %v943, 4294901760
  %1035 = vmatpush2.msra.mxu0 %v1034
  %1036 = vmatprep.subr.mxu0 0.0
  %v1037 = vand.u32 %v942, 4294901760
  %1038 = vmatpush2.msra.mxu0 %v1037
  %1039 = vmatprep.subr.mxu0 0.0
  %v1040 = vand.u32 %v941, 4294901760
  %1041 = vmatpush2.msra.mxu0 %v1040
  %1042 = vmatprep.subr.mxu0 0.0
  %v1043 = vand.u32 %v940, 4294901760
  %1044 = vmatpush2.msra.mxu0 %v1043
  %1045 = vmatprep.subr.mxu0 0.0
  %v1046 = vand.u32 %v939, 4294901760
  %1047 = vmatpush2.msra.mxu0 %v1046
  %1048 = vmatprep.subr.mxu0 0.0
  %v1049 = vand.u32 %v938, 4294901760
  %1050 = vmatpush2.msra.mxu0 %v1049
  %v1051 = vand.u32 %v921, 4294901760
  %v1052 = vsub.f32 %v921, %v1051
  %v1053 = vand.u32 %v1052, 4294901760
  %v1054 = vsub.f32 %v1052, %v1053
  %v1055 = vand.u32 %v1054, 4294901760
  %1056 = vmatprep.mubr.f32.mxu0 %v1055
  %v1057 = vand.u32 %v920, 4294901760
  %v1058 = vsub.f32 %v920, %v1057
  %v1059 = vand.u32 %v1058, 4294901760
  %v1060 = vsub.f32 %v1058, %v1059
  %v1061 = vand.u32 %v1060, 4294901760
  %1062 = vmatmul.mubr.f32.gmra.mxu0 %v1061
  %v1063 = vpop.f32.mrf.mxu0
  %v1064 = vadd.f32 %v954, %v1063
  %v1065 = vpop.f32.mrf.mxu0
  %1066 = vdwg.mxu0
  %1067 = vmatprep.subr.mxu0 0.0
  %v1068 = vand.u32 %v937, 4294901760
  %v1069 = vsub.f32 %v937, %v1068
  %v1070 = vand.u32 %v1069, 4294901760
  %v1071 = vsub.f32 %v1069, %v1070
  %v1072 = vand.u32 %v1071, 4294901760
  %1073 = vmatpush1.msra.mxu0 %v1072
  %1074 = vmatprep.subr.mxu0 0.0
  %v1075 = vand.u32 %v936, 4294901760
  %v1076 = vsub.f32 %v936, %v1075
  %v1077 = vand.u32 %v1076, 4294901760
  %v1078 = vsub.f32 %v1076, %v1077
  %v1079 = vand.u32 %v1078, 4294901760
  %1080 = vmatpush1.msra.mxu0 %v1079
  %1081 = vmatprep.subr.mxu0 0.0
  %v1082 = vand.u32 %v935, 4294901760
  %v1083 = vsub.f32 %v935, %v1082
  %v1084 = vand.u32 %v1083, 4294901760
  %v1085 = vsub.f32 %v1083, %v1084
  %v1086 = vand.u32 %v1085, 4294901760
  %1087 = vmatpush1.msra.mxu0 %v1086
  %1088 = vmatprep.subr.mxu0 0.0
  %v1089 = vand.u32 %v934, 4294901760
  %v1090 = vsub.f32 %v934, %v1089
  %v1091 = vand.u32 %v1090, 4294901760
  %v1092 = vsub.f32 %v1090, %v1091
  %v1093 = vand.u32 %v1092, 4294901760
  %1094 = vmatpush1.msra.mxu0 %v1093
  %1095 = vmatprep.subr.mxu0 0.0
  %v1096 = vand.u32 %v933, 4294901760
  %v1097 = vsub.f32 %v933, %v1096
  %v1098 = vand.u32 %v1097, 4294901760
  %v1099 = vsub.f32 %v1097, %v1098
  %v1100 = vand.u32 %v1099, 4294901760
  %1101 = vmatpush1.msra.mxu0 %v1100
  %1102 = vmatprep.subr.mxu0 0.0
  %v1103 = vand.u32 %v932, 4294901760
  %v1104 = vsub.f32 %v932, %v1103
  %v1105 = vand.u32 %v1104, 4294901760
  %v1106 = vsub.f32 %v1104, %v1105
  %v1107 = vand.u32 %v1106, 4294901760
  %1108 = vmatpush1.msra.mxu0 %v1107
  %1109 = vmatprep.subr.mxu0 0.0
  %v1110 = vand.u32 %v931, 4294901760
  %v1111 = vsub.f32 %v931, %v1110
  %v1112 = vand.u32 %v1111, 4294901760
  %v1113 = vsub.f32 %v1111, %v1112
  %v1114 = vand.u32 %v1113, 4294901760
  %1115 = vmatpush1.msra.mxu0 %v1114
  %1116 = vmatprep.subr.mxu0 0.0
  %v1117 = vand.u32 %v930, 4294901760
  %v1118 = vsub.f32 %v930, %v1117
  %v1119 = vand.u32 %v1118, 4294901760
  %v1120 = vsub.f32 %v1118, %v1119
  %v1121 = vand.u32 %v1120, 4294901760
  %1122 = vmatpush1.msra.mxu0 %v1121
  %1123 = vmatprep.subr.mxu0 0.0
  %v1124 = vand.u32 %v929, 4294901760
  %v1125 = vsub.f32 %v929, %v1124
  %v1126 = vand.u32 %v1125, 4294901760
  %v1127 = vsub.f32 %v1125, %v1126
  %v1128 = vand.u32 %v1127, 4294901760
  %1129 = vmatpush1.msra.mxu0 %v1128
  %1130 = vmatprep.subr.mxu0 0.0
  %v1131 = vand.u32 %v928, 4294901760
  %v1132 = vsub.f32 %v928, %v1131
  %v1133 = vand.u32 %v1132, 4294901760
  %v1134 = vsub.f32 %v1132, %v1133
  %v1135 = vand.u32 %v1134, 4294901760
  %1136 = vmatpush1.msra.mxu0 %v1135
  %1137 = vmatprep.subr.mxu0 0.0
  %v1138 = vand.u32 %v927, 4294901760
  %v1139 = vsub.f32 %v927, %v1138
  %v1140 = vand.u32 %v1139, 4294901760
  %v1141 = vsub.f32 %v1139, %v1140
  %v1142 = vand.u32 %v1141, 4294901760
  %1143 = vmatpush1.msra.mxu0 %v1142
  %1144 = vmatprep.subr.mxu0 0.0
  %v1145 = vand.u32 %v926, 4294901760
  %v1146 = vsub.f32 %v926, %v1145
  %v1147 = vand.u32 %v1146, 4294901760
  %v1148 = vsub.f32 %v1146, %v1147
  %v1149 = vand.u32 %v1148, 4294901760
  %1150 = vmatpush1.msra.mxu0 %v1149
  %1151 = vmatprep.subr.mxu0 0.0
  %v1152 = vand.u32 %v925, 4294901760
  %v1153 = vsub.f32 %v925, %v1152
  %v1154 = vand.u32 %v1153, 4294901760
  %v1155 = vsub.f32 %v1153, %v1154
  %v1156 = vand.u32 %v1155, 4294901760
  %1157 = vmatpush1.msra.mxu0 %v1156
  %1158 = vmatprep.subr.mxu0 0.0
  %v1159 = vand.u32 %v924, 4294901760
  %v1160 = vsub.f32 %v924, %v1159
  %v1161 = vand.u32 %v1160, 4294901760
  %v1162 = vsub.f32 %v1160, %v1161
  %v1163 = vand.u32 %v1162, 4294901760
  %1164 = vmatpush1.msra.mxu0 %v1163
  %1165 = vmatprep.subr.mxu0 0.0
  %v1166 = vand.u32 %v923, 4294901760
  %v1167 = vsub.f32 %v923, %v1166
  %v1168 = vand.u32 %v1167, 4294901760
  %v1169 = vsub.f32 %v1167, %v1168
  %v1170 = vand.u32 %v1169, 4294901760
  %1171 = vmatpush1.msra.mxu0 %v1170
  %1172 = vmatprep.subr.mxu0 0.0
  %v1173 = vand.u32 %v922, 4294901760
  %v1174 = vsub.f32 %v922, %v1173
  %v1175 = vand.u32 %v1174, 4294901760
  %v1176 = vsub.f32 %v1174, %v1175
  %v1177 = vand.u32 %v1176, 4294901760
  %1178 = vmatpush1.msra.mxu0 %v1177
  %1179 = vmatprep.subr.mxu0 0.0
  %v1180 = vand.u32 %v953, 4294901760
  %v1181 = vsub.f32 %v953, %v1180
  %v1182 = vand.u32 %v1181, 4294901760
  %v1183 = vsub.f32 %v1181, %v1182
  %v1184 = vand.u32 %v1183, 4294901760
  %1185 = vmatpush2.msra.mxu0 %v1184
  %1186 = vmatprep.subr.mxu0 0.0
  %v1187 = vand.u32 %v952, 4294901760
  %v1188 = vsub.f32 %v952, %v1187
  %v1189 = vand.u32 %v1188, 4294901760
  %v1190 = vsub.f32 %v1188, %v1189
  %v1191 = vand.u32 %v1190, 4294901760
  %1192 = vmatpush2.msra.mxu0 %v1191
  %1193 = vmatprep.subr.mxu0 0.0
  %v1194 = vand.u32 %v951, 4294901760
  %v1195 = vsub.f32 %v951, %v1194
  %v1196 = vand.u32 %v1195, 4294901760
  %v1197 = vsub.f32 %v1195, %v1196
  %v1198 = vand.u32 %v1197, 4294901760
  %1199 = vmatpush2.msra.mxu0 %v1198
  %1200 = vmatprep.subr.mxu0 0.0
  %v1201 = vand.u32 %v950, 4294901760
  %v1202 = vsub.f32 %v950, %v1201
  %v1203 = vand.u32 %v1202, 4294901760
  %v1204 = vsub.f32 %v1202, %v1203
  %v1205 = vand.u32 %v1204, 4294901760
  %1206 = vmatpush2.msra.mxu0 %v1205
  %1207 = vmatprep.subr.mxu0 0.0
  %v1208 = vand.u32 %v949, 4294901760
  %v1209 = vsub.f32 %v949, %v1208
  %v1210 = vand.u32 %v1209, 4294901760
  %v1211 = vsub.f32 %v1209, %v1210
  %v1212 = vand.u32 %v1211, 4294901760
  %1213 = vmatpush2.msra.mxu0 %v1212
  %1214 = vmatprep.subr.mxu0 0.0
  %v1215 = vand.u32 %v948, 4294901760
  %v1216 = vsub.f32 %v948, %v1215
  %v1217 = vand.u32 %v1216, 4294901760
  %v1218 = vsub.f32 %v1216, %v1217
  %v1219 = vand.u32 %v1218, 4294901760
  %1220 = vmatpush2.msra.mxu0 %v1219
  %1221 = vmatprep.subr.mxu0 0.0
  %v1222 = vand.u32 %v947, 4294901760
  %v1223 = vsub.f32 %v947, %v1222
  %v1224 = vand.u32 %v1223, 4294901760
  %v1225 = vsub.f32 %v1223, %v1224
  %v1226 = vand.u32 %v1225, 4294901760
  %1227 = vmatpush2.msra.mxu0 %v1226
  %1228 = vmatprep.subr.mxu0 0.0
  %v1229 = vand.u32 %v946, 4294901760
  %v1230 = vsub.f32 %v946, %v1229
  %v1231 = vand.u32 %v1230, 4294901760
  %v1232 = vsub.f32 %v1230, %v1231
  %v1233 = vand.u32 %v1232, 4294901760
  %1234 = vmatpush2.msra.mxu0 %v1233
  %1235 = vmatprep.subr.mxu0 0.0
  %v1236 = vand.u32 %v945, 4294901760
  %v1237 = vsub.f32 %v945, %v1236
  %v1238 = vand.u32 %v1237, 4294901760
  %v1239 = vsub.f32 %v1237, %v1238
  %v1240 = vand.u32 %v1239, 4294901760
  %1241 = vmatpush2.msra.mxu0 %v1240
  %1242 = vmatprep.subr.mxu0 0.0
  %v1243 = vand.u32 %v944, 4294901760
  %v1244 = vsub.f32 %v944, %v1243
  %v1245 = vand.u32 %v1244, 4294901760
  %v1246 = vsub.f32 %v1244, %v1245
  %v1247 = vand.u32 %v1246, 4294901760
  %1248 = vmatpush2.msra.mxu0 %v1247
  %1249 = vmatprep.subr.mxu0 0.0
  %v1250 = vand.u32 %v943, 4294901760
  %v1251 = vsub.f32 %v943, %v1250
  %v1252 = vand.u32 %v1251, 4294901760
  %v1253 = vsub.f32 %v1251, %v1252
  %v1254 = vand.u32 %v1253, 4294901760
  %1255 = vmatpush2.msra.mxu0 %v1254
  %1256 = vmatprep.subr.mxu0 0.0
  %v1257 = vand.u32 %v942, 4294901760
  %v1258 = vsub.f32 %v942, %v1257
  %v1259 = vand.u32 %v1258, 4294901760
  %v1260 = vsub.f32 %v1258, %v1259
  %v1261 = vand.u32 %v1260, 4294901760
  %1262 = vmatpush2.msra.mxu0 %v1261
  %1263 = vmatprep.subr.mxu0 0.0
  %v1264 = vand.u32 %v941, 4294901760
  %v1265 = vsub.f32 %v941, %v1264
  %v1266 = vand.u32 %v1265, 4294901760
  %v1267 = vsub.f32 %v1265, %v1266
  %v1268 = vand.u32 %v1267, 4294901760
  %1269 = vmatpush2.msra.mxu0 %v1268
  %1270 = vmatprep.subr.mxu0 0.0
  %v1271 = vand.u32 %v940, 4294901760
  %v1272 = vsub.f32 %v940, %v1271
  %v1273 = vand.u32 %v1272, 4294901760
  %v1274 = vsub.f32 %v1272, %v1273
  %v1275 = vand.u32 %v1274, 4294901760
  %1276 = vmatpush2.msra.mxu0 %v1275
  %1277 = vmatprep.subr.mxu0 0.0
  %v1278 = vand.u32 %v939, 4294901760
  %v1279 = vsub.f32 %v939, %v1278
  %v1280 = vand.u32 %v1279, 4294901760
  %v1281 = vsub.f32 %v1279, %v1280
  %v1282 = vand.u32 %v1281, 4294901760
  %1283 = vmatpush2.msra.mxu0 %v1282
  %1284 = vmatprep.subr.mxu0 0.0
  %v1285 = vand.u32 %v938, 4294901760
  %v1286 = vsub.f32 %v938, %v1285
  %v1287 = vand.u32 %v1286, 4294901760
  %v1288 = vsub.f32 %v1286, %v1287
  %v1289 = vand.u32 %v1288, 4294901760
  %1290 = vmatpush2.msra.mxu0 %v1289
  %v1291 = vand.u32 %v921, 4294901760
  %1292 = vmatprep.mubr.f32.mxu0 %v1291
  %v1293 = vand.u32 %v920, 4294901760
  %1294 = vmatmul.mubr.f32.gmra.mxu0 %v1293
  %v1295 = vpop.f32.mrf.mxu0
  %v1296 = vadd.f32 %v1064, %v1295
  %v1297 = vpop.f32.mrf.mxu0
  %1298 = vdwg.mxu0
  %1299 = vmatprep.subr.mxu0 0.0
  %v1300 = vand.u32 %v937, 4294901760
  %v1301 = vsub.f32 %v937, %v1300
  %1302 = vmatpush1.msra.mxu0 %v1301
  %1303 = vmatprep.subr.mxu0 0.0
  %v1304 = vand.u32 %v936, 4294901760
  %v1305 = vsub.f32 %v936, %v1304
  %1306 = vmatpush1.msra.mxu0 %v1305
  %1307 = vmatprep.subr.mxu0 0.0
  %v1308 = vand.u32 %v935, 4294901760
  %v1309 = vsub.f32 %v935, %v1308
  %1310 = vmatpush1.msra.mxu0 %v1309
  %1311 = vmatprep.subr.mxu0 0.0
  %v1312 = vand.u32 %v934, 4294901760
  %v1313 = vsub.f32 %v934, %v1312
  %1314 = vmatpush1.msra.mxu0 %v1313
  %1315 = vmatprep.subr.mxu0 0.0
  %v1316 = vand.u32 %v933, 4294901760
  %v1317 = vsub.f32 %v933, %v1316
  %1318 = vmatpush1.msra.mxu0 %v1317
  %1319 = vmatprep.subr.mxu0 0.0
  %v1320 = vand.u32 %v932, 4294901760
  %v1321 = vsub.f32 %v932, %v1320
  %1322 = vmatpush1.msra.mxu0 %v1321
  %1323 = vmatprep.subr.mxu0 0.0
  %v1324 = vand.u32 %v931, 4294901760
  %v1325 = vsub.f32 %v931, %v1324
  %1326 = vmatpush1.msra.mxu0 %v1325
  %1327 = vmatprep.subr.mxu0 0.0
  %v1328 = vand.u32 %v930, 4294901760
  %v1329 = vsub.f32 %v930, %v1328
  %1330 = vmatpush1.msra.mxu0 %v1329
  %1331 = vmatprep.subr.mxu0 0.0
  %v1332 = vand.u32 %v929, 4294901760
  %v1333 = vsub.f32 %v929, %v1332
  %1334 = vmatpush1.msra.mxu0 %v1333
  %1335 = vmatprep.subr.mxu0 0.0
  %v1336 = vand.u32 %v928, 4294901760
  %v1337 = vsub.f32 %v928, %v1336
  %1338 = vmatpush1.msra.mxu0 %v1337
  %1339 = vmatprep.subr.mxu0 0.0
  %v1340 = vand.u32 %v927, 4294901760
  %v1341 = vsub.f32 %v927, %v1340
  %1342 = vmatpush1.msra.mxu0 %v1341
  %1343 = vmatprep.subr.mxu0 0.0
  %v1344 = vand.u32 %v926, 4294901760
  %v1345 = vsub.f32 %v926, %v1344
  %1346 = vmatpush1.msra.mxu0 %v1345
  %1347 = vmatprep.subr.mxu0 0.0
  %v1348 = vand.u32 %v925, 4294901760
  %v1349 = vsub.f32 %v925, %v1348
  %1350 = vmatpush1.msra.mxu0 %v1349
  %1351 = vmatprep.subr.mxu0 0.0
  %v1352 = vand.u32 %v924, 4294901760
  %v1353 = vsub.f32 %v924, %v1352
  %1354 = vmatpush1.msra.mxu0 %v1353
  %1355 = vmatprep.subr.mxu0 0.0
  %v1356 = vand.u32 %v923, 4294901760
  %v1357 = vsub.f32 %v923, %v1356
  %1358 = vmatpush1.msra.mxu0 %v1357
  %1359 = vmatprep.subr.mxu0 0.0
  %v1360 = vand.u32 %v922, 4294901760
  %v1361 = vsub.f32 %v922, %v1360
  %1362 = vmatpush1.msra.mxu0 %v1361
  %1363 = vmatprep.subr.mxu0 0.0
  %v1364 = vand.u32 %v953, 4294901760
  %v1365 = vsub.f32 %v953, %v1364
  %1366 = vmatpush2.msra.mxu0 %v1365
  %1367 = vmatprep.subr.mxu0 0.0
  %v1368 = vand.u32 %v952, 4294901760
  %v1369 = vsub.f32 %v952, %v1368
  %1370 = vmatpush2.msra.mxu0 %v1369
  %1371 = vmatprep.subr.mxu0 0.0
  %v1372 = vand.u32 %v951, 4294901760
  %v1373 = vsub.f32 %v951, %v1372
  %1374 = vmatpush2.msra.mxu0 %v1373
  %1375 = vmatprep.subr.mxu0 0.0
  %v1376 = vand.u32 %v950, 4294901760
  %v1377 = vsub.f32 %v950, %v1376
  %1378 = vmatpush2.msra.mxu0 %v1377
  %1379 = vmatprep.subr.mxu0 0.0
  %v1380 = vand.u32 %v949, 4294901760
  %v1381 = vsub.f32 %v949, %v1380
  %1382 = vmatpush2.msra.mxu0 %v1381
  %1383 = vmatprep.subr.mxu0 0.0
  %v1384 = vand.u32 %v948, 4294901760
  %v1385 = vsub.f32 %v948, %v1384
  %1386 = vmatpush2.msra.mxu0 %v1385
  %1387 = vmatprep.subr.mxu0 0.0
  %v1388 = vand.u32 %v947, 4294901760
  %v1389 = vsub.f32 %v947, %v1388
  %1390 = vmatpush2.msra.mxu0 %v1389
  %1391 = vmatprep.subr.mxu0 0.0
  %v1392 = vand.u32 %v946, 4294901760
  %v1393 = vsub.f32 %v946, %v1392
  %1394 = vmatpush2.msra.mxu0 %v1393
  %1395 = vmatprep.subr.mxu0 0.0
  %v1396 = vand.u32 %v945, 4294901760
  %v1397 = vsub.f32 %v945, %v1396
  %1398 = vmatpush2.msra.mxu0 %v1397
  %1399 = vmatprep.subr.mxu0 0.0
  %v1400 = vand.u32 %v944, 4294901760
  %v1401 = vsub.f32 %v944, %v1400
  %1402 = vmatpush2.msra.mxu0 %v1401
  %1403 = vmatprep.subr.mxu0 0.0
  %v1404 = vand.u32 %v943, 4294901760
  %v1405 = vsub.f32 %v943, %v1404
  %1406 = vmatpush2.msra.mxu0 %v1405
  %1407 = vmatprep.subr.mxu0 0.0
  %v1408 = vand.u32 %v942, 4294901760
  %v1409 = vsub.f32 %v942, %v1408
  %1410 = vmatpush2.msra.mxu0 %v1409
  %1411 = vmatprep.subr.mxu0 0.0
  %v1412 = vand.u32 %v941, 4294901760
  %v1413 = vsub.f32 %v941, %v1412
  %1414 = vmatpush2.msra.mxu0 %v1413
  %1415 = vmatprep.subr.mxu0 0.0
  %v1416 = vand.u32 %v940, 4294901760
  %v1417 = vsub.f32 %v940, %v1416
  %1418 = vmatpush2.msra.mxu0 %v1417
  %1419 = vmatprep.subr.mxu0 0.0
  %v1420 = vand.u32 %v939, 4294901760
  %v1421 = vsub.f32 %v939, %v1420
  %1422 = vmatpush2.msra.mxu0 %v1421
  %1423 = vmatprep.subr.mxu0 0.0
  %v1424 = vand.u32 %v938, 4294901760
  %v1425 = vsub.f32 %v938, %v1424
  %1426 = vmatpush2.msra.mxu0 %v1425
  %v1427 = vand.u32 %v921, 4294901760
  %v1428 = vsub.f32 %v921, %v1427
  %1429 = vmatprep.mubr.f32.mxu0 %v1428
  %v1430 = vand.u32 %v920, 4294901760
  %v1431 = vsub.f32 %v920, %v1430
  %1432 = vmatmul.mubr.f32.gmra.mxu0 %v1431
  %v1433 = vpop.f32.mrf.mxu0
  %v1434 = vadd.f32 %v1296, %v1433
  %v1435 = vpop.f32.mrf.mxu0
  %1436 = vdwg.mxu0
  %1437 = vmatprep.subr.mxu0 0.0
  %v1438 = vand.u32 %v937, 4294901760
  %1439 = vmatpush1.msra.mxu0 %v1438
  %1440 = vmatprep.subr.mxu0 0.0
  %v1441 = vand.u32 %v936, 4294901760
  %1442 = vmatpush1.msra.mxu0 %v1441
  %1443 = vmatprep.subr.mxu0 0.0
  %v1444 = vand.u32 %v935, 4294901760
  %1445 = vmatpush1.msra.mxu0 %v1444
  %1446 = vmatprep.subr.mxu0 0.0
  %v1447 = vand.u32 %v934, 4294901760
  %1448 = vmatpush1.msra.mxu0 %v1447
  %1449 = vmatprep.subr.mxu0 0.0
  %v1450 = vand.u32 %v933, 4294901760
  %1451 = vmatpush1.msra.mxu0 %v1450
  %1452 = vmatprep.subr.mxu0 0.0
  %v1453 = vand.u32 %v932, 4294901760
  %1454 = vmatpush1.msra.mxu0 %v1453
  %1455 = vmatprep.subr.mxu0 0.0
  %v1456 = vand.u32 %v931, 4294901760
  %1457 = vmatpush1.msra.mxu0 %v1456
  %1458 = vmatprep.subr.mxu0 0.0
  %v1459 = vand.u32 %v930, 4294901760
  %1460 = vmatpush1.msra.mxu0 %v1459
  %1461 = vmatprep.subr.mxu0 0.0
  %v1462 = vand.u32 %v929, 4294901760
  %1463 = vmatpush1.msra.mxu0 %v1462
  %1464 = vmatprep.subr.mxu0 0.0
  %v1465 = vand.u32 %v928, 4294901760
  %1466 = vmatpush1.msra.mxu0 %v1465
  %1467 = vmatprep.subr.mxu0 0.0
  %v1468 = vand.u32 %v927, 4294901760
  %1469 = vmatpush1.msra.mxu0 %v1468
  %1470 = vmatprep.subr.mxu0 0.0
  %v1471 = vand.u32 %v926, 4294901760
  %1472 = vmatpush1.msra.mxu0 %v1471
  %1473 = vmatprep.subr.mxu0 0.0
  %v1474 = vand.u32 %v925, 4294901760
  %1475 = vmatpush1.msra.mxu0 %v1474
  %1476 = vmatprep.subr.mxu0 0.0
  %v1477 = vand.u32 %v924, 4294901760
  %1478 = vmatpush1.msra.mxu0 %v1477
  %1479 = vmatprep.subr.mxu0 0.0
  %v1480 = vand.u32 %v923, 4294901760
  %1481 = vmatpush1.msra.mxu0 %v1480
  %1482 = vmatprep.subr.mxu0 0.0
  %v1483 = vand.u32 %v922, 4294901760
  %1484 = vmatpush1.msra.mxu0 %v1483
  %1485 = vmatprep.subr.mxu0 0.0
  %v1486 = vand.u32 %v953, 4294901760
  %1487 = vmatpush2.msra.mxu0 %v1486
  %1488 = vmatprep.subr.mxu0 0.0
  %v1489 = vand.u32 %v952, 4294901760
  %1490 = vmatpush2.msra.mxu0 %v1489
  %1491 = vmatprep.subr.mxu0 0.0
  %v1492 = vand.u32 %v951, 4294901760
  %1493 = vmatpush2.msra.mxu0 %v1492
  %1494 = vmatprep.subr.mxu0 0.0
  %v1495 = vand.u32 %v950, 4294901760
  %1496 = vmatpush2.msra.mxu0 %v1495
  %1497 = vmatprep.subr.mxu0 0.0
  %v1498 = vand.u32 %v949, 4294901760
  %1499 = vmatpush2.msra.mxu0 %v1498
  %1500 = vmatprep.subr.mxu0 0.0
  %v1501 = vand.u32 %v948, 4294901760
  %1502 = vmatpush2.msra.mxu0 %v1501
  %1503 = vmatprep.subr.mxu0 0.0
  %v1504 = vand.u32 %v947, 4294901760
  %1505 = vmatpush2.msra.mxu0 %v1504
  %1506 = vmatprep.subr.mxu0 0.0
  %v1507 = vand.u32 %v946, 4294901760
  %1508 = vmatpush2.msra.mxu0 %v1507
  %1509 = vmatprep.subr.mxu0 0.0
  %v1510 = vand.u32 %v945, 4294901760
  %1511 = vmatpush2.msra.mxu0 %v1510
  %1512 = vmatprep.subr.mxu0 0.0
  %v1513 = vand.u32 %v944, 4294901760
  %1514 = vmatpush2.msra.mxu0 %v1513
  %1515 = vmatprep.subr.mxu0 0.0
  %v1516 = vand.u32 %v943, 4294901760
  %1517 = vmatpush2.msra.mxu0 %v1516
  %1518 = vmatprep.subr.mxu0 0.0
  %v1519 = vand.u32 %v942, 4294901760
  %1520 = vmatpush2.msra.mxu0 %v1519
  %1521 = vmatprep.subr.mxu0 0.0
  %v1522 = vand.u32 %v941, 4294901760
  %1523 = vmatpush2.msra.mxu0 %v1522
  %1524 = vmatprep.subr.mxu0 0.0
  %v1525 = vand.u32 %v940, 4294901760
  %1526 = vmatpush2.msra.mxu0 %v1525
  %1527 = vmatprep.subr.mxu0 0.0
  %v1528 = vand.u32 %v939, 4294901760
  %1529 = vmatpush2.msra.mxu0 %v1528
  %1530 = vmatprep.subr.mxu0 0.0
  %v1531 = vand.u32 %v938, 4294901760
  %1532 = vmatpush2.msra.mxu0 %v1531
  %v1533 = vand.u32 %v921, 4294901760
  %v1534 = vsub.f32 %v921, %v1533
  %v1535 = vand.u32 %v1534, 4294901760
  %1536 = vmatprep.mubr.f32.mxu0 %v1535
  %v1537 = vand.u32 %v920, 4294901760
  %v1538 = vsub.f32 %v920, %v1537
  %v1539 = vand.u32 %v1538, 4294901760
  %1540 = vmatmul.mubr.f32.gmra.mxu0 %v1539
  %v1541 = vpop.f32.mrf.mxu0
  %v1542 = vadd.f32 %v1434, %v1541
  %v1543 = vpop.f32.mrf.mxu0
  %1544 = vdwg.mxu0
  %1545 = vmatprep.subr.mxu0 0.0
  %v1546 = vand.u32 %v937, 4294901760
  %v1547 = vsub.f32 %v937, %v1546
  %v1548 = vand.u32 %v1547, 4294901760
  %1549 = vmatpush1.msra.mxu0 %v1548
  %1550 = vmatprep.subr.mxu0 0.0
  %v1551 = vand.u32 %v936, 4294901760
  %v1552 = vsub.f32 %v936, %v1551
  %v1553 = vand.u32 %v1552, 4294901760
  %1554 = vmatpush1.msra.mxu0 %v1553
  %1555 = vmatprep.subr.mxu0 0.0
  %v1556 = vand.u32 %v935, 4294901760
  %v1557 = vsub.f32 %v935, %v1556
  %v1558 = vand.u32 %v1557, 4294901760
  %1559 = vmatpush1.msra.mxu0 %v1558
  %1560 = vmatprep.subr.mxu0 0.0
  %v1561 = vand.u32 %v934, 4294901760
  %v1562 = vsub.f32 %v934, %v1561
  %v1563 = vand.u32 %v1562, 4294901760
  %1564 = vmatpush1.msra.mxu0 %v1563
  %1565 = vmatprep.subr.mxu0 0.0
  %v1566 = vand.u32 %v933, 4294901760
  %v1567 = vsub.f32 %v933, %v1566
  %v1568 = vand.u32 %v1567, 4294901760
  %1569 = vmatpush1.msra.mxu0 %v1568
  %1570 = vmatprep.subr.mxu0 0.0
  %v1571 = vand.u32 %v932, 4294901760
  %v1572 = vsub.f32 %v932, %v1571
  %v1573 = vand.u32 %v1572, 4294901760
  %1574 = vmatpush1.msra.mxu0 %v1573
  %1575 = vmatprep.subr.mxu0 0.0
  %v1576 = vand.u32 %v931, 4294901760
  %v1577 = vsub.f32 %v931, %v1576
  %v1578 = vand.u32 %v1577, 4294901760
  %1579 = vmatpush1.msra.mxu0 %v1578
  %1580 = vmatprep.subr.mxu0 0.0
  %v1581 = vand.u32 %v930, 4294901760
  %v1582 = vsub.f32 %v930, %v1581
  %v1583 = vand.u32 %v1582, 4294901760
  %1584 = vmatpush1.msra.mxu0 %v1583
  %1585 = vmatprep.subr.mxu0 0.0
  %v1586 = vand.u32 %v929, 4294901760
  %v1587 = vsub.f32 %v929, %v1586
  %v1588 = vand.u32 %v1587, 4294901760
  %1589 = vmatpush1.msra.mxu0 %v1588
  %1590 = vmatprep.subr.mxu0 0.0
  %v1591 = vand.u32 %v928, 4294901760
  %v1592 = vsub.f32 %v928, %v1591
  %v1593 = vand.u32 %v1592, 4294901760
  %1594 = vmatpush1.msra.mxu0 %v1593
  %1595 = vmatprep.subr.mxu0 0.0
  %v1596 = vand.u32 %v927, 4294901760
  %v1597 = vsub.f32 %v927, %v1596
  %v1598 = vand.u32 %v1597, 4294901760
  %1599 = vmatpush1.msra.mxu0 %v1598
  %1600 = vmatprep.subr.mxu0 0.0
  %v1601 = vand.u32 %v926, 4294901760
  %v1602 = vsub.f32 %v926, %v1601
  %v1603 = vand.u32 %v1602, 4294901760
  %1604 = vmatpush1.msra.mxu0 %v1603
  %1605 = vmatprep.subr.mxu0 0.0
  %v1606 = vand.u32 %v925, 4294901760
  %v1607 = vsub.f32 %v925, %v1606
  %v1608 = vand.u32 %v1607, 4294901760
  %1609 = vmatpush1.msra.mxu0 %v1608
  %1610 = vmatprep.subr.mxu0 0.0
  %v1611 = vand.u32 %v924, 4294901760
  %v1612 = vsub.f32 %v924, %v1611
  %v1613 = vand.u32 %v1612, 4294901760
  %1614 = vmatpush1.msra.mxu0 %v1613
  %1615 = vmatprep.subr.mxu0 0.0
  %v1616 = vand.u32 %v923, 4294901760
  %v1617 = vsub.f32 %v923, %v1616
  %v1618 = vand.u32 %v1617, 4294901760
  %1619 = vmatpush1.msra.mxu0 %v1618
  %1620 = vmatprep.subr.mxu0 0.0
  %v1621 = vand.u32 %v922, 4294901760
  %v1622 = vsub.f32 %v922, %v1621
  %v1623 = vand.u32 %v1622, 4294901760
  %1624 = vmatpush1.msra.mxu0 %v1623
  %1625 = vmatprep.subr.mxu0 0.0
  %v1626 = vand.u32 %v953, 4294901760
  %v1627 = vsub.f32 %v953, %v1626
  %v1628 = vand.u32 %v1627, 4294901760
  %1629 = vmatpush2.msra.mxu0 %v1628
  %1630 = vmatprep.subr.mxu0 0.0
  %v1631 = vand.u32 %v952, 4294901760
  %v1632 = vsub.f32 %v952, %v1631
  %v1633 = vand.u32 %v1632, 4294901760
  %1634 = vmatpush2.msra.mxu0 %v1633
  %1635 = vmatprep.subr.mxu0 0.0
  %v1636 = vand.u32 %v951, 4294901760
  %v1637 = vsub.f32 %v951, %v1636
  %v1638 = vand.u32 %v1637, 4294901760
  %1639 = vmatpush2.msra.mxu0 %v1638
  %1640 = vmatprep.subr.mxu0 0.0
  %v1641 = vand.u32 %v950, 4294901760
  %v1642 = vsub.f32 %v950, %v1641
  %v1643 = vand.u32 %v1642, 4294901760
  %1644 = vmatpush2.msra.mxu0 %v1643
  %1645 = vmatprep.subr.mxu0 0.0
  %v1646 = vand.u32 %v949, 4294901760
  %v1647 = vsub.f32 %v949, %v1646
  %v1648 = vand.u32 %v1647, 4294901760
  %1649 = vmatpush2.msra.mxu0 %v1648
  %1650 = vmatprep.subr.mxu0 0.0
  %v1651 = vand.u32 %v948, 4294901760
  %v1652 = vsub.f32 %v948, %v1651
  %v1653 = vand.u32 %v1652, 4294901760
  %1654 = vmatpush2.msra.mxu0 %v1653
  %1655 = vmatprep.subr.mxu0 0.0
  %v1656 = vand.u32 %v947, 4294901760
  %v1657 = vsub.f32 %v947, %v1656
  %v1658 = vand.u32 %v1657, 4294901760
  %1659 = vmatpush2.msra.mxu0 %v1658
  %1660 = vmatprep.subr.mxu0 0.0
  %v1661 = vand.u32 %v946, 4294901760
  %v1662 = vsub.f32 %v946, %v1661
  %v1663 = vand.u32 %v1662, 4294901760
  %1664 = vmatpush2.msra.mxu0 %v1663
  %1665 = vmatprep.subr.mxu0 0.0
  %v1666 = vand.u32 %v945, 4294901760
  %v1667 = vsub.f32 %v945, %v1666
  %v1668 = vand.u32 %v1667, 4294901760
  %1669 = vmatpush2.msra.mxu0 %v1668
  %1670 = vmatprep.subr.mxu0 0.0
  %v1671 = vand.u32 %v944, 4294901760
  %v1672 = vsub.f32 %v944, %v1671
  %v1673 = vand.u32 %v1672, 4294901760
  %1674 = vmatpush2.msra.mxu0 %v1673
  %1675 = vmatprep.subr.mxu0 0.0
  %v1676 = vand.u32 %v943, 4294901760
  %v1677 = vsub.f32 %v943, %v1676
  %v1678 = vand.u32 %v1677, 4294901760
  %1679 = vmatpush2.msra.mxu0 %v1678
  %1680 = vmatprep.subr.mxu0 0.0
  %v1681 = vand.u32 %v942, 4294901760
  %v1682 = vsub.f32 %v942, %v1681
  %v1683 = vand.u32 %v1682, 4294901760
  %1684 = vmatpush2.msra.mxu0 %v1683
  %1685 = vmatprep.subr.mxu0 0.0
  %v1686 = vand.u32 %v941, 4294901760
  %v1687 = vsub.f32 %v941, %v1686
  %v1688 = vand.u32 %v1687, 4294901760
  %1689 = vmatpush2.msra.mxu0 %v1688
  %1690 = vmatprep.subr.mxu0 0.0
  %v1691 = vand.u32 %v940, 4294901760
  %v1692 = vsub.f32 %v940, %v1691
  %v1693 = vand.u32 %v1692, 4294901760
  %1694 = vmatpush2.msra.mxu0 %v1693
  %1695 = vmatprep.subr.mxu0 0.0
  %v1696 = vand.u32 %v939, 4294901760
  %v1697 = vsub.f32 %v939, %v1696
  %v1698 = vand.u32 %v1697, 4294901760
  %1699 = vmatpush2.msra.mxu0 %v1698
  %1700 = vmatprep.subr.mxu0 0.0
  %v1701 = vand.u32 %v938, 4294901760
  %v1702 = vsub.f32 %v938, %v1701
  %v1703 = vand.u32 %v1702, 4294901760
  %1704 = vmatpush2.msra.mxu0 %v1703
  %v1705 = vand.u32 %v921, 4294901760
  %1706 = vmatprep.mubr.f32.mxu0 %v1705
  %v1707 = vand.u32 %v920, 4294901760
  %1708 = vmatmul.mubr.f32.gmra.mxu0 %v1707
  %v1709 = vpop.f32.mrf.mxu0
  %v1710 = vadd.f32 %v1542, %v1709
  %v1711 = vpop.f32.mrf.mxu0
  %1712 = vdwg.mxu0
  %1713 = vmatprep.subr.mxu0 0.0
  %v1714 = vand.u32 %v937, 4294901760
  %1715 = vmatpush1.msra.mxu0 %v1714
  %1716 = vmatprep.subr.mxu0 0.0
  %v1717 = vand.u32 %v936, 4294901760
  %1718 = vmatpush1.msra.mxu0 %v1717
  %1719 = vmatprep.subr.mxu0 0.0
  %v1720 = vand.u32 %v935, 4294901760
  %1721 = vmatpush1.msra.mxu0 %v1720
  %1722 = vmatprep.subr.mxu0 0.0
  %v1723 = vand.u32 %v934, 4294901760
  %1724 = vmatpush1.msra.mxu0 %v1723
  %1725 = vmatprep.subr.mxu0 0.0
  %v1726 = vand.u32 %v933, 4294901760
  %1727 = vmatpush1.msra.mxu0 %v1726
  %1728 = vmatprep.subr.mxu0 0.0
  %v1729 = vand.u32 %v932, 4294901760
  %1730 = vmatpush1.msra.mxu0 %v1729
  %1731 = vmatprep.subr.mxu0 0.0
  %v1732 = vand.u32 %v931, 4294901760
  %1733 = vmatpush1.msra.mxu0 %v1732
  %1734 = vmatprep.subr.mxu0 0.0
  %v1735 = vand.u32 %v930, 4294901760
  %1736 = vmatpush1.msra.mxu0 %v1735
  %1737 = vmatprep.subr.mxu0 0.0
  %v1738 = vand.u32 %v929, 4294901760
  %1739 = vmatpush1.msra.mxu0 %v1738
  %1740 = vmatprep.subr.mxu0 0.0
  %v1741 = vand.u32 %v928, 4294901760
  %1742 = vmatpush1.msra.mxu0 %v1741
  %1743 = vmatprep.subr.mxu0 0.0
  %v1744 = vand.u32 %v927, 4294901760
  %1745 = vmatpush1.msra.mxu0 %v1744
  %1746 = vmatprep.subr.mxu0 0.0
  %v1747 = vand.u32 %v926, 4294901760
  %1748 = vmatpush1.msra.mxu0 %v1747
  %1749 = vmatprep.subr.mxu0 0.0
  %v1750 = vand.u32 %v925, 4294901760
  %1751 = vmatpush1.msra.mxu0 %v1750
  %1752 = vmatprep.subr.mxu0 0.0
  %v1753 = vand.u32 %v924, 4294901760
  %1754 = vmatpush1.msra.mxu0 %v1753
  %1755 = vmatprep.subr.mxu0 0.0
  %v1756 = vand.u32 %v923, 4294901760
  %1757 = vmatpush1.msra.mxu0 %v1756
  %1758 = vmatprep.subr.mxu0 0.0
  %v1759 = vand.u32 %v922, 4294901760
  %1760 = vmatpush1.msra.mxu0 %v1759
  %1761 = vmatprep.subr.mxu0 0.0
  %v1762 = vand.u32 %v953, 4294901760
  %1763 = vmatpush2.msra.mxu0 %v1762
  %1764 = vmatprep.subr.mxu0 0.0
  %v1765 = vand.u32 %v952, 4294901760
  %1766 = vmatpush2.msra.mxu0 %v1765
  %1767 = vmatprep.subr.mxu0 0.0
  %v1768 = vand.u32 %v951, 4294901760
  %1769 = vmatpush2.msra.mxu0 %v1768
  %1770 = vmatprep.subr.mxu0 0.0
  %v1771 = vand.u32 %v950, 4294901760
  %1772 = vmatpush2.msra.mxu0 %v1771
  %1773 = vmatprep.subr.mxu0 0.0
  %v1774 = vand.u32 %v949, 4294901760
  %1775 = vmatpush2.msra.mxu0 %v1774
  %1776 = vmatprep.subr.mxu0 0.0
  %v1777 = vand.u32 %v948, 4294901760
  %1778 = vmatpush2.msra.mxu0 %v1777
  %1779 = vmatprep.subr.mxu0 0.0
  %v1780 = vand.u32 %v947, 4294901760
  %1781 = vmatpush2.msra.mxu0 %v1780
  %1782 = vmatprep.subr.mxu0 0.0
  %v1783 = vand.u32 %v946, 4294901760
  %1784 = vmatpush2.msra.mxu0 %v1783
  %1785 = vmatprep.subr.mxu0 0.0
  %v1786 = vand.u32 %v945, 4294901760
  %1787 = vmatpush2.msra.mxu0 %v1786
  %1788 = vmatprep.subr.mxu0 0.0
  %v1789 = vand.u32 %v944, 4294901760
  %1790 = vmatpush2.msra.mxu0 %v1789
  %1791 = vmatprep.subr.mxu0 0.0
  %v1792 = vand.u32 %v943, 4294901760
  %1793 = vmatpush2.msra.mxu0 %v1792
  %1794 = vmatprep.subr.mxu0 0.0
  %v1795 = vand.u32 %v942, 4294901760
  %1796 = vmatpush2.msra.mxu0 %v1795
  %1797 = vmatprep.subr.mxu0 0.0
  %v1798 = vand.u32 %v941, 4294901760
  %1799 = vmatpush2.msra.mxu0 %v1798
  %1800 = vmatprep.subr.mxu0 0.0
  %v1801 = vand.u32 %v940, 4294901760
  %1802 = vmatpush2.msra.mxu0 %v1801
  %1803 = vmatprep.subr.mxu0 0.0
  %v1804 = vand.u32 %v939, 4294901760
  %1805 = vmatpush2.msra.mxu0 %v1804
  %1806 = vmatprep.subr.mxu0 0.0
  %v1807 = vand.u32 %v938, 4294901760
  %1808 = vmatpush2.msra.mxu0 %v1807
  %v1809 = vand.u32 %v921, 4294901760
  %1810 = vmatprep.mubr.f32.mxu0 %v1809
  %v1811 = vand.u32 %v920, 4294901760
  %1812 = vmatmul.mubr.f32.gmra.mxu0 %v1811
  %v1813 = vpop.f32.mrf.mxu0
  %v1814 = vadd.f32 %v1710, %v1813
  %v1815 = vpop.f32.mrf.mxu0
  %1816 = vdwg.mxu0
  %vm1817 = vcmask 516096
  %1818 = vst.msk [vmem:[%s5] sm:$0x1] %vm1817, %v1814
  // Predicated region
  $region22: #{metalearner_forward.3} parent=0 // pred_check
    _
  $region23: #{metalearner_forward.3} parent=0 // pred_check_branch
    %1820 = sbr.rel (0) target = $region25
  $region24: #{metalearner_forward.3} parent=0 // pred_region
    _
  $region25: #{metalearner_forward.3} parent=0 // pred_fallthru
    _
  // Predicated region
  $region26: #{metalearner_forward.3} parent=0 // pred_check
    _
  $region27: #{metalearner_forward.3} parent=0 // pred_check_branch
    %1822 = sbr.rel (0) target = $region29
  $region28: #{metalearner_forward.3} parent=0 // pred_region
    _
  $region29: #{metalearner_forward.3} parent=0 // pred_fallthru
    _

</llo_original>
